<compile_context>
chip_gen: v5e
topology: v5e:2x2
jax: 0.10.0
libtpu: 0.0.40
codegen_flags: <defaults>
</compile_context>

<pallas_src>
import jax
import jax.numpy as jnp
from jax import lax
from jax.experimental import pallas as pl
from jax.experimental.pallas import tpu as pltpu

# ---- module hyper-parameters (from the PyTorch file) ----
N_EMBED = 32
CONTEXT = 8
NUM_HEADS = 4
HEAD_SIZE = N_EMBED // NUM_HEADS
N_LAYER = 3
CHARSIZE = 65               # small fixed char vocab
VOCAB_PAD = 128             # vocab axis padded to 128 -> lane-dense output store
LN_EPS = 1e-5
ATT_SCALE = float(N_EMBED) ** -0.5   # module scales by n_embed**-0.5 (not head_size**-0.5)
NEG_BIG = -1e30


def _ln_hat(z):
    """LayerNorm without affine (gamma/beta folded into the next matmul)."""
    mu = jnp.mean(z, axis=-1, keepdims=True)
    var = jnp.mean((z - mu) ** 2, axis=-1, keepdims=True)
    return (z - mu) * lax.rsqrt(var + LN_EPS)


# ---------------------------------------------------------------------------
# Pallas kernel: whole NgramLanguageModel forward on one (B*T, *) VMEM slab
# ---------------------------------------------------------------------------
def ngram_kernel(
    tok_ref, emb_ref, pos_ref,
    wqkv_ref, bqkv_ref, wproj_ref, bproj_ref,
    w1_ref, b1_ref, w2_ref, b2_ref,
    wlm_ref, blm_ref,
    out_ref,
):
    BT = tok_ref.shape[0]
    T = CONTEXT
    B = BT // T
    C = N_EMBED
    D = HEAD_SIZE

    # ---- embeddings: one-hot(tokens) @ table (gather expressed as an MXU matmul) ----
    vocab_ids = lax.broadcasted_iota(jnp.int32, (BT, VOCAB_PAD), 1)
    onehot = (vocab_ids == tok_ref[...]).astype(jnp.float32)            # (BT, 128)
    x = jnp.dot(onehot, emb_ref[...], preferred_element_type=jnp.float32)  # (BT, C)
    x = x + pos_ref[...]                                                # pos pre-tiled to (BT, C)

    # ---- additive causal mask, built once (finite: no inf - inf NaNs) ----
    row = lax.broadcasted_iota(jnp.int32, (1, T, T), 1)
    col = lax.broadcasted_iota(jnp.int32, (1, T, T), 2)
    mask_bias = jnp.where(col <= row, 0.0, NEG_BIG).astype(jnp.float32)

    for l in range(N_LAYER):
        # ============ multi-head self-attention on ln1(x) (affine folded) ============
        xhat = _ln_hat(x)                                               # (BT, C)
        # fused QKV: one (BT, C) x (C, 3C) matmul; ln1 affine + attn scale pre-folded
        qkv = (jnp.dot(xhat, wqkv_ref[l], preferred_element_type=jnp.float32)
               + bqkv_ref[l])                                           # (BT, 3C)
        qkv3 = qkv.reshape(B, T, 3 * C)
        wproj_l = wproj_ref[l]                                          # (C, C)

        attn = None
        for hh in range(NUM_HEADS):
            q = qkv3[:, :, hh * D:(hh + 1) * D]                         # (B, T, D)
            k = qkv3[:, :, C + hh * D:C + (hh + 1) * D]
            v = qkv3[:, :, 2 * C + hh * D:2 * C + (hh + 1) * D]

            s = jnp.einsum('btd,bsd->bts', q, k,
                           preferred_element_type=jnp.float32)          # (B, T, T)
            s = s + mask_bias
            m = jnp.max(s, axis=-1, keepdims=True)
            p = jnp.exp(s - m)
            p = p * pl.reciprocal(jnp.sum(p, axis=-1, keepdims=True), approx=True)

            ctx = jnp.einsum('bts,bsd->btd', p, v,
                             preferred_element_type=jnp.float32)        # (B, T, D)
            # distribute the output projection over heads -> no concat needed
            contrib = jnp.einsum('btd,dc->btc', ctx,
                                 wproj_l[hh * D:(hh + 1) * D, :],
                                 preferred_element_type=jnp.float32)    # (B, T, C)
            attn = contrib if attn is None else attn + contrib

        x = x + attn.reshape(BT, C) + bproj_ref[l]                      # residual 1

        # ============ feed-forward on ln2(x) (affine folded into W1/b1) ============
        xhat2 = _ln_hat(x)
        hid = jnp.dot(xhat2, w1_ref[l], preferred_element_type=jnp.float32) + b1_ref[l]
        hid = jnp.maximum(hid, 0.0)
        x = x + jnp.dot(hid, w2_ref[l], preferred_element_type=jnp.float32) + b2_ref[l]

    # ---- final LN (affine folded into lm_head); vocab padded to 128 lanes ----
    out_ref[...] = (jnp.dot(_ln_hat(x), wlm_ref[...], preferred_element_type=jnp.float32)
                    + blm_ref[...])


# ---------------------------------------------------------------------------
# Parameter init (JAX-side stand-in for the PyTorch module's parameters)
# ---------------------------------------------------------------------------
def init_params(key):
    keys = jax.random.split(key, 6 + N_LAYER)
    w = lambda k, shape, scale=0.02: jax.random.normal(k, shape, jnp.float32) * scale
    blocks = []
    for l in range(N_LAYER):
        ks = jax.random.split(keys[6 + l], 12)
        blocks.append({
            "ln1_g": 1.0 + w(ks[8], (N_EMBED,), 0.1),   # non-trivial affine to exercise the fold
            "ln1_b": w(ks[9], (N_EMBED,), 0.1),
            "wq": w(ks[0], (N_EMBED, N_EMBED)),          # (in, out); heads packed along out axis
            "wk": w(ks[1], (N_EMBED, N_EMBED)),
            "wv": w(ks[2], (N_EMBED, N_EMBED)),
            "wproj": w(ks[3], (N_EMBED, N_EMBED)),
            "bproj": w(ks[4], (N_EMBED,)),
            "ln2_g": 1.0 + w(ks[10], (N_EMBED,), 0.1),
            "ln2_b": w(ks[11], (N_EMBED,), 0.1),
            "w1": w(ks[5], (N_EMBED, 4 * N_EMBED)),
            "b1": w(ks[6], (4 * N_EMBED,)),
            "w2": w(ks[7], (4 * N_EMBED, N_EMBED)),
            "b2": jnp.zeros((N_EMBED,), jnp.float32),
        })
    return {
        "emb": w(keys[0], (CHARSIZE, N_EMBED), 1.0),
        "pos": w(keys[1], (CONTEXT, N_EMBED), 1.0),
        "blocks": blocks,
        "lnf_g": 1.0 + w(keys[4], (N_EMBED,), 0.1),
        "lnf_b": w(keys[5], (N_EMBED,), 0.1),
        "wlm": w(keys[2], (N_EMBED, CHARSIZE)),
        "blm": w(keys[3], (CHARSIZE,)),
    }


# ---------------------------------------------------------------------------
# Wrapper: fold LN affines + attn scale into the consuming matmuls, pad vocab,
# pack per-layer tensors, then launch one pallas_call.
# ---------------------------------------------------------------------------
def _pack_params(p, batch):
    def fold_block(blk):
        # attn scale folded into Wq, then ln1 affine folded into the fused QKV matmul:
        #   (LNhat(x)*g + b) @ W  ==  LNhat(x) @ (g[:,None]*W)  +  b @ W
        wqkv_s = jnp.concatenate([blk["wq"] * ATT_SCALE, blk["wk"], blk["wv"]], axis=1)  # (C, 3C)
        wqkv = blk["ln1_g"][:, None] * wqkv_s
        bqkv = blk["ln1_b"] @ wqkv_s                                    # (3C,)
        # ln2 affine folded into the first FFN matmul
        w1 = blk["ln2_g"][:, None] * blk["w1"]
        b1 = blk["ln2_b"] @ blk["w1"] + blk["b1"]
        return (wqkv, bqkv, blk["wproj"], blk["bproj"], w1, b1, blk["w2"], blk["b2"])

    folded = [fold_block(blk) for blk in p["blocks"]]
    stack = lambda i: jnp.stack([f[i] for f in folded])                 # (L, ...)
    row = lambda a: a[:, None, :]                                       # (L, d) -> (L, 1, d)

    emb_pad = jnp.zeros((VOCAB_PAD, N_EMBED), jnp.float32).at[:CHARSIZE].set(p["emb"])
    wlm_pad = jnp.zeros((N_EMBED, VOCAB_PAD), jnp.float32).at[:, :CHARSIZE].set(p["wlm"])
    blm_pad = jnp.zeros((VOCAB_PAD,), jnp.float32).at[:CHARSIZE].set(p["blm"])
    # final LN affine folded into the lm_head (pad columns stay exactly zero)
    wlm_f = p["lnf_g"][:, None] * wlm_pad
    blm_f = (p["lnf_b"] @ wlm_pad + blm_pad)[None, :]                   # (1, 128)

    pos_tiled = jnp.tile(p["pos"], (batch, 1))                          # (B*T, C)
    return (
        emb_pad, pos_tiled,
        stack(0), row(stack(1)),        # wqkv (L,C,3C), bqkv (L,1,3C)
        stack(2), row(stack(3)),        # wproj (L,C,C), bproj (L,1,C)
        stack(4), row(stack(5)),        # w1 (L,C,4C),  b1 (L,1,4C)
        stack(6), row(stack(7)),        # w2 (L,4C,C),  b2 (L,1,C)
        wlm_f, blm_f,
    )


def _ngram_forward(tokens, params):
    B, T = tokens.shape
    assert T == CONTEXT, "kernel assumes T == context"
    packed = _pack_params(params, B)
    tok_flat = tokens.reshape(B * T, 1).astype(jnp.int32)
    args = (tok_flat,) + packed

    vmem = pl.BlockSpec(memory_space=pltpu.MemorySpace.VMEM)
    logits_pad = pl.pallas_call(
        ngram_kernel,
        out_shape=jax.ShapeDtypeStruct((B * T, VOCAB_PAD), jnp.float32),
        in_specs=[vmem] * len(args),
        out_specs=vmem,
    )(*args)
    # un-pad the vocab axis and restore (B, T, charsize)
    return logits_pad[:, :CHARSIZE].reshape(B, T, CHARSIZE)


ngram_forward = jax.jit(_ngram_forward)


# ---------------------------------------------------------------------------
# Pure-JAX reference (PyTorch semantics, un-folded params) for correctness
# ---------------------------------------------------------------------------
def _layernorm_affine(z, g, b):
    mu = jnp.mean(z, axis=-1, keepdims=True)
    var = jnp.mean((z - mu) ** 2, axis=-1, keepdims=True)
    return (z - mu) * lax.rsqrt(var + LN_EPS) * g + b


def ngram_reference(tokens, p):
    B, T = tokens.shape
    x = p["emb"][tokens] + p["pos"][None, :T]
    causal = jnp.tril(jnp.ones((T, T), bool))
    for blk in p["blocks"]:
        h = _layernorm_affine(x, blk["ln1_g"], blk["ln1_b"])
        outs = []
        for hh in range(NUM_HEADS):
            sl = slice(hh * HEAD_SIZE, (hh + 1) * HEAD_SIZE)
            q = h @ blk["wq"][:, sl]
            k = h @ blk["wk"][:, sl]
            v = h @ blk["wv"][:, sl]
            s = jnp.einsum('btd,bsd->bts', q, k) * ATT_SCALE
            s = jnp.where(causal[None], s, -jnp.inf)
            outs.append(jnp.einsum('bts,bsd->btd', jax.nn.softmax(s, axis=-1), v))
        x = x + (jnp.concatenate(outs, -1) @ blk["wproj"] + blk["bproj"])
        h2 = _layernorm_affine(x, blk["ln2_g"], blk["ln2_b"])
        x = x + (jnp.maximum(h2 @ blk["w1"] + blk["b1"], 0.0) @ blk["w2"] + blk["b2"])
    x = _layernorm_affine(x, p["lnf_g"], p["lnf_b"])
    return x @ p["wlm"] + p["blm"]


if __name__ == "__main__":
    key = jax.random.PRNGKey(0)
    k_tok, k_par = jax.random.split(key)

    B, T = 2, CONTEXT                       # (2, 8) token ids
    tokens = jax.random.randint(k_tok, (B, T), 0, CHARSIZE, dtype=jnp.int32)
    params = init_params(k_par)

    logits = jax.block_until_ready(ngram_forward(tokens, params))
    ref = jax.block_until_ready(ngram_reference(tokens, params))

    assert logits.shape == (B, T, CHARSIZE)
    max_err = float(jnp.max(jnp.abs(logits - ref)))
    assert jnp.allclose(logits, ref, atol=2e-3, rtol=2e-3), f"max abs err {max_err}"
    print("KERNEL_OK")
</pallas_src>

<mosaic_0001>
module attributes {stable_mosaic.version = 11 : i64} {
  func.func @ngram_kernel(%arg0: memref<16x1xi32, #tpu.memory_space<vmem>>, %arg1: memref<128x32xf32, #tpu.memory_space<vmem>>, %arg2: memref<16x32xf32, #tpu.memory_space<vmem>>, %arg3: memref<3x32x96xf32, #tpu.memory_space<vmem>>, %arg4: memref<3x1x96xf32, #tpu.memory_space<vmem>>, %arg5: memref<3x32x32xf32, #tpu.memory_space<vmem>>, %arg6: memref<3x1x32xf32, #tpu.memory_space<vmem>>, %arg7: memref<3x32x128xf32, #tpu.memory_space<vmem>>, %arg8: memref<3x1x128xf32, #tpu.memory_space<vmem>>, %arg9: memref<3x128x32xf32, #tpu.memory_space<vmem>>, %arg10: memref<3x1x32xf32, #tpu.memory_space<vmem>>, %arg11: memref<32x128xf32, #tpu.memory_space<vmem>>, %arg12: memref<1x128xf32, #tpu.memory_space<vmem>>, %arg13: memref<16x128xf32, #tpu.memory_space<vmem>>) attributes {dimension_semantics = [], scalar_prefetch = 0 : i64, scratch_operands = 0 : i64, tpu.core_type = #tpu.core_type<tc>} {
    %0 = tpu.iota {dimensions = array<i32: 1>} : vector<16x128xi32>
    %c0 = arith.constant 0 : index
    %c0_0 = arith.constant 0 : index
    %1 = vector.load %arg0[%c0, %c0_0] : memref<16x1xi32, #tpu.memory_space<vmem>>, vector<16x1xi32>
    %2 = vector.broadcast %1 : vector<16x1xi32> to vector<16x128xi32>
    %3 = arith.cmpi eq, %0, %2 : vector<16x128xi32>
    %4 = arith.extui %3 : vector<16x128xi1> to vector<16x128xi32>
    %5 = arith.sitofp %4 : vector<16x128xi32> to vector<16x128xf32>
    %c0_1 = arith.constant 0 : index
    %c0_2 = arith.constant 0 : index
    %6 = vector.load %arg1[%c0_1, %c0_2] : memref<128x32xf32, #tpu.memory_space<vmem>>, vector<128x32xf32>
    %cst = arith.constant dense<0.000000e+00> : vector<16x32xf32>
    %7 = tpu.matmul %5, %6, %cst {dimension_numbers = #tpu.dot_dimension_numbers<[1], [0], [0], [1], [0, 0, 1, 1], [], []>} : vector<16x128xf32>, vector<128x32xf32>, vector<16x32xf32> -> vector<16x32xf32>
    %c0_3 = arith.constant 0 : index
    %c0_4 = arith.constant 0 : index
    %8 = vector.load %arg2[%c0_3, %c0_4] : memref<16x32xf32, #tpu.memory_space<vmem>>, vector<16x32xf32>
    %9 = arith.addf %7, %8 : vector<16x32xf32>
    %10 = tpu.iota {dimensions = array<i32: 1>} : vector<1x8x8xi32>
    %11 = tpu.iota {dimensions = array<i32: 2>} : vector<1x8x8xi32>
    %12 = arith.cmpi sle, %11, %10 : vector<1x8x8xi32>
    %cst_5 = arith.constant 0.000000e+00 : f32
    %cst_6 = arith.constant -1.000000e+30 : f32
    %13 = vector.broadcast %cst_5 : f32 to vector<1x8x8xf32>
    %14 = vector.broadcast %cst_6 : f32 to vector<1x8x8xf32>
    %15 = arith.select %12, %13, %14 : vector<1x8x8xi1>, vector<1x8x8xf32>
    %cst_7 = arith.constant dense<0.000000e+00> : vector<16xf32>
    %16 = vector.multi_reduction <add>, %9, %cst_7 [1] : vector<16x32xf32> to vector<16xf32>
    %17 = vector.shape_cast %16 : vector<16xf32> to vector<16x1xf32>
    %cst_8 = arith.constant 3.200000e+01 : f32
    %18 = vector.broadcast %cst_8 : f32 to vector<16x1xf32>
    %19 = arith.divf %17, %18 : vector<16x1xf32>
    %20 = vector.broadcast %19 : vector<16x1xf32> to vector<16x32xf32>
    %21 = arith.subf %9, %20 : vector<16x32xf32>
    %22 = arith.mulf %21, %21 : vector<16x32xf32>
    %cst_9 = arith.constant dense<0.000000e+00> : vector<16xf32>
    %23 = vector.multi_reduction <add>, %22, %cst_9 [1] : vector<16x32xf32> to vector<16xf32>
    %24 = vector.shape_cast %23 : vector<16xf32> to vector<16x1xf32>
    %cst_10 = arith.constant 3.200000e+01 : f32
    %25 = vector.broadcast %cst_10 : f32 to vector<16x1xf32>
    %26 = arith.divf %24, %25 : vector<16x1xf32>
    %27 = vector.broadcast %19 : vector<16x1xf32> to vector<16x32xf32>
    %28 = arith.subf %9, %27 : vector<16x32xf32>
    %cst_11 = arith.constant 9.99999974E-6 : f32
    %29 = vector.broadcast %cst_11 : f32 to vector<16x1xf32>
    %30 = arith.addf %26, %29 : vector<16x1xf32>
    %31 = math.rsqrt %30 : vector<16x1xf32>
    %32 = vector.broadcast %31 : vector<16x1xf32> to vector<16x32xf32>
    %33 = arith.mulf %28, %32 : vector<16x32xf32>
    %c0_12 = arith.constant 0 : index
    %c0_13 = arith.constant 0 : index
    %c0_14 = arith.constant 0 : index
    %34 = vector.load %arg3[%c0_12, %c0_13, %c0_14] : memref<3x32x96xf32, #tpu.memory_space<vmem>>, vector<1x32x96xf32>
    %35 = vector.shape_cast %34 : vector<1x32x96xf32> to vector<32x96xf32>
    %cst_15 = arith.constant dense<0.000000e+00> : vector<16x96xf32>
    %36 = tpu.matmul %33, %35, %cst_15 {dimension_numbers = #tpu.dot_dimension_numbers<[1], [0], [0], [1], [0, 0, 1, 1], [], []>} : vector<16x32xf32>, vector<32x96xf32>, vector<16x96xf32> -> vector<16x96xf32>
    %c0_16 = arith.constant 0 : index
    %c0_17 = arith.constant 0 : index
    %c0_18 = arith.constant 0 : index
    %37 = vector.load %arg4[%c0_16, %c0_17, %c0_18] : memref<3x1x96xf32, #tpu.memory_space<vmem>>, vector<1x1x96xf32>
    %38 = vector.shape_cast %37 : vector<1x1x96xf32> to vector<1x96xf32>
    %39 = vector.broadcast %38 : vector<1x96xf32> to vector<16x96xf32>
    %40 = arith.addf %36, %39 : vector<16x96xf32>
    %41 = vector.shape_cast %40 : vector<16x96xf32> to vector<2x8x96xf32>
    %c0_19 = arith.constant 0 : index
    %c0_20 = arith.constant 0 : index
    %c0_21 = arith.constant 0 : index
    %42 = vector.load %arg5[%c0_19, %c0_20, %c0_21] : memref<3x32x32xf32, #tpu.memory_space<vmem>>, vector<1x32x32xf32>
    %43 = vector.shape_cast %42 : vector<1x32x32xf32> to vector<32x32xf32>
    %44 = vector.extract_strided_slice %41 {offsets = [0, 0, 0], sizes = [2, 8, 8], strides = [1, 1, 1]} : vector<2x8x96xf32> to vector<2x8x8xf32>
    %45 = vector.extract_strided_slice %41 {offsets = [0, 0, 32], sizes = [2, 8, 8], strides = [1, 1, 1]} : vector<2x8x96xf32> to vector<2x8x8xf32>
    %46 = vector.extract_strided_slice %41 {offsets = [0, 0, 64], sizes = [2, 8, 8], strides = [1, 1, 1]} : vector<2x8x96xf32> to vector<2x8x8xf32>
    "tpu.trace_start"() <{level = 10 : i32, message = "btd,bsd->bts"}> : () -> ()
    %cst_22 = arith.constant dense<0.000000e+00> : vector<2x8x8xf32>
    %47 = tpu.matmul %44, %45, %cst_22 {dimension_numbers = #tpu.dot_dimension_numbers<[2], [2], [1], [1], [0, 0, 0, 1, 1, 1], [0], [0]>} : vector<2x8x8xf32>, vector<2x8x8xf32>, vector<2x8x8xf32> -> vector<2x8x8xf32>
    "tpu.trace_stop"() : () -> ()
    %48 = vector.broadcast %15 : vector<1x8x8xf32> to vector<2x8x8xf32>
    %49 = arith.addf %47, %48 : vector<2x8x8xf32>
    %cst_23 = arith.constant dense<0xFF800000> : vector<2x8xf32>
    %50 = vector.multi_reduction <maximumf>, %49, %cst_23 [2] : vector<2x8x8xf32> to vector<2x8xf32>
    %51 = vector.shape_cast %50 : vector<2x8xf32> to vector<2x8x1xf32>
    %52 = vector.broadcast %51 : vector<2x8x1xf32> to vector<2x8x8xf32>
    %53 = arith.subf %49, %52 : vector<2x8x8xf32>
    %54 = math.exp %53 : vector<2x8x8xf32>
    %cst_24 = arith.constant dense<0.000000e+00> : vector<2x8xf32>
    %55 = vector.multi_reduction <add>, %54, %cst_24 [2] : vector<2x8x8xf32> to vector<2x8xf32>
    %56 = vector.shape_cast %55 : vector<2x8xf32> to vector<2x8x1xf32>
    %57 = tpu.reciprocal %56 {approx = true} : vector<2x8x1xf32> -> vector<2x8x1xf32>
    %58 = vector.broadcast %57 : vector<2x8x1xf32> to vector<2x8x8xf32>
    %59 = arith.mulf %54, %58 : vector<2x8x8xf32>
    "tpu.trace_start"() <{level = 10 : i32, message = "bts,bsd->btd"}> : () -> ()
    %cst_25 = arith.constant dense<0.000000e+00> : vector<2x8x8xf32>
    %60 = tpu.matmul %59, %46, %cst_25 {dimension_numbers = #tpu.dot_dimension_numbers<[2], [1], [1], [2], [0, 0, 0, 1, 1, 2], [0], [0]>} : vector<2x8x8xf32>, vector<2x8x8xf32>, vector<2x8x8xf32> -> vector<2x8x8xf32>
    "tpu.trace_stop"() : () -> ()
    %61 = vector.extract_strided_slice %43 {offsets = [0, 0], sizes = [8, 32], strides = [1, 1]} : vector<32x32xf32> to vector<8x32xf32>
    "tpu.trace_start"() <{level = 10 : i32, message = "btd,dc->btc"}> : () -> ()
    %cst_26 = arith.constant dense<0.000000e+00> : vector<2x8x32xf32>
    %62 = tpu.matmul %60, %61, %cst_26 {dimension_numbers = #tpu.dot_dimension_numbers<[2], [0], [0, 1], [1], [0, 0, 0, 1, 1, 1], [], []>} : vector<2x8x8xf32>, vector<8x32xf32>, vector<2x8x32xf32> -> vector<2x8x32xf32>
    "tpu.trace_stop"() : () -> ()
    %63 = vector.extract_strided_slice %41 {offsets = [0, 0, 8], sizes = [2, 8, 8], strides = [1, 1, 1]} : vector<2x8x96xf32> to vector<2x8x8xf32>
    %64 = vector.extract_strided_slice %41 {offsets = [0, 0, 40], sizes = [2, 8, 8], strides = [1, 1, 1]} : vector<2x8x96xf32> to vector<2x8x8xf32>
    %65 = vector.extract_strided_slice %41 {offsets = [0, 0, 72], sizes = [2, 8, 8], strides = [1, 1, 1]} : vector<2x8x96xf32> to vector<2x8x8xf32>
    "tpu.trace_start"() <{level = 10 : i32, message = "btd,bsd->bts"}> : () -> ()
    %cst_27 = arith.constant dense<0.000000e+00> : vector<2x8x8xf32>
    %66 = tpu.matmul %63, %64, %cst_27 {dimension_numbers = #tpu.dot_dimension_numbers<[2], [2], [1], [1], [0, 0, 0, 1, 1, 1], [0], [0]>} : vector<2x8x8xf32>, vector<2x8x8xf32>, vector<2x8x8xf32> -> vector<2x8x8xf32>
    "tpu.trace_stop"() : () -> ()
    %67 = vector.broadcast %15 : vector<1x8x8xf32> to vector<2x8x8xf32>
    %68 = arith.addf %66, %67 : vector<2x8x8xf32>
    %cst_28 = arith.constant dense<0xFF800000> : vector<2x8xf32>
    %69 = vector.multi_reduction <maximumf>, %68, %cst_28 [2] : vector<2x8x8xf32> to vector<2x8xf32>
    %70 = vector.shape_cast %69 : vector<2x8xf32> to vector<2x8x1xf32>
    %71 = vector.broadcast %70 : vector<2x8x1xf32> to vector<2x8x8xf32>
    %72 = arith.subf %68, %71 : vector<2x8x8xf32>
    %73 = math.exp %72 : vector<2x8x8xf32>
    %cst_29 = arith.constant dense<0.000000e+00> : vector<2x8xf32>
    %74 = vector.multi_reduction <add>, %73, %cst_29 [2] : vector<2x8x8xf32> to vector<2x8xf32>
    %75 = vector.shape_cast %74 : vector<2x8xf32> to vector<2x8x1xf32>
    %76 = tpu.reciprocal %75 {approx = true} : vector<2x8x1xf32> -> vector<2x8x1xf32>
    %77 = vector.broadcast %76 : vector<2x8x1xf32> to vector<2x8x8xf32>
    %78 = arith.mulf %73, %77 : vector<2x8x8xf32>
    "tpu.trace_start"() <{level = 10 : i32, message = "bts,bsd->btd"}> : () -> ()
    %cst_30 = arith.constant dense<0.000000e+00> : vector<2x8x8xf32>
    %79 = tpu.matmul %78, %65, %cst_30 {dimension_numbers = #tpu.dot_dimension_numbers<[2], [1], [1], [2], [0, 0, 0, 1, 1, 2], [0], [0]>} : vector<2x8x8xf32>, vector<2x8x8xf32>, vector<2x8x8xf32> -> vector<2x8x8xf32>
    "tpu.trace_stop"() : () -> ()
    %80 = vector.extract_strided_slice %43 {offsets = [8, 0], sizes = [8, 32], strides = [1, 1]} : vector<32x32xf32> to vector<8x32xf32>
    "tpu.trace_start"() <{level = 10 : i32, message = "btd,dc->btc"}> : () -> ()
    %cst_31 = arith.constant dense<0.000000e+00> : vector<2x8x32xf32>
    %81 = tpu.matmul %79, %80, %cst_31 {dimension_numbers = #tpu.dot_dimension_numbers<[2], [0], [0, 1], [1], [0, 0, 0, 1, 1, 1], [], []>} : vector<2x8x8xf32>, vector<8x32xf32>, vector<2x8x32xf32> -> vector<2x8x32xf32>
    "tpu.trace_stop"() : () -> ()
    %82 = arith.addf %62, %81 : vector<2x8x32xf32>
    %83 = vector.extract_strided_slice %41 {offsets = [0, 0, 16], sizes = [2, 8, 8], strides = [1, 1, 1]} : vector<2x8x96xf32> to vector<2x8x8xf32>
    %84 = vector.extract_strided_slice %41 {offsets = [0, 0, 48], sizes = [2, 8, 8], strides = [1, 1, 1]} : vector<2x8x96xf32> to vector<2x8x8xf32>
    %85 = vector.extract_strided_slice %41 {offsets = [0, 0, 80], sizes = [2, 8, 8], strides = [1, 1, 1]} : vector<2x8x96xf32> to vector<2x8x8xf32>
    "tpu.trace_start"() <{level = 10 : i32, message = "btd,bsd->bts"}> : () -> ()
    %cst_32 = arith.constant dense<0.000000e+00> : vector<2x8x8xf32>
    %86 = tpu.matmul %83, %84, %cst_32 {dimension_numbers = #tpu.dot_dimension_numbers<[2], [2], [1], [1], [0, 0, 0, 1, 1, 1], [0], [0]>} : vector<2x8x8xf32>, vector<2x8x8xf32>, vector<2x8x8xf32> -> vector<2x8x8xf32>
    "tpu.trace_stop"() : () -> ()
    %87 = vector.broadcast %15 : vector<1x8x8xf32> to vector<2x8x8xf32>
    %88 = arith.addf %86, %87 : vector<2x8x8xf32>
    %cst_33 = arith.constant dense<0xFF800000> : vector<2x8xf32>
    %89 = vector.multi_reduction <maximumf>, %88, %cst_33 [2] : vector<2x8x8xf32> to vector<2x8xf32>
    %90 = vector.shape_cast %89 : vector<2x8xf32> to vector<2x8x1xf32>
    %91 = vector.broadcast %90 : vector<2x8x1xf32> to vector<2x8x8xf32>
    %92 = arith.subf %88, %91 : vector<2x8x8xf32>
    %93 = math.exp %92 : vector<2x8x8xf32>
    %cst_34 = arith.constant dense<0.000000e+00> : vector<2x8xf32>
    %94 = vector.multi_reduction <add>, %93, %cst_34 [2] : vector<2x8x8xf32> to vector<2x8xf32>
    %95 = vector.shape_cast %94 : vector<2x8xf32> to vector<2x8x1xf32>
    %96 = tpu.reciprocal %95 {approx = true} : vector<2x8x1xf32> -> vector<2x8x1xf32>
    %97 = vector.broadcast %96 : vector<2x8x1xf32> to vector<2x8x8xf32>
    %98 = arith.mulf %93, %97 : vector<2x8x8xf32>
    "tpu.trace_start"() <{level = 10 : i32, message = "bts,bsd->btd"}> : () -> ()
    %cst_35 = arith.constant dense<0.000000e+00> : vector<2x8x8xf32>
    %99 = tpu.matmul %98, %85, %cst_35 {dimension_numbers = #tpu.dot_dimension_numbers<[2], [1], [1], [2], [0, 0, 0, 1, 1, 2], [0], [0]>} : vector<2x8x8xf32>, vector<2x8x8xf32>, vector<2x8x8xf32> -> vector<2x8x8xf32>
    "tpu.trace_stop"() : () -> ()
    %100 = vector.extract_strided_slice %43 {offsets = [16, 0], sizes = [8, 32], strides = [1, 1]} : vector<32x32xf32> to vector<8x32xf32>
    "tpu.trace_start"() <{level = 10 : i32, message = "btd,dc->btc"}> : () -> ()
    %cst_36 = arith.constant dense<0.000000e+00> : vector<2x8x32xf32>
    %101 = tpu.matmul %99, %100, %cst_36 {dimension_numbers = #tpu.dot_dimension_numbers<[2], [0], [0, 1], [1], [0, 0, 0, 1, 1, 1], [], []>} : vector<2x8x8xf32>, vector<8x32xf32>, vector<2x8x32xf32> -> vector<2x8x32xf32>
    "tpu.trace_stop"() : () -> ()
    %102 = arith.addf %82, %101 : vector<2x8x32xf32>
    %103 = vector.extract_strided_slice %41 {offsets = [0, 0, 24], sizes = [2, 8, 8], strides = [1, 1, 1]} : vector<2x8x96xf32> to vector<2x8x8xf32>
    %104 = vector.extract_strided_slice %41 {offsets = [0, 0, 56], sizes = [2, 8, 8], strides = [1, 1, 1]} : vector<2x8x96xf32> to vector<2x8x8xf32>
    %105 = vector.extract_strided_slice %41 {offsets = [0, 0, 88], sizes = [2, 8, 8], strides = [1, 1, 1]} : vector<2x8x96xf32> to vector<2x8x8xf32>
    "tpu.trace_start"() <{level = 10 : i32, message = "btd,bsd->bts"}> : () -> ()
    %cst_37 = arith.constant dense<0.000000e+00> : vector<2x8x8xf32>
    %106 = tpu.matmul %103, %104, %cst_37 {dimension_numbers = #tpu.dot_dimension_numbers<[2], [2], [1], [1], [0, 0, 0, 1, 1, 1], [0], [0]>} : vector<2x8x8xf32>, vector<2x8x8xf32>, vector<2x8x8xf32> -> vector<2x8x8xf32>
    "tpu.trace_stop"() : () -> ()
    %107 = vector.broadcast %15 : vector<1x8x8xf32> to vector<2x8x8xf32>
    %108 = arith.addf %106, %107 : vector<2x8x8xf32>
    %cst_38 = arith.constant dense<0xFF800000> : vector<2x8xf32>
    %109 = vector.multi_reduction <maximumf>, %108, %cst_38 [2] : vector<2x8x8xf32> to vector<2x8xf32>
    %110 = vector.shape_cast %109 : vector<2x8xf32> to vector<2x8x1xf32>
    %111 = vector.broadcast %110 : vector<2x8x1xf32> to vector<2x8x8xf32>
    %112 = arith.subf %108, %111 : vector<2x8x8xf32>
    %113 = math.exp %112 : vector<2x8x8xf32>
    %cst_39 = arith.constant dense<0.000000e+00> : vector<2x8xf32>
    %114 = vector.multi_reduction <add>, %113, %cst_39 [2] : vector<2x8x8xf32> to vector<2x8xf32>
    %115 = vector.shape_cast %114 : vector<2x8xf32> to vector<2x8x1xf32>
    %116 = tpu.reciprocal %115 {approx = true} : vector<2x8x1xf32> -> vector<2x8x1xf32>
    %117 = vector.broadcast %116 : vector<2x8x1xf32> to vector<2x8x8xf32>
    %118 = arith.mulf %113, %117 : vector<2x8x8xf32>
    "tpu.trace_start"() <{level = 10 : i32, message = "bts,bsd->btd"}> : () -> ()
    %cst_40 = arith.constant dense<0.000000e+00> : vector<2x8x8xf32>
    %119 = tpu.matmul %118, %105, %cst_40 {dimension_numbers = #tpu.dot_dimension_numbers<[2], [1], [1], [2], [0, 0, 0, 1, 1, 2], [0], [0]>} : vector<2x8x8xf32>, vector<2x8x8xf32>, vector<2x8x8xf32> -> vector<2x8x8xf32>
    "tpu.trace_stop"() : () -> ()
    %120 = vector.extract_strided_slice %43 {offsets = [24, 0], sizes = [8, 32], strides = [1, 1]} : vector<32x32xf32> to vector<8x32xf32>
    "tpu.trace_start"() <{level = 10 : i32, message = "btd,dc->btc"}> : () -> ()
    %cst_41 = arith.constant dense<0.000000e+00> : vector<2x8x32xf32>
    %121 = tpu.matmul %119, %120, %cst_41 {dimension_numbers = #tpu.dot_dimension_numbers<[2], [0], [0, 1], [1], [0, 0, 0, 1, 1, 1], [], []>} : vector<2x8x8xf32>, vector<8x32xf32>, vector<2x8x32xf32> -> vector<2x8x32xf32>
    "tpu.trace_stop"() : () -> ()
    %122 = arith.addf %102, %121 : vector<2x8x32xf32>
    %123 = vector.shape_cast %122 : vector<2x8x32xf32> to vector<16x32xf32>
    %124 = arith.addf %9, %123 : vector<16x32xf32>
    %c0_42 = arith.constant 0 : index
    %c0_43 = arith.constant 0 : index
    %c0_44 = arith.constant 0 : index
    %125 = vector.load %arg6[%c0_42, %c0_43, %c0_44] : memref<3x1x32xf32, #tpu.memory_space<vmem>>, vector<1x1x32xf32>
    %126 = vector.shape_cast %125 : vector<1x1x32xf32> to vector<1x32xf32>
    %127 = vector.broadcast %126 : vector<1x32xf32> to vector<16x32xf32>
    %128 = arith.addf %124, %127 : vector<16x32xf32>
    %cst_45 = arith.constant dense<0.000000e+00> : vector<16xf32>
    %129 = vector.multi_reduction <add>, %128, %cst_45 [1] : vector<16x32xf32> to vector<16xf32>
    %130 = vector.shape_cast %129 : vector<16xf32> to vector<16x1xf32>
    %cst_46 = arith.constant 3.200000e+01 : f32
    %131 = vector.broadcast %cst_46 : f32 to vector<16x1xf32>
    %132 = arith.divf %130, %131 : vector<16x1xf32>
    %133 = vector.broadcast %132 : vector<16x1xf32> to vector<16x32xf32>
    %134 = arith.subf %128, %133 : vector<16x32xf32>
    %135 = arith.mulf %134, %134 : vector<16x32xf32>
    %cst_47 = arith.constant dense<0.000000e+00> : vector<16xf32>
    %136 = vector.multi_reduction <add>, %135, %cst_47 [1] : vector<16x32xf32> to vector<16xf32>
    %137 = vector.shape_cast %136 : vector<16xf32> to vector<16x1xf32>
    %cst_48 = arith.constant 3.200000e+01 : f32
    %138 = vector.broadcast %cst_48 : f32 to vector<16x1xf32>
    %139 = arith.divf %137, %138 : vector<16x1xf32>
    %140 = vector.broadcast %132 : vector<16x1xf32> to vector<16x32xf32>
    %141 = arith.subf %128, %140 : vector<16x32xf32>
    %cst_49 = arith.constant 9.99999974E-6 : f32
    %142 = vector.broadcast %cst_49 : f32 to vector<16x1xf32>
    %143 = arith.addf %139, %142 : vector<16x1xf32>
    %144 = math.rsqrt %143 : vector<16x1xf32>
    %145 = vector.broadcast %144 : vector<16x1xf32> to vector<16x32xf32>
    %146 = arith.mulf %141, %145 : vector<16x32xf32>
    %c0_50 = arith.constant 0 : index
    %c0_51 = arith.constant 0 : index
    %c0_52 = arith.constant 0 : index
    %147 = vector.load %arg7[%c0_50, %c0_51, %c0_52] : memref<3x32x128xf32, #tpu.memory_space<vmem>>, vector<1x32x128xf32>
    %148 = vector.shape_cast %147 : vector<1x32x128xf32> to vector<32x128xf32>
    %cst_53 = arith.constant dense<0.000000e+00> : vector<16x128xf32>
    %149 = tpu.matmul %146, %148, %cst_53 {dimension_numbers = #tpu.dot_dimension_numbers<[1], [0], [0], [1], [0, 0, 1, 1], [], []>} : vector<16x32xf32>, vector<32x128xf32>, vector<16x128xf32> -> vector<16x128xf32>
    %c0_54 = arith.constant 0 : index
    %c0_55 = arith.constant 0 : index
    %c0_56 = arith.constant 0 : index
    %150 = vector.load %arg8[%c0_54, %c0_55, %c0_56] : memref<3x1x128xf32, #tpu.memory_space<vmem>>, vector<1x1x128xf32>
    %151 = vector.shape_cast %150 : vector<1x1x128xf32> to vector<1x128xf32>
    %152 = vector.broadcast %151 : vector<1x128xf32> to vector<16x128xf32>
    %153 = arith.addf %149, %152 : vector<16x128xf32>
    %cst_57 = arith.constant 0.000000e+00 : f32
    %154 = vector.broadcast %cst_57 : f32 to vector<16x128xf32>
    %155 = arith.maximumf %153, %154 : vector<16x128xf32>
    %c0_58 = arith.constant 0 : index
    %c0_59 = arith.constant 0 : index
    %c0_60 = arith.constant 0 : index
    %156 = vector.load %arg9[%c0_58, %c0_59, %c0_60] : memref<3x128x32xf32, #tpu.memory_space<vmem>>, vector<1x128x32xf32>
    %157 = vector.shape_cast %156 : vector<1x128x32xf32> to vector<128x32xf32>
    %cst_61 = arith.constant dense<0.000000e+00> : vector<16x32xf32>
    %158 = tpu.matmul %155, %157, %cst_61 {dimension_numbers = #tpu.dot_dimension_numbers<[1], [0], [0], [1], [0, 0, 1, 1], [], []>} : vector<16x128xf32>, vector<128x32xf32>, vector<16x32xf32> -> vector<16x32xf32>
    %159 = arith.addf %128, %158 : vector<16x32xf32>
    %c0_62 = arith.constant 0 : index
    %c0_63 = arith.constant 0 : index
    %c0_64 = arith.constant 0 : index
    %160 = vector.load %arg10[%c0_62, %c0_63, %c0_64] : memref<3x1x32xf32, #tpu.memory_space<vmem>>, vector<1x1x32xf32>
    %161 = vector.shape_cast %160 : vector<1x1x32xf32> to vector<1x32xf32>
    %162 = vector.broadcast %161 : vector<1x32xf32> to vector<16x32xf32>
    %163 = arith.addf %159, %162 : vector<16x32xf32>
    %cst_65 = arith.constant dense<0.000000e+00> : vector<16xf32>
    %164 = vector.multi_reduction <add>, %163, %cst_65 [1] : vector<16x32xf32> to vector<16xf32>
    %165 = vector.shape_cast %164 : vector<16xf32> to vector<16x1xf32>
    %cst_66 = arith.constant 3.200000e+01 : f32
    %166 = vector.broadcast %cst_66 : f32 to vector<16x1xf32>
    %167 = arith.divf %165, %166 : vector<16x1xf32>
    %168 = vector.broadcast %167 : vector<16x1xf32> to vector<16x32xf32>
    %169 = arith.subf %163, %168 : vector<16x32xf32>
    %170 = arith.mulf %169, %169 : vector<16x32xf32>
    %cst_67 = arith.constant dense<0.000000e+00> : vector<16xf32>
    %171 = vector.multi_reduction <add>, %170, %cst_67 [1] : vector<16x32xf32> to vector<16xf32>
    %172 = vector.shape_cast %171 : vector<16xf32> to vector<16x1xf32>
    %cst_68 = arith.constant 3.200000e+01 : f32
    %173 = vector.broadcast %cst_68 : f32 to vector<16x1xf32>
    %174 = arith.divf %172, %173 : vector<16x1xf32>
    %175 = vector.broadcast %167 : vector<16x1xf32> to vector<16x32xf32>
    %176 = arith.subf %163, %175 : vector<16x32xf32>
    %cst_69 = arith.constant 9.99999974E-6 : f32
    %177 = vector.broadcast %cst_69 : f32 to vector<16x1xf32>
    %178 = arith.addf %174, %177 : vector<16x1xf32>
    %179 = math.rsqrt %178 : vector<16x1xf32>
    %180 = vector.broadcast %179 : vector<16x1xf32> to vector<16x32xf32>
    %181 = arith.mulf %176, %180 : vector<16x32xf32>
    %c1 = arith.constant 1 : index
    %c0_70 = arith.constant 0 : index
    %c0_71 = arith.constant 0 : index
    %182 = vector.load %arg3[%c1, %c0_70, %c0_71] : memref<3x32x96xf32, #tpu.memory_space<vmem>>, vector<1x32x96xf32>
    %183 = vector.shape_cast %182 : vector<1x32x96xf32> to vector<32x96xf32>
    %cst_72 = arith.constant dense<0.000000e+00> : vector<16x96xf32>
    %184 = tpu.matmul %181, %183, %cst_72 {dimension_numbers = #tpu.dot_dimension_numbers<[1], [0], [0], [1], [0, 0, 1, 1], [], []>} : vector<16x32xf32>, vector<32x96xf32>, vector<16x96xf32> -> vector<16x96xf32>
    %c1_73 = arith.constant 1 : index
    %c0_74 = arith.constant 0 : index
    %c0_75 = arith.constant 0 : index
    %185 = vector.load %arg4[%c1_73, %c0_74, %c0_75] : memref<3x1x96xf32, #tpu.memory_space<vmem>>, vector<1x1x96xf32>
    %186 = vector.shape_cast %185 : vector<1x1x96xf32> to vector<1x96xf32>
    %187 = vector.broadcast %186 : vector<1x96xf32> to vector<16x96xf32>
    %188 = arith.addf %184, %187 : vector<16x96xf32>
    %189 = vector.shape_cast %188 : vector<16x96xf32> to vector<2x8x96xf32>
    %c1_76 = arith.constant 1 : index
    %c0_77 = arith.constant 0 : index
    %c0_78 = arith.constant 0 : index
    %190 = vector.load %arg5[%c1_76, %c0_77, %c0_78] : memref<3x32x32xf32, #tpu.memory_space<vmem>>, vector<1x32x32xf32>
    %191 = vector.shape_cast %190 : vector<1x32x32xf32> to vector<32x32xf32>
    %192 = vector.extract_strided_slice %189 {offsets = [0, 0, 0], sizes = [2, 8, 8], strides = [1, 1, 1]} : vector<2x8x96xf32> to vector<2x8x8xf32>
    %193 = vector.extract_strided_slice %189 {offsets = [0, 0, 32], sizes = [2, 8, 8], strides = [1, 1, 1]} : vector<2x8x96xf32> to vector<2x8x8xf32>
    %194 = vector.extract_strided_slice %189 {offsets = [0, 0, 64], sizes = [2, 8, 8], strides = [1, 1, 1]} : vector<2x8x96xf32> to vector<2x8x8xf32>
    "tpu.trace_start"() <{level = 10 : i32, message = "btd,bsd->bts"}> : () -> ()
    %cst_79 = arith.constant dense<0.000000e+00> : vector<2x8x8xf32>
    %195 = tpu.matmul %192, %193, %cst_79 {dimension_numbers = #tpu.dot_dimension_numbers<[2], [2], [1], [1], [0, 0, 0, 1, 1, 1], [0], [0]>} : vector<2x8x8xf32>, vector<2x8x8xf32>, vector<2x8x8xf32> -> vector<2x8x8xf32>
    "tpu.trace_stop"() : () -> ()
    %196 = vector.broadcast %15 : vector<1x8x8xf32> to vector<2x8x8xf32>
    %197 = arith.addf %195, %196 : vector<2x8x8xf32>
    %cst_80 = arith.constant dense<0xFF800000> : vector<2x8xf32>
    %198 = vector.multi_reduction <maximumf>, %197, %cst_80 [2] : vector<2x8x8xf32> to vector<2x8xf32>
    %199 = vector.shape_cast %198 : vector<2x8xf32> to vector<2x8x1xf32>
    %200 = vector.broadcast %199 : vector<2x8x1xf32> to vector<2x8x8xf32>
    %201 = arith.subf %197, %200 : vector<2x8x8xf32>
    %202 = math.exp %201 : vector<2x8x8xf32>
    %cst_81 = arith.constant dense<0.000000e+00> : vector<2x8xf32>
    %203 = vector.multi_reduction <add>, %202, %cst_81 [2] : vector<2x8x8xf32> to vector<2x8xf32>
    %204 = vector.shape_cast %203 : vector<2x8xf32> to vector<2x8x1xf32>
    %205 = tpu.reciprocal %204 {approx = true} : vector<2x8x1xf32> -> vector<2x8x1xf32>
    %206 = vector.broadcast %205 : vector<2x8x1xf32> to vector<2x8x8xf32>
    %207 = arith.mulf %202, %206 : vector<2x8x8xf32>
    "tpu.trace_start"() <{level = 10 : i32, message = "bts,bsd->btd"}> : () -> ()
    %cst_82 = arith.constant dense<0.000000e+00> : vector<2x8x8xf32>
    %208 = tpu.matmul %207, %194, %cst_82 {dimension_numbers = #tpu.dot_dimension_numbers<[2], [1], [1], [2], [0, 0, 0, 1, 1, 2], [0], [0]>} : vector<2x8x8xf32>, vector<2x8x8xf32>, vector<2x8x8xf32> -> vector<2x8x8xf32>
    "tpu.trace_stop"() : () -> ()
    %209 = vector.extract_strided_slice %191 {offsets = [0, 0], sizes = [8, 32], strides = [1, 1]} : vector<32x32xf32> to vector<8x32xf32>
    "tpu.trace_start"() <{level = 10 : i32, message = "btd,dc->btc"}> : () -> ()
    %cst_83 = arith.constant dense<0.000000e+00> : vector<2x8x32xf32>
    %210 = tpu.matmul %208, %209, %cst_83 {dimension_numbers = #tpu.dot_dimension_numbers<[2], [0], [0, 1], [1], [0, 0, 0, 1, 1, 1], [], []>} : vector<2x8x8xf32>, vector<8x32xf32>, vector<2x8x32xf32> -> vector<2x8x32xf32>
    "tpu.trace_stop"() : () -> ()
    %211 = vector.extract_strided_slice %189 {offsets = [0, 0, 8], sizes = [2, 8, 8], strides = [1, 1, 1]} : vector<2x8x96xf32> to vector<2x8x8xf32>
    %212 = vector.extract_strided_slice %189 {offsets = [0, 0, 40], sizes = [2, 8, 8], strides = [1, 1, 1]} : vector<2x8x96xf32> to vector<2x8x8xf32>
    %213 = vector.extract_strided_slice %189 {offsets = [0, 0, 72], sizes = [2, 8, 8], strides = [1, 1, 1]} : vector<2x8x96xf32> to vector<2x8x8xf32>
    "tpu.trace_start"() <{level = 10 : i32, message = "btd,bsd->bts"}> : () -> ()
    %cst_84 = arith.constant dense<0.000000e+00> : vector<2x8x8xf32>
    %214 = tpu.matmul %211, %212, %cst_84 {dimension_numbers = #tpu.dot_dimension_numbers<[2], [2], [1], [1], [0, 0, 0, 1, 1, 1], [0], [0]>} : vector<2x8x8xf32>, vector<2x8x8xf32>, vector<2x8x8xf32> -> vector<2x8x8xf32>
    "tpu.trace_stop"() : () -> ()
    %215 = vector.broadcast %15 : vector<1x8x8xf32> to vector<2x8x8xf32>
    %216 = arith.addf %214, %215 : vector<2x8x8xf32>
    %cst_85 = arith.constant dense<0xFF800000> : vector<2x8xf32>
    %217 = vector.multi_reduction <maximumf>, %216, %cst_85 [2] : vector<2x8x8xf32> to vector<2x8xf32>
    %218 = vector.shape_cast %217 : vector<2x8xf32> to vector<2x8x1xf32>
    %219 = vector.broadcast %218 : vector<2x8x1xf32> to vector<2x8x8xf32>
    %220 = arith.subf %216, %219 : vector<2x8x8xf32>
    %221 = math.exp %220 : vector<2x8x8xf32>
    %cst_86 = arith.constant dense<0.000000e+00> : vector<2x8xf32>
    %222 = vector.multi_reduction <add>, %221, %cst_86 [2] : vector<2x8x8xf32> to vector<2x8xf32>
    %223 = vector.shape_cast %222 : vector<2x8xf32> to vector<2x8x1xf32>
    %224 = tpu.reciprocal %223 {approx = true} : vector<2x8x1xf32> -> vector<2x8x1xf32>
    %225 = vector.broadcast %224 : vector<2x8x1xf32> to vector<2x8x8xf32>
    %226 = arith.mulf %221, %225 : vector<2x8x8xf32>
    "tpu.trace_start"() <{level = 10 : i32, message = "bts,bsd->btd"}> : () -> ()
    %cst_87 = arith.constant dense<0.000000e+00> : vector<2x8x8xf32>
    %227 = tpu.matmul %226, %213, %cst_87 {dimension_numbers = #tpu.dot_dimension_numbers<[2], [1], [1], [2], [0, 0, 0, 1, 1, 2], [0], [0]>} : vector<2x8x8xf32>, vector<2x8x8xf32>, vector<2x8x8xf32> -> vector<2x8x8xf32>
    "tpu.trace_stop"() : () -> ()
    %228 = vector.extract_strided_slice %191 {offsets = [8, 0], sizes = [8, 32], strides = [1, 1]} : vector<32x32xf32> to vector<8x32xf32>
    "tpu.trace_start"() <{level = 10 : i32, message = "btd,dc->btc"}> : () -> ()
    %cst_88 = arith.constant dense<0.000000e+00> : vector<2x8x32xf32>
    %229 = tpu.matmul %227, %228, %cst_88 {dimension_numbers = #tpu.dot_dimension_numbers<[2], [0], [0, 1], [1], [0, 0, 0, 1, 1, 1], [], []>} : vector<2x8x8xf32>, vector<8x32xf32>, vector<2x8x32xf32> -> vector<2x8x32xf32>
    "tpu.trace_stop"() : () -> ()
    %230 = arith.addf %210, %229 : vector<2x8x32xf32>
    %231 = vector.extract_strided_slice %189 {offsets = [0, 0, 16], sizes = [2, 8, 8], strides = [1, 1, 1]} : vector<2x8x96xf32> to vector<2x8x8xf32>
    %232 = vector.extract_strided_slice %189 {offsets = [0, 0, 48], sizes = [2, 8, 8], strides = [1, 1, 1]} : vector<2x8x96xf32> to vector<2x8x8xf32>
    %233 = vector.extract_strided_slice %189 {offsets = [0, 0, 80], sizes = [2, 8, 8], strides = [1, 1, 1]} : vector<2x8x96xf32> to vector<2x8x8xf32>
    "tpu.trace_start"() <{level = 10 : i32, message = "btd,bsd->bts"}> : () -> ()
    %cst_89 = arith.constant dense<0.000000e+00> : vector<2x8x8xf32>
    %234 = tpu.matmul %231, %232, %cst_89 {dimension_numbers = #tpu.dot_dimension_numbers<[2], [2], [1], [1], [0, 0, 0, 1, 1, 1], [0], [0]>} : vector<2x8x8xf32>, vector<2x8x8xf32>, vector<2x8x8xf32> -> vector<2x8x8xf32>
    "tpu.trace_stop"() : () -> ()
    %235 = vector.broadcast %15 : vector<1x8x8xf32> to vector<2x8x8xf32>
    %236 = arith.addf %234, %235 : vector<2x8x8xf32>
    %cst_90 = arith.constant dense<0xFF800000> : vector<2x8xf32>
    %237 = vector.multi_reduction <maximumf>, %236, %cst_90 [2] : vector<2x8x8xf32> to vector<2x8xf32>
    %238 = vector.shape_cast %237 : vector<2x8xf32> to vector<2x8x1xf32>
    %239 = vector.broadcast %238 : vector<2x8x1xf32> to vector<2x8x8xf32>
    %240 = arith.subf %236, %239 : vector<2x8x8xf32>
    %241 = math.exp %240 : vector<2x8x8xf32>
    %cst_91 = arith.constant dense<0.000000e+00> : vector<2x8xf32>
    %242 = vector.multi_reduction <add>, %241, %cst_91 [2] : vector<2x8x8xf32> to vector<2x8xf32>
    %243 = vector.shape_cast %242 : vector<2x8xf32> to vector<2x8x1xf32>
    %244 = tpu.reciprocal %243 {approx = true} : vector<2x8x1xf32> -> vector<2x8x1xf32>
    %245 = vector.broadcast %244 : vector<2x8x1xf32> to vector<2x8x8xf32>
    %246 = arith.mulf %241, %245 : vector<2x8x8xf32>
    "tpu.trace_start"() <{level = 10 : i32, message = "bts,bsd->btd"}> : () -> ()
    %cst_92 = arith.constant dense<0.000000e+00> : vector<2x8x8xf32>
    %247 = tpu.matmul %246, %233, %cst_92 {dimension_numbers = #tpu.dot_dimension_numbers<[2], [1], [1], [2], [0, 0, 0, 1, 1, 2], [0], [0]>} : vector<2x8x8xf32>, vector<2x8x8xf32>, vector<2x8x8xf32> -> vector<2x8x8xf32>
    "tpu.trace_stop"() : () -> ()
    %248 = vector.extract_strided_slice %191 {offsets = [16, 0], sizes = [8, 32], strides = [1, 1]} : vector<32x32xf32> to vector<8x32xf32>
    "tpu.trace_start"() <{level = 10 : i32, message = "btd,dc->btc"}> : () -> ()
    %cst_93 = arith.constant dense<0.000000e+00> : vector<2x8x32xf32>
    %249 = tpu.matmul %247, %248, %cst_93 {dimension_numbers = #tpu.dot_dimension_numbers<[2], [0], [0, 1], [1], [0, 0, 0, 1, 1, 1], [], []>} : vector<2x8x8xf32>, vector<8x32xf32>, vector<2x8x32xf32> -> vector<2x8x32xf32>
    "tpu.trace_stop"() : () -> ()
    %250 = arith.addf %230, %249 : vector<2x8x32xf32>
    %251 = vector.extract_strided_slice %189 {offsets = [0, 0, 24], sizes = [2, 8, 8], strides = [1, 1, 1]} : vector<2x8x96xf32> to vector<2x8x8xf32>
    %252 = vector.extract_strided_slice %189 {offsets = [0, 0, 56], sizes = [2, 8, 8], strides = [1, 1, 1]} : vector<2x8x96xf32> to vector<2x8x8xf32>
    %253 = vector.extract_strided_slice %189 {offsets = [0, 0, 88], sizes = [2, 8, 8], strides = [1, 1, 1]} : vector<2x8x96xf32> to vector<2x8x8xf32>
    "tpu.trace_start"() <{level = 10 : i32, message = "btd,bsd->bts"}> : () -> ()
    %cst_94 = arith.constant dense<0.000000e+00> : vector<2x8x8xf32>
    %254 = tpu.matmul %251, %252, %cst_94 {dimension_numbers = #tpu.dot_dimension_numbers<[2], [2], [1], [1], [0, 0, 0, 1, 1, 1], [0], [0]>} : vector<2x8x8xf32>, vector<2x8x8xf32>, vector<2x8x8xf32> -> vector<2x8x8xf32>
    "tpu.trace_stop"() : () -> ()
    %255 = vector.broadcast %15 : vector<1x8x8xf32> to vector<2x8x8xf32>
    %256 = arith.addf %254, %255 : vector<2x8x8xf32>
    %cst_95 = arith.constant dense<0xFF800000> : vector<2x8xf32>
    %257 = vector.multi_reduction <maximumf>, %256, %cst_95 [2] : vector<2x8x8xf32> to vector<2x8xf32>
    %258 = vector.shape_cast %257 : vector<2x8xf32> to vector<2x8x1xf32>
    %259 = vector.broadcast %258 : vector<2x8x1xf32> to vector<2x8x8xf32>
    %260 = arith.subf %256, %259 : vector<2x8x8xf32>
    %261 = math.exp %260 : vector<2x8x8xf32>
    %cst_96 = arith.constant dense<0.000000e+00> : vector<2x8xf32>
    %262 = vector.multi_reduction <add>, %261, %cst_96 [2] : vector<2x8x8xf32> to vector<2x8xf32>
    %263 = vector.shape_cast %262 : vector<2x8xf32> to vector<2x8x1xf32>
    %264 = tpu.reciprocal %263 {approx = true} : vector<2x8x1xf32> -> vector<2x8x1xf32>
    %265 = vector.broadcast %264 : vector<2x8x1xf32> to vector<2x8x8xf32>
    %266 = arith.mulf %261, %265 : vector<2x8x8xf32>
    "tpu.trace_start"() <{level = 10 : i32, message = "bts,bsd->btd"}> : () -> ()
    %cst_97 = arith.constant dense<0.000000e+00> : vector<2x8x8xf32>
    %267 = tpu.matmul %266, %253, %cst_97 {dimension_numbers = #tpu.dot_dimension_numbers<[2], [1], [1], [2], [0, 0, 0, 1, 1, 2], [0], [0]>} : vector<2x8x8xf32>, vector<2x8x8xf32>, vector<2x8x8xf32> -> vector<2x8x8xf32>
    "tpu.trace_stop"() : () -> ()
    %268 = vector.extract_strided_slice %191 {offsets = [24, 0], sizes = [8, 32], strides = [1, 1]} : vector<32x32xf32> to vector<8x32xf32>
    "tpu.trace_start"() <{level = 10 : i32, message = "btd,dc->btc"}> : () -> ()
    %cst_98 = arith.constant dense<0.000000e+00> : vector<2x8x32xf32>
    %269 = tpu.matmul %267, %268, %cst_98 {dimension_numbers = #tpu.dot_dimension_numbers<[2], [0], [0, 1], [1], [0, 0, 0, 1, 1, 1], [], []>} : vector<2x8x8xf32>, vector<8x32xf32>, vector<2x8x32xf32> -> vector<2x8x32xf32>
    "tpu.trace_stop"() : () -> ()
    %270 = arith.addf %250, %269 : vector<2x8x32xf32>
    %271 = vector.shape_cast %270 : vector<2x8x32xf32> to vector<16x32xf32>
    %272 = arith.addf %163, %271 : vector<16x32xf32>
    %c1_99 = arith.constant 1 : index
    %c0_100 = arith.constant 0 : index
    %c0_101 = arith.constant 0 : index
    %273 = vector.load %arg6[%c1_99, %c0_100, %c0_101] : memref<3x1x32xf32, #tpu.memory_space<vmem>>, vector<1x1x32xf32>
    %274 = vector.shape_cast %273 : vector<1x1x32xf32> to vector<1x32xf32>
    %275 = vector.broadcast %274 : vector<1x32xf32> to vector<16x32xf32>
    %276 = arith.addf %272, %275 : vector<16x32xf32>
    %cst_102 = arith.constant dense<0.000000e+00> : vector<16xf32>
    %277 = vector.multi_reduction <add>, %276, %cst_102 [1] : vector<16x32xf32> to vector<16xf32>
    %278 = vector.shape_cast %277 : vector<16xf32> to vector<16x1xf32>
    %cst_103 = arith.constant 3.200000e+01 : f32
    %279 = vector.broadcast %cst_103 : f32 to vector<16x1xf32>
    %280 = arith.divf %278, %279 : vector<16x1xf32>
    %281 = vector.broadcast %280 : vector<16x1xf32> to vector<16x32xf32>
    %282 = arith.subf %276, %281 : vector<16x32xf32>
    %283 = arith.mulf %282, %282 : vector<16x32xf32>
    %cst_104 = arith.constant dense<0.000000e+00> : vector<16xf32>
    %284 = vector.multi_reduction <add>, %283, %cst_104 [1] : vector<16x32xf32> to vector<16xf32>
    %285 = vector.shape_cast %284 : vector<16xf32> to vector<16x1xf32>
    %cst_105 = arith.constant 3.200000e+01 : f32
    %286 = vector.broadcast %cst_105 : f32 to vector<16x1xf32>
    %287 = arith.divf %285, %286 : vector<16x1xf32>
    %288 = vector.broadcast %280 : vector<16x1xf32> to vector<16x32xf32>
    %289 = arith.subf %276, %288 : vector<16x32xf32>
    %cst_106 = arith.constant 9.99999974E-6 : f32
    %290 = vector.broadcast %cst_106 : f32 to vector<16x1xf32>
    %291 = arith.addf %287, %290 : vector<16x1xf32>
    %292 = math.rsqrt %291 : vector<16x1xf32>
    %293 = vector.broadcast %292 : vector<16x1xf32> to vector<16x32xf32>
    %294 = arith.mulf %289, %293 : vector<16x32xf32>
    %c1_107 = arith.constant 1 : index
    %c0_108 = arith.constant 0 : index
    %c0_109 = arith.constant 0 : index
    %295 = vector.load %arg7[%c1_107, %c0_108, %c0_109] : memref<3x32x128xf32, #tpu.memory_space<vmem>>, vector<1x32x128xf32>
    %296 = vector.shape_cast %295 : vector<1x32x128xf32> to vector<32x128xf32>
    %cst_110 = arith.constant dense<0.000000e+00> : vector<16x128xf32>
    %297 = tpu.matmul %294, %296, %cst_110 {dimension_numbers = #tpu.dot_dimension_numbers<[1], [0], [0], [1], [0, 0, 1, 1], [], []>} : vector<16x32xf32>, vector<32x128xf32>, vector<16x128xf32> -> vector<16x128xf32>
    %c1_111 = arith.constant 1 : index
    %c0_112 = arith.constant 0 : index
    %c0_113 = arith.constant 0 : index
    %298 = vector.load %arg8[%c1_111, %c0_112, %c0_113] : memref<3x1x128xf32, #tpu.memory_space<vmem>>, vector<1x1x128xf32>
    %299 = vector.shape_cast %298 : vector<1x1x128xf32> to vector<1x128xf32>
    %300 = vector.broadcast %299 : vector<1x128xf32> to vector<16x128xf32>
    %301 = arith.addf %297, %300 : vector<16x128xf32>
    %cst_114 = arith.constant 0.000000e+00 : f32
    %302 = vector.broadcast %cst_114 : f32 to vector<16x128xf32>
    %303 = arith.maximumf %301, %302 : vector<16x128xf32>
    %c1_115 = arith.constant 1 : index
    %c0_116 = arith.constant 0 : index
    %c0_117 = arith.constant 0 : index
    %304 = vector.load %arg9[%c1_115, %c0_116, %c0_117] : memref<3x128x32xf32, #tpu.memory_space<vmem>>, vector<1x128x32xf32>
    %305 = vector.shape_cast %304 : vector<1x128x32xf32> to vector<128x32xf32>
    %cst_118 = arith.constant dense<0.000000e+00> : vector<16x32xf32>
    %306 = tpu.matmul %303, %305, %cst_118 {dimension_numbers = #tpu.dot_dimension_numbers<[1], [0], [0], [1], [0, 0, 1, 1], [], []>} : vector<16x128xf32>, vector<128x32xf32>, vector<16x32xf32> -> vector<16x32xf32>
    %307 = arith.addf %276, %306 : vector<16x32xf32>
    %c1_119 = arith.constant 1 : index
    %c0_120 = arith.constant 0 : index
    %c0_121 = arith.constant 0 : index
    %308 = vector.load %arg10[%c1_119, %c0_120, %c0_121] : memref<3x1x32xf32, #tpu.memory_space<vmem>>, vector<1x1x32xf32>
    %309 = vector.shape_cast %308 : vector<1x1x32xf32> to vector<1x32xf32>
    %310 = vector.broadcast %309 : vector<1x32xf32> to vector<16x32xf32>
    %311 = arith.addf %307, %310 : vector<16x32xf32>
    %cst_122 = arith.constant dense<0.000000e+00> : vector<16xf32>
    %312 = vector.multi_reduction <add>, %311, %cst_122 [1] : vector<16x32xf32> to vector<16xf32>
    %313 = vector.shape_cast %312 : vector<16xf32> to vector<16x1xf32>
    %cst_123 = arith.constant 3.200000e+01 : f32
    %314 = vector.broadcast %cst_123 : f32 to vector<16x1xf32>
    %315 = arith.divf %313, %314 : vector<16x1xf32>
    %316 = vector.broadcast %315 : vector<16x1xf32> to vector<16x32xf32>
    %317 = arith.subf %311, %316 : vector<16x32xf32>
    %318 = arith.mulf %317, %317 : vector<16x32xf32>
    %cst_124 = arith.constant dense<0.000000e+00> : vector<16xf32>
    %319 = vector.multi_reduction <add>, %318, %cst_124 [1] : vector<16x32xf32> to vector<16xf32>
    %320 = vector.shape_cast %319 : vector<16xf32> to vector<16x1xf32>
    %cst_125 = arith.constant 3.200000e+01 : f32
    %321 = vector.broadcast %cst_125 : f32 to vector<16x1xf32>
    %322 = arith.divf %320, %321 : vector<16x1xf32>
    %323 = vector.broadcast %315 : vector<16x1xf32> to vector<16x32xf32>
    %324 = arith.subf %311, %323 : vector<16x32xf32>
    %cst_126 = arith.constant 9.99999974E-6 : f32
    %325 = vector.broadcast %cst_126 : f32 to vector<16x1xf32>
    %326 = arith.addf %322, %325 : vector<16x1xf32>
    %327 = math.rsqrt %326 : vector<16x1xf32>
    %328 = vector.broadcast %327 : vector<16x1xf32> to vector<16x32xf32>
    %329 = arith.mulf %324, %328 : vector<16x32xf32>
    %c2 = arith.constant 2 : index
    %c0_127 = arith.constant 0 : index
    %c0_128 = arith.constant 0 : index
    %330 = vector.load %arg3[%c2, %c0_127, %c0_128] : memref<3x32x96xf32, #tpu.memory_space<vmem>>, vector<1x32x96xf32>
    %331 = vector.shape_cast %330 : vector<1x32x96xf32> to vector<32x96xf32>
    %cst_129 = arith.constant dense<0.000000e+00> : vector<16x96xf32>
    %332 = tpu.matmul %329, %331, %cst_129 {dimension_numbers = #tpu.dot_dimension_numbers<[1], [0], [0], [1], [0, 0, 1, 1], [], []>} : vector<16x32xf32>, vector<32x96xf32>, vector<16x96xf32> -> vector<16x96xf32>
    %c2_130 = arith.constant 2 : index
    %c0_131 = arith.constant 0 : index
    %c0_132 = arith.constant 0 : index
    %333 = vector.load %arg4[%c2_130, %c0_131, %c0_132] : memref<3x1x96xf32, #tpu.memory_space<vmem>>, vector<1x1x96xf32>
    %334 = vector.shape_cast %333 : vector<1x1x96xf32> to vector<1x96xf32>
    %335 = vector.broadcast %334 : vector<1x96xf32> to vector<16x96xf32>
    %336 = arith.addf %332, %335 : vector<16x96xf32>
    %337 = vector.shape_cast %336 : vector<16x96xf32> to vector<2x8x96xf32>
    %c2_133 = arith.constant 2 : index
    %c0_134 = arith.constant 0 : index
    %c0_135 = arith.constant 0 : index
    %338 = vector.load %arg5[%c2_133, %c0_134, %c0_135] : memref<3x32x32xf32, #tpu.memory_space<vmem>>, vector<1x32x32xf32>
    %339 = vector.shape_cast %338 : vector<1x32x32xf32> to vector<32x32xf32>
    %340 = vector.extract_strided_slice %337 {offsets = [0, 0, 0], sizes = [2, 8, 8], strides = [1, 1, 1]} : vector<2x8x96xf32> to vector<2x8x8xf32>
    %341 = vector.extract_strided_slice %337 {offsets = [0, 0, 32], sizes = [2, 8, 8], strides = [1, 1, 1]} : vector<2x8x96xf32> to vector<2x8x8xf32>
    %342 = vector.extract_strided_slice %337 {offsets = [0, 0, 64], sizes = [2, 8, 8], strides = [1, 1, 1]} : vector<2x8x96xf32> to vector<2x8x8xf32>
    "tpu.trace_start"() <{level = 10 : i32, message = "btd,bsd->bts"}> : () -> ()
    %cst_136 = arith.constant dense<0.000000e+00> : vector<2x8x8xf32>
    %343 = tpu.matmul %340, %341, %cst_136 {dimension_numbers = #tpu.dot_dimension_numbers<[2], [2], [1], [1], [0, 0, 0, 1, 1, 1], [0], [0]>} : vector<2x8x8xf32>, vector<2x8x8xf32>, vector<2x8x8xf32> -> vector<2x8x8xf32>
    "tpu.trace_stop"() : () -> ()
    %344 = vector.broadcast %15 : vector<1x8x8xf32> to vector<2x8x8xf32>
    %345 = arith.addf %343, %344 : vector<2x8x8xf32>
    %cst_137 = arith.constant dense<0xFF800000> : vector<2x8xf32>
    %346 = vector.multi_reduction <maximumf>, %345, %cst_137 [2] : vector<2x8x8xf32> to vector<2x8xf32>
    %347 = vector.shape_cast %346 : vector<2x8xf32> to vector<2x8x1xf32>
    %348 = vector.broadcast %347 : vector<2x8x1xf32> to vector<2x8x8xf32>
    %349 = arith.subf %345, %348 : vector<2x8x8xf32>
    %350 = math.exp %349 : vector<2x8x8xf32>
    %cst_138 = arith.constant dense<0.000000e+00> : vector<2x8xf32>
    %351 = vector.multi_reduction <add>, %350, %cst_138 [2] : vector<2x8x8xf32> to vector<2x8xf32>
    %352 = vector.shape_cast %351 : vector<2x8xf32> to vector<2x8x1xf32>
    %353 = tpu.reciprocal %352 {approx = true} : vector<2x8x1xf32> -> vector<2x8x1xf32>
    %354 = vector.broadcast %353 : vector<2x8x1xf32> to vector<2x8x8xf32>
    %355 = arith.mulf %350, %354 : vector<2x8x8xf32>
    "tpu.trace_start"() <{level = 10 : i32, message = "bts,bsd->btd"}> : () -> ()
    %cst_139 = arith.constant dense<0.000000e+00> : vector<2x8x8xf32>
    %356 = tpu.matmul %355, %342, %cst_139 {dimension_numbers = #tpu.dot_dimension_numbers<[2], [1], [1], [2], [0, 0, 0, 1, 1, 2], [0], [0]>} : vector<2x8x8xf32>, vector<2x8x8xf32>, vector<2x8x8xf32> -> vector<2x8x8xf32>
    "tpu.trace_stop"() : () -> ()
    %357 = vector.extract_strided_slice %339 {offsets = [0, 0], sizes = [8, 32], strides = [1, 1]} : vector<32x32xf32> to vector<8x32xf32>
    "tpu.trace_start"() <{level = 10 : i32, message = "btd,dc->btc"}> : () -> ()
    %cst_140 = arith.constant dense<0.000000e+00> : vector<2x8x32xf32>
    %358 = tpu.matmul %356, %357, %cst_140 {dimension_numbers = #tpu.dot_dimension_numbers<[2], [0], [0, 1], [1], [0, 0, 0, 1, 1, 1], [], []>} : vector<2x8x8xf32>, vector<8x32xf32>, vector<2x8x32xf32> -> vector<2x8x32xf32>
    "tpu.trace_stop"() : () -> ()
    %359 = vector.extract_strided_slice %337 {offsets = [0, 0, 8], sizes = [2, 8, 8], strides = [1, 1, 1]} : vector<2x8x96xf32> to vector<2x8x8xf32>
    %360 = vector.extract_strided_slice %337 {offsets = [0, 0, 40], sizes = [2, 8, 8], strides = [1, 1, 1]} : vector<2x8x96xf32> to vector<2x8x8xf32>
    %361 = vector.extract_strided_slice %337 {offsets = [0, 0, 72], sizes = [2, 8, 8], strides = [1, 1, 1]} : vector<2x8x96xf32> to vector<2x8x8xf32>
    "tpu.trace_start"() <{level = 10 : i32, message = "btd,bsd->bts"}> : () -> ()
    %cst_141 = arith.constant dense<0.000000e+00> : vector<2x8x8xf32>
    %362 = tpu.matmul %359, %360, %cst_141 {dimension_numbers = #tpu.dot_dimension_numbers<[2], [2], [1], [1], [0, 0, 0, 1, 1, 1], [0], [0]>} : vector<2x8x8xf32>, vector<2x8x8xf32>, vector<2x8x8xf32> -> vector<2x8x8xf32>
    "tpu.trace_stop"() : () -> ()
    %363 = vector.broadcast %15 : vector<1x8x8xf32> to vector<2x8x8xf32>
    %364 = arith.addf %362, %363 : vector<2x8x8xf32>
    %cst_142 = arith.constant dense<0xFF800000> : vector<2x8xf32>
    %365 = vector.multi_reduction <maximumf>, %364, %cst_142 [2] : vector<2x8x8xf32> to vector<2x8xf32>
    %366 = vector.shape_cast %365 : vector<2x8xf32> to vector<2x8x1xf32>
    %367 = vector.broadcast %366 : vector<2x8x1xf32> to vector<2x8x8xf32>
    %368 = arith.subf %364, %367 : vector<2x8x8xf32>
    %369 = math.exp %368 : vector<2x8x8xf32>
    %cst_143 = arith.constant dense<0.000000e+00> : vector<2x8xf32>
    %370 = vector.multi_reduction <add>, %369, %cst_143 [2] : vector<2x8x8xf32> to vector<2x8xf32>
    %371 = vector.shape_cast %370 : vector<2x8xf32> to vector<2x8x1xf32>
    %372 = tpu.reciprocal %371 {approx = true} : vector<2x8x1xf32> -> vector<2x8x1xf32>
    %373 = vector.broadcast %372 : vector<2x8x1xf32> to vector<2x8x8xf32>
    %374 = arith.mulf %369, %373 : vector<2x8x8xf32>
    "tpu.trace_start"() <{level = 10 : i32, message = "bts,bsd->btd"}> : () -> ()
    %cst_144 = arith.constant dense<0.000000e+00> : vector<2x8x8xf32>
    %375 = tpu.matmul %374, %361, %cst_144 {dimension_numbers = #tpu.dot_dimension_numbers<[2], [1], [1], [2], [0, 0, 0, 1, 1, 2], [0], [0]>} : vector<2x8x8xf32>, vector<2x8x8xf32>, vector<2x8x8xf32> -> vector<2x8x8xf32>
    "tpu.trace_stop"() : () -> ()
    %376 = vector.extract_strided_slice %339 {offsets = [8, 0], sizes = [8, 32], strides = [1, 1]} : vector<32x32xf32> to vector<8x32xf32>
    "tpu.trace_start"() <{level = 10 : i32, message = "btd,dc->btc"}> : () -> ()
    %cst_145 = arith.constant dense<0.000000e+00> : vector<2x8x32xf32>
    %377 = tpu.matmul %375, %376, %cst_145 {dimension_numbers = #tpu.dot_dimension_numbers<[2], [0], [0, 1], [1], [0, 0, 0, 1, 1, 1], [], []>} : vector<2x8x8xf32>, vector<8x32xf32>, vector<2x8x32xf32> -> vector<2x8x32xf32>
    "tpu.trace_stop"() : () -> ()
    %378 = arith.addf %358, %377 : vector<2x8x32xf32>
    %379 = vector.extract_strided_slice %337 {offsets = [0, 0, 16], sizes = [2, 8, 8], strides = [1, 1, 1]} : vector<2x8x96xf32> to vector<2x8x8xf32>
    %380 = vector.extract_strided_slice %337 {offsets = [0, 0, 48], sizes = [2, 8, 8], strides = [1, 1, 1]} : vector<2x8x96xf32> to vector<2x8x8xf32>
    %381 = vector.extract_strided_slice %337 {offsets = [0, 0, 80], sizes = [2, 8, 8], strides = [1, 1, 1]} : vector<2x8x96xf32> to vector<2x8x8xf32>
    "tpu.trace_start"() <{level = 10 : i32, message = "btd,bsd->bts"}> : () -> ()
    %cst_146 = arith.constant dense<0.000000e+00> : vector<2x8x8xf32>
    %382 = tpu.matmul %379, %380, %cst_146 {dimension_numbers = #tpu.dot_dimension_numbers<[2], [2], [1], [1], [0, 0, 0, 1, 1, 1], [0], [0]>} : vector<2x8x8xf32>, vector<2x8x8xf32>, vector<2x8x8xf32> -> vector<2x8x8xf32>
    "tpu.trace_stop"() : () -> ()
    %383 = vector.broadcast %15 : vector<1x8x8xf32> to vector<2x8x8xf32>
    %384 = arith.addf %382, %383 : vector<2x8x8xf32>
    %cst_147 = arith.constant dense<0xFF800000> : vector<2x8xf32>
    %385 = vector.multi_reduction <maximumf>, %384, %cst_147 [2] : vector<2x8x8xf32> to vector<2x8xf32>
    %386 = vector.shape_cast %385 : vector<2x8xf32> to vector<2x8x1xf32>
    %387 = vector.broadcast %386 : vector<2x8x1xf32> to vector<2x8x8xf32>
    %388 = arith.subf %384, %387 : vector<2x8x8xf32>
    %389 = math.exp %388 : vector<2x8x8xf32>
    %cst_148 = arith.constant dense<0.000000e+00> : vector<2x8xf32>
    %390 = vector.multi_reduction <add>, %389, %cst_148 [2] : vector<2x8x8xf32> to vector<2x8xf32>
    %391 = vector.shape_cast %390 : vector<2x8xf32> to vector<2x8x1xf32>
    %392 = tpu.reciprocal %391 {approx = true} : vector<2x8x1xf32> -> vector<2x8x1xf32>
    %393 = vector.broadcast %392 : vector<2x8x1xf32> to vector<2x8x8xf32>
    %394 = arith.mulf %389, %393 : vector<2x8x8xf32>
    "tpu.trace_start"() <{level = 10 : i32, message = "bts,bsd->btd"}> : () -> ()
    %cst_149 = arith.constant dense<0.000000e+00> : vector<2x8x8xf32>
    %395 = tpu.matmul %394, %381, %cst_149 {dimension_numbers = #tpu.dot_dimension_numbers<[2], [1], [1], [2], [0, 0, 0, 1, 1, 2], [0], [0]>} : vector<2x8x8xf32>, vector<2x8x8xf32>, vector<2x8x8xf32> -> vector<2x8x8xf32>
    "tpu.trace_stop"() : () -> ()
    %396 = vector.extract_strided_slice %339 {offsets = [16, 0], sizes = [8, 32], strides = [1, 1]} : vector<32x32xf32> to vector<8x32xf32>
    "tpu.trace_start"() <{level = 10 : i32, message = "btd,dc->btc"}> : () -> ()
    %cst_150 = arith.constant dense<0.000000e+00> : vector<2x8x32xf32>
    %397 = tpu.matmul %395, %396, %cst_150 {dimension_numbers = #tpu.dot_dimension_numbers<[2], [0], [0, 1], [1], [0, 0, 0, 1, 1, 1], [], []>} : vector<2x8x8xf32>, vector<8x32xf32>, vector<2x8x32xf32> -> vector<2x8x32xf32>
    "tpu.trace_stop"() : () -> ()
    %398 = arith.addf %378, %397 : vector<2x8x32xf32>
    %399 = vector.extract_strided_slice %337 {offsets = [0, 0, 24], sizes = [2, 8, 8], strides = [1, 1, 1]} : vector<2x8x96xf32> to vector<2x8x8xf32>
    %400 = vector.extract_strided_slice %337 {offsets = [0, 0, 56], sizes = [2, 8, 8], strides = [1, 1, 1]} : vector<2x8x96xf32> to vector<2x8x8xf32>
    %401 = vector.extract_strided_slice %337 {offsets = [0, 0, 88], sizes = [2, 8, 8], strides = [1, 1, 1]} : vector<2x8x96xf32> to vector<2x8x8xf32>
    "tpu.trace_start"() <{level = 10 : i32, message = "btd,bsd->bts"}> : () -> ()
    %cst_151 = arith.constant dense<0.000000e+00> : vector<2x8x8xf32>
    %402 = tpu.matmul %399, %400, %cst_151 {dimension_numbers = #tpu.dot_dimension_numbers<[2], [2], [1], [1], [0, 0, 0, 1, 1, 1], [0], [0]>} : vector<2x8x8xf32>, vector<2x8x8xf32>, vector<2x8x8xf32> -> vector<2x8x8xf32>
    "tpu.trace_stop"() : () -> ()
    %403 = vector.broadcast %15 : vector<1x8x8xf32> to vector<2x8x8xf32>
    %404 = arith.addf %402, %403 : vector<2x8x8xf32>
    %cst_152 = arith.constant dense<0xFF800000> : vector<2x8xf32>
    %405 = vector.multi_reduction <maximumf>, %404, %cst_152 [2] : vector<2x8x8xf32> to vector<2x8xf32>
    %406 = vector.shape_cast %405 : vector<2x8xf32> to vector<2x8x1xf32>
    %407 = vector.broadcast %406 : vector<2x8x1xf32> to vector<2x8x8xf32>
    %408 = arith.subf %404, %407 : vector<2x8x8xf32>
    %409 = math.exp %408 : vector<2x8x8xf32>
    %cst_153 = arith.constant dense<0.000000e+00> : vector<2x8xf32>
    %410 = vector.multi_reduction <add>, %409, %cst_153 [2] : vector<2x8x8xf32> to vector<2x8xf32>
    %411 = vector.shape_cast %410 : vector<2x8xf32> to vector<2x8x1xf32>
    %412 = tpu.reciprocal %411 {approx = true} : vector<2x8x1xf32> -> vector<2x8x1xf32>
    %413 = vector.broadcast %412 : vector<2x8x1xf32> to vector<2x8x8xf32>
    %414 = arith.mulf %409, %413 : vector<2x8x8xf32>
    "tpu.trace_start"() <{level = 10 : i32, message = "bts,bsd->btd"}> : () -> ()
    %cst_154 = arith.constant dense<0.000000e+00> : vector<2x8x8xf32>
    %415 = tpu.matmul %414, %401, %cst_154 {dimension_numbers = #tpu.dot_dimension_numbers<[2], [1], [1], [2], [0, 0, 0, 1, 1, 2], [0], [0]>} : vector<2x8x8xf32>, vector<2x8x8xf32>, vector<2x8x8xf32> -> vector<2x8x8xf32>
    "tpu.trace_stop"() : () -> ()
    %416 = vector.extract_strided_slice %339 {offsets = [24, 0], sizes = [8, 32], strides = [1, 1]} : vector<32x32xf32> to vector<8x32xf32>
    "tpu.trace_start"() <{level = 10 : i32, message = "btd,dc->btc"}> : () -> ()
    %cst_155 = arith.constant dense<0.000000e+00> : vector<2x8x32xf32>
    %417 = tpu.matmul %415, %416, %cst_155 {dimension_numbers = #tpu.dot_dimension_numbers<[2], [0], [0, 1], [1], [0, 0, 0, 1, 1, 1], [], []>} : vector<2x8x8xf32>, vector<8x32xf32>, vector<2x8x32xf32> -> vector<2x8x32xf32>
    "tpu.trace_stop"() : () -> ()
    %418 = arith.addf %398, %417 : vector<2x8x32xf32>
    %419 = vector.shape_cast %418 : vector<2x8x32xf32> to vector<16x32xf32>
    %420 = arith.addf %311, %419 : vector<16x32xf32>
    %c2_156 = arith.constant 2 : index
    %c0_157 = arith.constant 0 : index
    %c0_158 = arith.constant 0 : index
    %421 = vector.load %arg6[%c2_156, %c0_157, %c0_158] : memref<3x1x32xf32, #tpu.memory_space<vmem>>, vector<1x1x32xf32>
    %422 = vector.shape_cast %421 : vector<1x1x32xf32> to vector<1x32xf32>
    %423 = vector.broadcast %422 : vector<1x32xf32> to vector<16x32xf32>
    %424 = arith.addf %420, %423 : vector<16x32xf32>
    %cst_159 = arith.constant dense<0.000000e+00> : vector<16xf32>
    %425 = vector.multi_reduction <add>, %424, %cst_159 [1] : vector<16x32xf32> to vector<16xf32>
    %426 = vector.shape_cast %425 : vector<16xf32> to vector<16x1xf32>
    %cst_160 = arith.constant 3.200000e+01 : f32
    %427 = vector.broadcast %cst_160 : f32 to vector<16x1xf32>
    %428 = arith.divf %426, %427 : vector<16x1xf32>
    %429 = vector.broadcast %428 : vector<16x1xf32> to vector<16x32xf32>
    %430 = arith.subf %424, %429 : vector<16x32xf32>
    %431 = arith.mulf %430, %430 : vector<16x32xf32>
    %cst_161 = arith.constant dense<0.000000e+00> : vector<16xf32>
    %432 = vector.multi_reduction <add>, %431, %cst_161 [1] : vector<16x32xf32> to vector<16xf32>
    %433 = vector.shape_cast %432 : vector<16xf32> to vector<16x1xf32>
    %cst_162 = arith.constant 3.200000e+01 : f32
    %434 = vector.broadcast %cst_162 : f32 to vector<16x1xf32>
    %435 = arith.divf %433, %434 : vector<16x1xf32>
    %436 = vector.broadcast %428 : vector<16x1xf32> to vector<16x32xf32>
    %437 = arith.subf %424, %436 : vector<16x32xf32>
    %cst_163 = arith.constant 9.99999974E-6 : f32
    %438 = vector.broadcast %cst_163 : f32 to vector<16x1xf32>
    %439 = arith.addf %435, %438 : vector<16x1xf32>
    %440 = math.rsqrt %439 : vector<16x1xf32>
    %441 = vector.broadcast %440 : vector<16x1xf32> to vector<16x32xf32>
    %442 = arith.mulf %437, %441 : vector<16x32xf32>
    %c2_164 = arith.constant 2 : index
    %c0_165 = arith.constant 0 : index
    %c0_166 = arith.constant 0 : index
    %443 = vector.load %arg7[%c2_164, %c0_165, %c0_166] : memref<3x32x128xf32, #tpu.memory_space<vmem>>, vector<1x32x128xf32>
    %444 = vector.shape_cast %443 : vector<1x32x128xf32> to vector<32x128xf32>
    %cst_167 = arith.constant dense<0.000000e+00> : vector<16x128xf32>
    %445 = tpu.matmul %442, %444, %cst_167 {dimension_numbers = #tpu.dot_dimension_numbers<[1], [0], [0], [1], [0, 0, 1, 1], [], []>} : vector<16x32xf32>, vector<32x128xf32>, vector<16x128xf32> -> vector<16x128xf32>
    %c2_168 = arith.constant 2 : index
    %c0_169 = arith.constant 0 : index
    %c0_170 = arith.constant 0 : index
    %446 = vector.load %arg8[%c2_168, %c0_169, %c0_170] : memref<3x1x128xf32, #tpu.memory_space<vmem>>, vector<1x1x128xf32>
    %447 = vector.shape_cast %446 : vector<1x1x128xf32> to vector<1x128xf32>
    %448 = vector.broadcast %447 : vector<1x128xf32> to vector<16x128xf32>
    %449 = arith.addf %445, %448 : vector<16x128xf32>
    %cst_171 = arith.constant 0.000000e+00 : f32
    %450 = vector.broadcast %cst_171 : f32 to vector<16x128xf32>
    %451 = arith.maximumf %449, %450 : vector<16x128xf32>
    %c2_172 = arith.constant 2 : index
    %c0_173 = arith.constant 0 : index
    %c0_174 = arith.constant 0 : index
    %452 = vector.load %arg9[%c2_172, %c0_173, %c0_174] : memref<3x128x32xf32, #tpu.memory_space<vmem>>, vector<1x128x32xf32>
    %453 = vector.shape_cast %452 : vector<1x128x32xf32> to vector<128x32xf32>
    %cst_175 = arith.constant dense<0.000000e+00> : vector<16x32xf32>
    %454 = tpu.matmul %451, %453, %cst_175 {dimension_numbers = #tpu.dot_dimension_numbers<[1], [0], [0], [1], [0, 0, 1, 1], [], []>} : vector<16x128xf32>, vector<128x32xf32>, vector<16x32xf32> -> vector<16x32xf32>
    %455 = arith.addf %424, %454 : vector<16x32xf32>
    %c2_176 = arith.constant 2 : index
    %c0_177 = arith.constant 0 : index
    %c0_178 = arith.constant 0 : index
    %456 = vector.load %arg10[%c2_176, %c0_177, %c0_178] : memref<3x1x32xf32, #tpu.memory_space<vmem>>, vector<1x1x32xf32>
    %457 = vector.shape_cast %456 : vector<1x1x32xf32> to vector<1x32xf32>
    %458 = vector.broadcast %457 : vector<1x32xf32> to vector<16x32xf32>
    %459 = arith.addf %455, %458 : vector<16x32xf32>
    %cst_179 = arith.constant dense<0.000000e+00> : vector<16xf32>
    %460 = vector.multi_reduction <add>, %459, %cst_179 [1] : vector<16x32xf32> to vector<16xf32>
    %461 = vector.shape_cast %460 : vector<16xf32> to vector<16x1xf32>
    %cst_180 = arith.constant 3.200000e+01 : f32
    %462 = vector.broadcast %cst_180 : f32 to vector<16x1xf32>
    %463 = arith.divf %461, %462 : vector<16x1xf32>
    %464 = vector.broadcast %463 : vector<16x1xf32> to vector<16x32xf32>
    %465 = arith.subf %459, %464 : vector<16x32xf32>
    %466 = arith.mulf %465, %465 : vector<16x32xf32>
    %cst_181 = arith.constant dense<0.000000e+00> : vector<16xf32>
    %467 = vector.multi_reduction <add>, %466, %cst_181 [1] : vector<16x32xf32> to vector<16xf32>
    %468 = vector.shape_cast %467 : vector<16xf32> to vector<16x1xf32>
    %cst_182 = arith.constant 3.200000e+01 : f32
    %469 = vector.broadcast %cst_182 : f32 to vector<16x1xf32>
    %470 = arith.divf %468, %469 : vector<16x1xf32>
    %471 = vector.broadcast %463 : vector<16x1xf32> to vector<16x32xf32>
    %472 = arith.subf %459, %471 : vector<16x32xf32>
    %cst_183 = arith.constant 9.99999974E-6 : f32
    %473 = vector.broadcast %cst_183 : f32 to vector<16x1xf32>
    %474 = arith.addf %470, %473 : vector<16x1xf32>
    %475 = math.rsqrt %474 : vector<16x1xf32>
    %476 = vector.broadcast %475 : vector<16x1xf32> to vector<16x32xf32>
    %477 = arith.mulf %472, %476 : vector<16x32xf32>
    %c0_184 = arith.constant 0 : index
    %c0_185 = arith.constant 0 : index
    %478 = vector.load %arg11[%c0_184, %c0_185] : memref<32x128xf32, #tpu.memory_space<vmem>>, vector<32x128xf32>
    %cst_186 = arith.constant dense<0.000000e+00> : vector<16x128xf32>
    %479 = tpu.matmul %477, %478, %cst_186 {dimension_numbers = #tpu.dot_dimension_numbers<[1], [0], [0], [1], [0, 0, 1, 1], [], []>} : vector<16x32xf32>, vector<32x128xf32>, vector<16x128xf32> -> vector<16x128xf32>
    %c0_187 = arith.constant 0 : index
    %c0_188 = arith.constant 0 : index
    %480 = vector.load %arg12[%c0_187, %c0_188] : memref<1x128xf32, #tpu.memory_space<vmem>>, vector<1x128xf32>
    %481 = vector.broadcast %480 : vector<1x128xf32> to vector<16x128xf32>
    %482 = arith.addf %479, %481 : vector<16x128xf32>
    %c0_189 = arith.constant 0 : index
    %c0_190 = arith.constant 0 : index
    %483 = vector.load %arg13[%c0_189, %c0_190] : memref<16x128xf32, #tpu.memory_space<vmem>>, vector<16x128xf32>
    tpu.vector_store %arg13[%c0_189, %c0_190], %482 {strides = array<i32>} : memref<16x128xf32, #tpu.memory_space<vmem>>, vector<16x128xf32>,
    return
  }
}

</mosaic_0001>

<llo_original>
// kernel: _ngram_forward.1
$region0: #{_ngram_forward.1}
  #allocation0 [shape = 'u32[]', space=smem, size = 0x4, offset = 0x4, fixed_abs, tag = 'smem constant byte address 0x4 - core index']
  #allocation1 [shape = 'u32[72,128]{1,0:T(1,128)}', space=vmem, size = 0x9000, scoped, tag = 'internal scratch']
  %s0 = inlined_call_operand.vmem [shape: s32[16,1], index: 0, kind: input, shape index: {}]
  %s1 = inlined_call_operand.vmem [shape: f32[128,32], index: 1, kind: input, shape index: {}]
  %s2 = inlined_call_operand.vmem [shape: f32[16,32], index: 2, kind: input, shape index: {}]
  %s3 = inlined_call_operand.vmem [shape: f32[3,32,96], index: 3, kind: input, shape index: {}]
  %s4 = inlined_call_operand.vmem [shape: f32[3,1,96], index: 4, kind: input, shape index: {}]
  %s5 = inlined_call_operand.vmem [shape: f32[3,32,32], index: 5, kind: input, shape index: {}]
  %s6 = inlined_call_operand.vmem [shape: f32[3,1,32], index: 6, kind: input, shape index: {}]
  %s7 = inlined_call_operand.vmem [shape: f32[3,32,128], index: 7, kind: input, shape index: {}]
  %s8 = inlined_call_operand.vmem [shape: f32[3,1,128], index: 8, kind: input, shape index: {}]
  %s9 = inlined_call_operand.vmem [shape: f32[3,128,32], index: 9, kind: input, shape index: {}]
  %s10 = inlined_call_operand.vmem [shape: f32[3,1,32], index: 10, kind: input, shape index: {}]
  %s11 = inlined_call_operand.vmem [shape: f32[32,128], index: 11, kind: input, shape index: {}]
  %s12 = inlined_call_operand.vmem [shape: f32[1,128], index: 12, kind: input, shape index: {}]
  %s13 = inlined_call_operand.vmem [shape: f32[16,128], index: 13, kind: output, shape index: {}]
  %s14 = sld [smem:[#allocation0]]
  $region62: #{_ngram_forward.1} parent=0
    _
  %s16 = ssub.s32 1, %s14
  %s17 = scalar_select 0, %s16, %s14
  // Predicated region
  $region2: #{_ngram_forward.1} parent=0 // pred_check
    _
  $region3: #{_ngram_forward.1} parent=0 // pred_check_branch
    %19 = sbr.rel (0) target = $region5
  $region4: #{_ngram_forward.1} parent=0 // pred_region
    _
  $region5: #{_ngram_forward.1} parent=0 // pred_fallthru
    _
  // Predicated region
  $region6: #{_ngram_forward.1} parent=0 // pred_check
    _
  $region7: #{_ngram_forward.1} parent=0 // pred_check_branch
    %21 = sbr.rel (0) target = $region9
  $region8: #{_ngram_forward.1} parent=0 // pred_region
    _
  $region9: #{_ngram_forward.1} parent=0 // pred_fallthru
    _
  // Predicated region
  $region10: #{_ngram_forward.1} parent=0 // pred_check
    _
  $region11: #{_ngram_forward.1} parent=0 // pred_check_branch
    %23 = sbr.rel (0) target = $region13
  $region12: #{_ngram_forward.1} parent=0 // pred_region
    _
  $region13: #{_ngram_forward.1} parent=0 // pred_fallthru
    _
  // Predicated region
  $region14: #{_ngram_forward.1} parent=0 // pred_check
    _
  $region15: #{_ngram_forward.1} parent=0 // pred_check_branch
    %25 = sbr.rel (0) target = $region17
  $region16: #{_ngram_forward.1} parent=0 // pred_region
    _
  $region17: #{_ngram_forward.1} parent=0 // pred_fallthru
    _
  // Predicated region
  $region18: #{_ngram_forward.1} parent=0 // pred_check
    _
  $region19: #{_ngram_forward.1} parent=0 // pred_check_branch
    %27 = sbr.rel (0) target = $region21
  $region20: #{_ngram_forward.1} parent=0 // pred_region
    _
  $region21: #{_ngram_forward.1} parent=0 // pred_fallthru
    _
  // Predicated region
  $region22: #{_ngram_forward.1} parent=0 // pred_check
    _
  $region23: #{_ngram_forward.1} parent=0 // pred_check_branch
    %29 = sbr.rel (0) target = $region25
  $region24: #{_ngram_forward.1} parent=0 // pred_region
    _
  $region25: #{_ngram_forward.1} parent=0 // pred_fallthru
    _
  // Predicated region
  $region26: #{_ngram_forward.1} parent=0 // pred_check
    _
  $region27: #{_ngram_forward.1} parent=0 // pred_check_branch
    %31 = sbr.rel (0) target = $region29
  $region28: #{_ngram_forward.1} parent=0 // pred_region
    _
  $region29: #{_ngram_forward.1} parent=0 // pred_fallthru
    _
  // Predicated region
  $region30: #{_ngram_forward.1} parent=0 // pred_check
    _
  $region31: #{_ngram_forward.1} parent=0 // pred_check_branch
    %33 = sbr.rel (0) target = $region33
  $region32: #{_ngram_forward.1} parent=0 // pred_region
    _
  $region33: #{_ngram_forward.1} parent=0 // pred_fallthru
    _
  // Predicated region
  $region34: #{_ngram_forward.1} parent=0 // pred_check
    _
  $region35: #{_ngram_forward.1} parent=0 // pred_check_branch
    %35 = sbr.rel (0) target = $region37
  $region36: #{_ngram_forward.1} parent=0 // pred_region
    _
  $region37: #{_ngram_forward.1} parent=0 // pred_fallthru
    _
  // Predicated region
  $region38: #{_ngram_forward.1} parent=0 // pred_check
    _
  $region39: #{_ngram_forward.1} parent=0 // pred_check_branch
    %37 = sbr.rel (0) target = $region41
  $region40: #{_ngram_forward.1} parent=0 // pred_region
    _
  $region41: #{_ngram_forward.1} parent=0 // pred_fallthru
    _
  // Predicated region
  $region42: #{_ngram_forward.1} parent=0 // pred_check
    _
  $region43: #{_ngram_forward.1} parent=0 // pred_check_branch
    %39 = sbr.rel (0) target = $region45
  $region44: #{_ngram_forward.1} parent=0 // pred_region
    _
  $region45: #{_ngram_forward.1} parent=0 // pred_fallthru
    _
  // Predicated region
  $region46: #{_ngram_forward.1} parent=0 // pred_check
    _
  $region47: #{_ngram_forward.1} parent=0 // pred_check_branch
    %41 = sbr.rel (0) target = $region49
  $region48: #{_ngram_forward.1} parent=0 // pred_region
    _
  $region49: #{_ngram_forward.1} parent=0 // pred_fallthru
    _
  // Predicated region
  $region50: #{_ngram_forward.1} parent=0 // pred_check
    _
  $region51: #{_ngram_forward.1} parent=0 // pred_check_branch
    %43 = sbr.rel (0) target = $region53
  $region52: #{_ngram_forward.1} parent=0 // pred_region
    _
  $region53: #{_ngram_forward.1} parent=0 // pred_fallthru
    _
  %v44 = vlaneseq
  %v45 = vand.u32 %v44, 127
  %v46 = vld [vmem:[%s0] sm:$0xff]
  %v47 = vld [vmem:[%s0 + $0x8] sm:$0xff]
  %48 = vset.pattern.permute.xlu0 0
  %49 = vperm.xlu0 %48, %v46
  %v50 = vpop.permute.xlu0 %49
  %51 = vset.pattern.permute.xlu0 0
  %52 = vperm.xlu0 %51, %v47
  %v53 = vpop.permute.xlu0 %52
  %vm54 = vcmp.eq.s32.totalorder %v45, %v50
  %vm55 = vcmp.eq.s32.totalorder %v45, %v53
  %v56 = vsel %vm54, 1, 0
  %v57 = vsel %vm55, 1, 0
  %v58 = vcvt.s32.f32 %v56
  %v59 = vcvt.s32.f32 %v57
  %v60 = vld [vmem:[%s1] sm:$0xff]
  %v61 = vld [vmem:[%s1 + $0x8] sm:$0xff]
  %v62 = vld [vmem:[%s1 + $0x10] sm:$0xff]
  %v63 = vld [vmem:[%s1 + $0x18] sm:$0xff]
  %v64 = vld [vmem:[%s1 + $0x20] sm:$0xff]
  %v65 = vld [vmem:[%s1 + $0x28] sm:$0xff]
  %v66 = vld [vmem:[%s1 + $0x30] sm:$0xff]
  %v67 = vld [vmem:[%s1 + $0x38] sm:$0xff]
  %v68 = vld [vmem:[%s1 + $0x40] sm:$0xff]
  %v69 = vld [vmem:[%s1 + $0x48] sm:$0xff]
  %v70 = vld [vmem:[%s1 + $0x50] sm:$0xff]
  %v71 = vld [vmem:[%s1 + $0x58] sm:$0xff]
  %v72 = vld [vmem:[%s1 + $0x60] sm:$0xff]
  %v73 = vld [vmem:[%s1 + $0x68] sm:$0xff]
  %v74 = vld [vmem:[%s1 + $0x70] sm:$0xff]
  %v75 = vld [vmem:[%s1 + $0x78] sm:$0xff]
  %v76 = vld [vmem:[%s2] sm:$0xff]
  %v77 = vld [vmem:[%s2 + $0x8] sm:$0xff]
  %78 = vmatpush.msra.mxu0 %v75
  %79 = vmatpush.msra.mxu0 %v74
  %80 = vmatpush.msra.mxu0 %v73
  %81 = vmatpush.msra.mxu0 %v72
  %82 = vmatpush.msra.mxu0 %v71
  %83 = vmatpush.msra.mxu0 %v70
  %84 = vmatpush.msra.mxu0 %v69
  %85 = vmatpush.msra.mxu0 %v68
  %86 = vmatpush.msra.mxu0 %v67
  %87 = vmatpush.msra.mxu0 %v66
  %88 = vmatpush.msra.mxu0 %v65
  %89 = vmatpush.msra.mxu0 %v64
  %90 = vmatpush.msra.mxu0 %v63
  %91 = vmatpush.msra.mxu0 %v62
  %92 = vmatpush.msra.mxu0 %v61
  %93 = vmatpush.msra.mxu0 %v60
  %94 = vmatmul.f32.gmra.mxu0 %v58
  %v95 = vpop.f32.mrf.mxu0
  %v96 = vadd.f32 %v76, %v95
  %97 = vmatmul.f32.gmra.mxu0 %v59
  %v98 = vpop.f32.mrf.mxu0
  %v99 = vadd.f32 %v77, %v98
  %100 = vdwg.mxu0
  %v101 = vlaneseq
  %v102 = vshrl.u32 %v101, 7
  %vm103 = vcmp.le.s32.totalorder %v45, %v102
  %v104 = vsel %vm103, 0.0, -1e+30
  %vm105 = vcmask 261120
  %v106 = vsel %vm105, %v96, 0.0
  %107 = vadd.xlane.f32.xlu0 %v106
  %v108 = vpop.xlane.xlu0 %107
  %v109 = vsel %vm105, %v99, 0.0
  %110 = vadd.xlane.f32.xlu0 %v109
  %v111 = vpop.xlane.xlu0 %110
  %v112 = vrcp.pop 32.0
  %v113 = vmul.f32 32.0, %v112
  %v114 = vsub.f32 1.0, %v113
  %v115 = vmul.f32 %v112, %v114
  %v116 = vadd.f32 %v112, %v115
  %vm117 = vweird.f32 %v112
  %v118 = vsel %vm117, %v112, %v116
  %v119 = vmul.f32 %v108, %v118
  %v120 = vmul.f32 %v111, %v118
  %v121 = vsub.f32 %v96, %v119
  %v122 = vsub.f32 %v99, %v120
  %v123 = vmul.f32 %v121, %v121
  %v124 = vmul.f32 %v122, %v122
  %v125 = vsel %vm105, %v123, 0.0
  %126 = vadd.xlane.f32.xlu0 %v125
  %v127 = vpop.xlane.xlu0 %126
  %v128 = vsel %vm105, %v124, 0.0
  %129 = vadd.xlane.f32.xlu0 %v128
  %v130 = vpop.xlane.xlu0 %129
  %v131 = vmul.f32 %v127, %v118
  %v132 = vmul.f32 %v130, %v118
  %v133 = vadd.f32 %v131, 1e-05
  %v134 = vadd.f32 %v132, 1e-05
  %v135 = vrsqrt.pop %v133
  %v136 = vmul.f32 %v135, %v133
  %v137 = vmul.f32 %v136, %v135
  %v138 = vmul.f32 0.5, %v137
  %v139 = vsub.f32 1.5, %v138
  %v140 = vmul.f32 %v135, %v139
  %vm141 = vweird.f32 %v133
  %vm142 = vweird.f32 %v135
  %vm143 = vmor %vm141, %vm142
  %v144 = vsel %vm143, %v135, %v140
  %v145 = vrsqrt.pop %v134
  %v146 = vmul.f32 %v145, %v134
  %v147 = vmul.f32 %v146, %v145
  %v148 = vmul.f32 0.5, %v147
  %v149 = vsub.f32 1.5, %v148
  %v150 = vmul.f32 %v145, %v149
  %vm151 = vweird.f32 %v134
  %vm152 = vweird.f32 %v145
  %vm153 = vmor %vm151, %vm152
  %v154 = vsel %vm153, %v145, %v150
  %v155 = vmul.f32 %v121, %v144
  %v156 = vmul.f32 %v122, %v154
  %v157 = vld [vmem:[%s3] sm:$0xff]
  %v158 = vld [vmem:[%s3 + $0x8] sm:$0xff]
  %v159 = vld [vmem:[%s3 + $0x10] sm:$0xff]
  %v160 = vld [vmem:[%s3 + $0x18] sm:$0xff]
  %v161 = vld [vmem:[%s4] sm:$0x1]
  %v163 = vperm.slane %v161, 0
  %v166 = vsel %vm105, %v155, 0
  %v169 = vsel %vm105, %v156, 0
  %171 = vmatpush.msra.mxu0 0.0
  %172 = vmatpush.msra.mxu0 0.0
  %173 = vmatpush.msra.mxu0 0.0
  %174 = vmatpush.msra.mxu0 0.0
  %175 = vmatpush.msra.mxu0 0.0
  %176 = vmatpush.msra.mxu0 0.0
  %177 = vmatpush.msra.mxu0 0.0
  %178 = vmatpush.msra.mxu0 0.0
  %179 = vmatpush.msra.mxu0 0.0
  %180 = vmatpush.msra.mxu0 0.0
  %181 = vmatpush.msra.mxu0 0.0
  %182 = vmatpush.msra.mxu0 0.0
  %183 = vmatpush.msra.mxu0 %v160
  %184 = vmatpush.msra.mxu0 %v159
  %185 = vmatpush.msra.mxu0 %v158
  %186 = vmatpush.msra.mxu0 %v157
  %187 = vmatmul.f32.gmra.mxu0 %v166
  %v188 = vpop.f32.mrf.mxu0
  %v189 = vadd.f32 %v163, %v188
  %190 = vmatmul.f32.gmra.mxu0 %v169
  %v191 = vpop.f32.mrf.mxu0
  %v192 = vadd.f32 %v163, %v191
  %193 = vdwg.mxu0
  %v194 = vld [vmem:[%s5] sm:$0xff]
  %v195 = vld [vmem:[%s5 + $0x8] sm:$0xff]
  %v196 = vld [vmem:[%s5 + $0x10] sm:$0xff]
  %v197 = vld [vmem:[%s5 + $0x18] sm:$0xff]
  %199 = vrot.lane.b32.xlu0 %v189, 96
  %v200 = vpop.permute.xlu0 %199
  %vm201 = vcmask 64512
  %v202 = vsel %vm201, %v189, 0
  %v204 = vsel %vm201, %v200, 0
  %206 = vmatpush.xpose.msra.mxu0 0.0
  %207 = vmatpush.xpose.msra.mxu0 0.0
  %208 = vmatpush.xpose.msra.mxu0 0.0
  %209 = vmatpush.xpose.msra.mxu0 0.0
  %210 = vmatpush.xpose.msra.mxu0 0.0
  %211 = vmatpush.xpose.msra.mxu0 0.0
  %212 = vmatpush.xpose.msra.mxu0 0.0
  %213 = vmatpush.xpose.msra.mxu0 0.0
  %214 = vmatpush.xpose.msra.mxu0 0.0
  %215 = vmatpush.xpose.msra.mxu0 0.0
  %216 = vmatpush.xpose.msra.mxu0 0.0
  %217 = vmatpush.xpose.msra.mxu0 0.0
  %218 = vmatpush.xpose.msra.mxu0 0.0
  %219 = vmatpush.xpose.msra.mxu0 0.0
  %220 = vmatpush.xpose.msra.mxu0 0.0
  %221 = vmatpush.xpose.msra.mxu0 %v204
  %222 = vmatmul.f32.gmra.mxu0 %v202
  %v223 = vpop.f32.mrf.mxu0
  %v224 = vadd.f32 %v104, %v223
  %225 = vdwg.mxu0
  %227 = vrot.lane.b32.xlu0 %v192, 96
  %v228 = vpop.permute.xlu0 %227
  %v229 = vsel %vm201, %v192, 0
  %v231 = vsel %vm201, %v228, 0
  %233 = vmatpush.xpose.msra.mxu0 0.0
  %234 = vmatpush.xpose.msra.mxu0 0.0
  %235 = vmatpush.xpose.msra.mxu0 0.0
  %236 = vmatpush.xpose.msra.mxu0 0.0
  %237 = vmatpush.xpose.msra.mxu0 0.0
  %238 = vmatpush.xpose.msra.mxu0 0.0
  %239 = vmatpush.xpose.msra.mxu0 0.0
  %240 = vmatpush.xpose.msra.mxu0 0.0
  %241 = vmatpush.xpose.msra.mxu0 0.0
  %242 = vmatpush.xpose.msra.mxu0 0.0
  %243 = vmatpush.xpose.msra.mxu0 0.0
  %244 = vmatpush.xpose.msra.mxu0 0.0
  %245 = vmatpush.xpose.msra.mxu0 0.0
  %246 = vmatpush.xpose.msra.mxu0 0.0
  %247 = vmatpush.xpose.msra.mxu0 0.0
  %248 = vmatpush.xpose.msra.mxu0 %v231
  %249 = vmatmul.f32.gmra.mxu0 %v229
  %v250 = vpop.f32.mrf.mxu0
  %v251 = vadd.f32 %v104, %v250
  %252 = vdwg.mxu0
  %v253 = vsel %vm201, %v224, -inf
  %254 = vmax.xlane.f32.xlu0 %v253
  %v255 = vpop.xlane.xlu0 %254
  %v256 = vsel %vm201, %v251, -inf
  %257 = vmax.xlane.f32.xlu0 %v256
  %v258 = vpop.xlane.xlu0 %257
  %v259 = vsub.f32 %v224, %v255
  %v260 = vsub.f32 %v251, %v258
  %v261 = vmul.f32 %v259, 1.442695
  %v262 = vpow.pop %v261
  %v263 = vmul.f32 %v260, 1.442695
  %v264 = vpow.pop %v263
  %v265 = vsel %vm201, %v262, 0.0
  %266 = vadd.xlane.f32.xlu0 %v265
  %v267 = vpop.xlane.xlu0 %266
  %v268 = vsel %vm201, %v264, 0.0
  %269 = vadd.xlane.f32.xlu0 %v268
  %v270 = vpop.xlane.xlu0 %269
  %v271 = vrcp.pop %v267
  %v272 = vrcp.pop %v270
  %v273 = vmul.f32 %v262, %v271
  %v274 = vmul.f32 %v264, %v272
  %275 = vrot.lane.b32.xlu0 %v189, 64
  %v276 = vpop.permute.xlu0 %275
  %v279 = vsel %vm201, %v273, 0
  %281 = vmatpush.msra.mxu0 0.0
  %282 = vmatpush.msra.mxu0 0.0
  %283 = vmatpush.msra.mxu0 0.0
  %284 = vmatpush.msra.mxu0 0.0
  %285 = vmatpush.msra.mxu0 0.0
  %286 = vmatpush.msra.mxu0 0.0
  %287 = vmatpush.msra.mxu0 0.0
  %288 = vmatpush.msra.mxu0 0.0
  %289 = vmatpush.msra.mxu0 0.0
  %290 = vmatpush.msra.mxu0 0.0
  %291 = vmatpush.msra.mxu0 0.0
  %292 = vmatpush.msra.mxu0 0.0
  %293 = vmatpush.msra.mxu0 0.0
  %294 = vmatpush.msra.mxu0 0.0
  %295 = vmatpush.msra.mxu0 0.0
  %296 = vmatpush.msra.mxu0 %v276
  %297 = vmatmul.f32.gmra.mxu0 %v279
  %v298 = vpop.f32.mrf.mxu0
  %v299 = vadd.f32 0.0, %v298
  %300 = vdwg.mxu0
  %301 = vrot.lane.b32.xlu0 %v192, 64
  %v302 = vpop.permute.xlu0 %301
  %v305 = vsel %vm201, %v274, 0
  %307 = vmatpush.msra.mxu0 0.0
  %308 = vmatpush.msra.mxu0 0.0
  %309 = vmatpush.msra.mxu0 0.0
  %310 = vmatpush.msra.mxu0 0.0
  %311 = vmatpush.msra.mxu0 0.0
  %312 = vmatpush.msra.mxu0 0.0
  %313 = vmatpush.msra.mxu0 0.0
  %314 = vmatpush.msra.mxu0 0.0
  %315 = vmatpush.msra.mxu0 0.0
  %316 = vmatpush.msra.mxu0 0.0
  %317 = vmatpush.msra.mxu0 0.0
  %318 = vmatpush.msra.mxu0 0.0
  %319 = vmatpush.msra.mxu0 0.0
  %320 = vmatpush.msra.mxu0 0.0
  %321 = vmatpush.msra.mxu0 0.0
  %322 = vmatpush.msra.mxu0 %v302
  %323 = vmatmul.f32.gmra.mxu0 %v305
  %v324 = vpop.f32.mrf.mxu0
  %v325 = vadd.f32 0.0, %v324
  %326 = vdwg.mxu0
  %327 = vrot.lane.b32.xlu0 %v189, 120
  %v328 = vpop.permute.xlu0 %327
  %329 = vrot.lane.b32.xlu0 %v189, 88
  %v330 = vpop.permute.xlu0 %329
  %v331 = vsel %vm201, %v328, 0
  %v333 = vsel %vm201, %v330, 0
  %335 = vmatpush.xpose.msra.mxu0 0.0
  %336 = vmatpush.xpose.msra.mxu0 0.0
  %337 = vmatpush.xpose.msra.mxu0 0.0
  %338 = vmatpush.xpose.msra.mxu0 0.0
  %339 = vmatpush.xpose.msra.mxu0 0.0
  %340 = vmatpush.xpose.msra.mxu0 0.0
  %341 = vmatpush.xpose.msra.mxu0 0.0
  %342 = vmatpush.xpose.msra.mxu0 0.0
  %343 = vmatpush.xpose.msra.mxu0 0.0
  %344 = vmatpush.xpose.msra.mxu0 0.0
  %345 = vmatpush.xpose.msra.mxu0 0.0
  %346 = vmatpush.xpose.msra.mxu0 0.0
  %347 = vmatpush.xpose.msra.mxu0 0.0
  %348 = vmatpush.xpose.msra.mxu0 0.0
  %349 = vmatpush.xpose.msra.mxu0 0.0
  %350 = vmatpush.xpose.msra.mxu0 %v333
  %351 = vmatmul.f32.gmra.mxu0 %v331
  %v352 = vpop.f32.mrf.mxu0
  %v353 = vadd.f32 %v104, %v352
  %354 = vdwg.mxu0
  %355 = vrot.lane.b32.xlu0 %v192, 120
  %v356 = vpop.permute.xlu0 %355
  %357 = vrot.lane.b32.xlu0 %v192, 88
  %v358 = vpop.permute.xlu0 %357
  %v359 = vsel %vm201, %v356, 0
  %v361 = vsel %vm201, %v358, 0
  %363 = vmatpush.xpose.msra.mxu0 0.0
  %364 = vmatpush.xpose.msra.mxu0 0.0
  %365 = vmatpush.xpose.msra.mxu0 0.0
  %366 = vmatpush.xpose.msra.mxu0 0.0
  %367 = vmatpush.xpose.msra.mxu0 0.0
  %368 = vmatpush.xpose.msra.mxu0 0.0
  %369 = vmatpush.xpose.msra.mxu0 0.0
  %370 = vmatpush.xpose.msra.mxu0 0.0
  %371 = vmatpush.xpose.msra.mxu0 0.0
  %372 = vmatpush.xpose.msra.mxu0 0.0
  %373 = vmatpush.xpose.msra.mxu0 0.0
  %374 = vmatpush.xpose.msra.mxu0 0.0
  %375 = vmatpush.xpose.msra.mxu0 0.0
  %376 = vmatpush.xpose.msra.mxu0 0.0
  %377 = vmatpush.xpose.msra.mxu0 0.0
  %378 = vmatpush.xpose.msra.mxu0 %v361
  %379 = vmatmul.f32.gmra.mxu0 %v359
  %v380 = vpop.f32.mrf.mxu0
  %v381 = vadd.f32 %v104, %v380
  %382 = vdwg.mxu0
  %v383 = vsel %vm201, %v353, -inf
  %384 = vmax.xlane.f32.xlu0 %v383
  %v385 = vpop.xlane.xlu0 %384
  %v386 = vsel %vm201, %v381, -inf
  %387 = vmax.xlane.f32.xlu0 %v386
  %v388 = vpop.xlane.xlu0 %387
  %v389 = vsub.f32 %v353, %v385
  %v390 = vsub.f32 %v381, %v388
  %v391 = vmul.f32 %v389, 1.442695
  %v392 = vpow.pop %v391
  %v393 = vmul.f32 %v390, 1.442695
  %v394 = vpow.pop %v393
  %v395 = vsel %vm201, %v392, 0.0
  %396 = vadd.xlane.f32.xlu0 %v395
  %v397 = vpop.xlane.xlu0 %396
  %v398 = vsel %vm201, %v394, 0.0
  %399 = vadd.xlane.f32.xlu0 %v398
  %v400 = vpop.xlane.xlu0 %399
  %v401 = vrcp.pop %v397
  %v402 = vrcp.pop %v400
  %v403 = vmul.f32 %v392, %v401
  %v404 = vmul.f32 %v394, %v402
  %405 = vrot.lane.b32.xlu0 %v189, 56
  %v406 = vpop.permute.xlu0 %405
  %v409 = vsel %vm201, %v403, 0
  %411 = vmatpush.msra.mxu0 0.0
  %412 = vmatpush.msra.mxu0 0.0
  %413 = vmatpush.msra.mxu0 0.0
  %414 = vmatpush.msra.mxu0 0.0
  %415 = vmatpush.msra.mxu0 0.0
  %416 = vmatpush.msra.mxu0 0.0
  %417 = vmatpush.msra.mxu0 0.0
  %418 = vmatpush.msra.mxu0 0.0
  %419 = vmatpush.msra.mxu0 0.0
  %420 = vmatpush.msra.mxu0 0.0
  %421 = vmatpush.msra.mxu0 0.0
  %422 = vmatpush.msra.mxu0 0.0
  %423 = vmatpush.msra.mxu0 0.0
  %424 = vmatpush.msra.mxu0 0.0
  %425 = vmatpush.msra.mxu0 0.0
  %426 = vmatpush.msra.mxu0 %v406
  %427 = vmatmul.f32.gmra.mxu0 %v409
  %v428 = vpop.f32.mrf.mxu0
  %v429 = vadd.f32 0.0, %v428
  %430 = vdwg.mxu0
  %431 = vrot.lane.b32.xlu0 %v192, 56
  %v432 = vpop.permute.xlu0 %431
  %v435 = vsel %vm201, %v404, 0
  %437 = vmatpush.msra.mxu0 0.0
  %438 = vmatpush.msra.mxu0 0.0
  %439 = vmatpush.msra.mxu0 0.0
  %440 = vmatpush.msra.mxu0 0.0
  %441 = vmatpush.msra.mxu0 0.0
  %442 = vmatpush.msra.mxu0 0.0
  %443 = vmatpush.msra.mxu0 0.0
  %444 = vmatpush.msra.mxu0 0.0
  %445 = vmatpush.msra.mxu0 0.0
  %446 = vmatpush.msra.mxu0 0.0
  %447 = vmatpush.msra.mxu0 0.0
  %448 = vmatpush.msra.mxu0 0.0
  %449 = vmatpush.msra.mxu0 0.0
  %450 = vmatpush.msra.mxu0 0.0
  %451 = vmatpush.msra.mxu0 0.0
  %452 = vmatpush.msra.mxu0 %v432
  %453 = vmatmul.f32.gmra.mxu0 %v435
  %v454 = vpop.f32.mrf.mxu0
  %v455 = vadd.f32 0.0, %v454
  %456 = vdwg.mxu0
  %v458 = vsel %vm201, %v429, 0
  %v461 = vsel %vm201, %v455, 0
  %463 = vmatpush.msra.mxu0 0.0
  %464 = vmatpush.msra.mxu0 0.0
  %465 = vmatpush.msra.mxu0 0.0
  %466 = vmatpush.msra.mxu0 0.0
  %467 = vmatpush.msra.mxu0 0.0
  %468 = vmatpush.msra.mxu0 0.0
  %469 = vmatpush.msra.mxu0 0.0
  %470 = vmatpush.msra.mxu0 0.0
  %471 = vmatpush.msra.mxu0 0.0
  %472 = vmatpush.msra.mxu0 0.0
  %473 = vmatpush.msra.mxu0 0.0
  %474 = vmatpush.msra.mxu0 0.0
  %475 = vmatpush.msra.mxu0 0.0
  %476 = vmatpush.msra.mxu0 0.0
  %477 = vmatpush.msra.mxu0 0.0
  %478 = vmatpush.msra.mxu0 %v195
  %479 = vmatmul.f32.gmra.mxu0 %v458
  %v480 = vpop.f32.mrf.mxu0
  %v481 = vadd.f32 0.0, %v480
  %482 = vmatmul.f32.gmra.mxu0 %v461
  %v483 = vpop.f32.mrf.mxu0
  %v484 = vadd.f32 0.0, %v483
  %485 = vdwg.mxu0
  %v487 = vsel %vm201, %v299, 0
  %v490 = vsel %vm201, %v325, 0
  %492 = vmatpush.msra.mxu0 0.0
  %493 = vmatpush.msra.mxu0 0.0
  %494 = vmatpush.msra.mxu0 0.0
  %495 = vmatpush.msra.mxu0 0.0
  %496 = vmatpush.msra.mxu0 0.0
  %497 = vmatpush.msra.mxu0 0.0
  %498 = vmatpush.msra.mxu0 0.0
  %499 = vmatpush.msra.mxu0 0.0
  %500 = vmatpush.msra.mxu0 0.0
  %501 = vmatpush.msra.mxu0 0.0
  %502 = vmatpush.msra.mxu0 0.0
  %503 = vmatpush.msra.mxu0 0.0
  %504 = vmatpush.msra.mxu0 0.0
  %505 = vmatpush.msra.mxu0 0.0
  %506 = vmatpush.msra.mxu0 0.0
  %507 = vmatpush.msra.mxu0 %v194
  %508 = vmatmul.f32.gmra.mxu0 %v487
  %v509 = vpop.f32.mrf.mxu0
  %v510 = vadd.f32 %v481, %v509
  %511 = vmatmul.f32.gmra.mxu0 %v490
  %v512 = vpop.f32.mrf.mxu0
  %v513 = vadd.f32 %v484, %v512
  %514 = vdwg.mxu0
  %515 = vrot.lane.b32.xlu0 %v189, 112
  %v516 = vpop.permute.xlu0 %515
  %517 = vrot.lane.b32.xlu0 %v189, 80
  %v518 = vpop.permute.xlu0 %517
  %v519 = vsel %vm201, %v516, 0
  %v521 = vsel %vm201, %v518, 0
  %523 = vmatpush.xpose.msra.mxu0 0.0
  %524 = vmatpush.xpose.msra.mxu0 0.0
  %525 = vmatpush.xpose.msra.mxu0 0.0
  %526 = vmatpush.xpose.msra.mxu0 0.0
  %527 = vmatpush.xpose.msra.mxu0 0.0
  %528 = vmatpush.xpose.msra.mxu0 0.0
  %529 = vmatpush.xpose.msra.mxu0 0.0
  %530 = vmatpush.xpose.msra.mxu0 0.0
  %531 = vmatpush.xpose.msra.mxu0 0.0
  %532 = vmatpush.xpose.msra.mxu0 0.0
  %533 = vmatpush.xpose.msra.mxu0 0.0
  %534 = vmatpush.xpose.msra.mxu0 0.0
  %535 = vmatpush.xpose.msra.mxu0 0.0
  %536 = vmatpush.xpose.msra.mxu0 0.0
  %537 = vmatpush.xpose.msra.mxu0 0.0
  %538 = vmatpush.xpose.msra.mxu0 %v521
  %539 = vmatmul.f32.gmra.mxu0 %v519
  %v540 = vpop.f32.mrf.mxu0
  %v541 = vadd.f32 %v104, %v540
  %542 = vdwg.mxu0
  %543 = vrot.lane.b32.xlu0 %v192, 112
  %v544 = vpop.permute.xlu0 %543
  %545 = vrot.lane.b32.xlu0 %v192, 80
  %v546 = vpop.permute.xlu0 %545
  %v547 = vsel %vm201, %v544, 0
  %v549 = vsel %vm201, %v546, 0
  %551 = vmatpush.xpose.msra.mxu0 0.0
  %552 = vmatpush.xpose.msra.mxu0 0.0
  %553 = vmatpush.xpose.msra.mxu0 0.0
  %554 = vmatpush.xpose.msra.mxu0 0.0
  %555 = vmatpush.xpose.msra.mxu0 0.0
  %556 = vmatpush.xpose.msra.mxu0 0.0
  %557 = vmatpush.xpose.msra.mxu0 0.0
  %558 = vmatpush.xpose.msra.mxu0 0.0
  %559 = vmatpush.xpose.msra.mxu0 0.0
  %560 = vmatpush.xpose.msra.mxu0 0.0
  %561 = vmatpush.xpose.msra.mxu0 0.0
  %562 = vmatpush.xpose.msra.mxu0 0.0
  %563 = vmatpush.xpose.msra.mxu0 0.0
  %564 = vmatpush.xpose.msra.mxu0 0.0
  %565 = vmatpush.xpose.msra.mxu0 0.0
  %566 = vmatpush.xpose.msra.mxu0 %v549
  %567 = vmatmul.f32.gmra.mxu0 %v547
  %v568 = vpop.f32.mrf.mxu0
  %v569 = vadd.f32 %v104, %v568
  %570 = vdwg.mxu0
  %v571 = vsel %vm201, %v541, -inf
  %572 = vmax.xlane.f32.xlu0 %v571
  %v573 = vpop.xlane.xlu0 %572
  %v574 = vsel %vm201, %v569, -inf
  %575 = vmax.xlane.f32.xlu0 %v574
  %v576 = vpop.xlane.xlu0 %575
  %v577 = vsub.f32 %v541, %v573
  %v578 = vsub.f32 %v569, %v576
  %v579 = vmul.f32 %v577, 1.442695
  %v580 = vpow.pop %v579
  %v581 = vmul.f32 %v578, 1.442695
  %v582 = vpow.pop %v581
  %v583 = vsel %vm201, %v580, 0.0
  %584 = vadd.xlane.f32.xlu0 %v583
  %v585 = vpop.xlane.xlu0 %584
  %v586 = vsel %vm201, %v582, 0.0
  %587 = vadd.xlane.f32.xlu0 %v586
  %v588 = vpop.xlane.xlu0 %587
  %v589 = vrcp.pop %v585
  %v590 = vrcp.pop %v588
  %v591 = vmul.f32 %v580, %v589
  %v592 = vmul.f32 %v582, %v590
  %593 = vrot.lane.b32.xlu0 %v189, 48
  %v594 = vpop.permute.xlu0 %593
  %v597 = vsel %vm201, %v591, 0
  %599 = vmatpush.msra.mxu0 0.0
  %600 = vmatpush.msra.mxu0 0.0
  %601 = vmatpush.msra.mxu0 0.0
  %602 = vmatpush.msra.mxu0 0.0
  %603 = vmatpush.msra.mxu0 0.0
  %604 = vmatpush.msra.mxu0 0.0
  %605 = vmatpush.msra.mxu0 0.0
  %606 = vmatpush.msra.mxu0 0.0
  %607 = vmatpush.msra.mxu0 0.0
  %608 = vmatpush.msra.mxu0 0.0
  %609 = vmatpush.msra.mxu0 0.0
  %610 = vmatpush.msra.mxu0 0.0
  %611 = vmatpush.msra.mxu0 0.0
  %612 = vmatpush.msra.mxu0 0.0
  %613 = vmatpush.msra.mxu0 0.0
  %614 = vmatpush.msra.mxu0 %v594
  %615 = vmatmul.f32.gmra.mxu0 %v597
  %v616 = vpop.f32.mrf.mxu0
  %v617 = vadd.f32 0.0, %v616
  %618 = vdwg.mxu0
  %619 = vrot.lane.b32.xlu0 %v192, 48
  %v620 = vpop.permute.xlu0 %619
  %v623 = vsel %vm201, %v592, 0
  %625 = vmatpush.msra.mxu0 0.0
  %626 = vmatpush.msra.mxu0 0.0
  %627 = vmatpush.msra.mxu0 0.0
  %628 = vmatpush.msra.mxu0 0.0
  %629 = vmatpush.msra.mxu0 0.0
  %630 = vmatpush.msra.mxu0 0.0
  %631 = vmatpush.msra.mxu0 0.0
  %632 = vmatpush.msra.mxu0 0.0
  %633 = vmatpush.msra.mxu0 0.0
  %634 = vmatpush.msra.mxu0 0.0
  %635 = vmatpush.msra.mxu0 0.0
  %636 = vmatpush.msra.mxu0 0.0
  %637 = vmatpush.msra.mxu0 0.0
  %638 = vmatpush.msra.mxu0 0.0
  %639 = vmatpush.msra.mxu0 0.0
  %640 = vmatpush.msra.mxu0 %v620
  %641 = vmatmul.f32.gmra.mxu0 %v623
  %v642 = vpop.f32.mrf.mxu0
  %v643 = vadd.f32 0.0, %v642
  %644 = vdwg.mxu0
  %v646 = vsel %vm201, %v617, 0
  %v649 = vsel %vm201, %v643, 0
  %651 = vmatpush.msra.mxu0 0.0
  %652 = vmatpush.msra.mxu0 0.0
  %653 = vmatpush.msra.mxu0 0.0
  %654 = vmatpush.msra.mxu0 0.0
  %655 = vmatpush.msra.mxu0 0.0
  %656 = vmatpush.msra.mxu0 0.0
  %657 = vmatpush.msra.mxu0 0.0
  %658 = vmatpush.msra.mxu0 0.0
  %659 = vmatpush.msra.mxu0 0.0
  %660 = vmatpush.msra.mxu0 0.0
  %661 = vmatpush.msra.mxu0 0.0
  %662 = vmatpush.msra.mxu0 0.0
  %663 = vmatpush.msra.mxu0 0.0
  %664 = vmatpush.msra.mxu0 0.0
  %665 = vmatpush.msra.mxu0 0.0
  %666 = vmatpush.msra.mxu0 %v196
  %667 = vmatmul.f32.gmra.mxu0 %v646
  %v668 = vpop.f32.mrf.mxu0
  %v669 = vadd.f32 0.0, %v668
  %670 = vmatmul.f32.gmra.mxu0 %v649
  %v671 = vpop.f32.mrf.mxu0
  %v672 = vadd.f32 0.0, %v671
  %673 = vdwg.mxu0
  %v674 = vadd.f32 %v510, %v669
  %v675 = vadd.f32 %v513, %v672
  %676 = vrot.lane.b32.xlu0 %v189, 104
  %v677 = vpop.permute.xlu0 %676
  %678 = vrot.lane.b32.xlu0 %v189, 72
  %v679 = vpop.permute.xlu0 %678
  %v680 = vsel %vm201, %v677, 0
  %v682 = vsel %vm201, %v679, 0
  %684 = vmatpush.xpose.msra.mxu0 0.0
  %685 = vmatpush.xpose.msra.mxu0 0.0
  %686 = vmatpush.xpose.msra.mxu0 0.0
  %687 = vmatpush.xpose.msra.mxu0 0.0
  %688 = vmatpush.xpose.msra.mxu0 0.0
  %689 = vmatpush.xpose.msra.mxu0 0.0
  %690 = vmatpush.xpose.msra.mxu0 0.0
  %691 = vmatpush.xpose.msra.mxu0 0.0
  %692 = vmatpush.xpose.msra.mxu0 0.0
  %693 = vmatpush.xpose.msra.mxu0 0.0
  %694 = vmatpush.xpose.msra.mxu0 0.0
  %695 = vmatpush.xpose.msra.mxu0 0.0
  %696 = vmatpush.xpose.msra.mxu0 0.0
  %697 = vmatpush.xpose.msra.mxu0 0.0
  %698 = vmatpush.xpose.msra.mxu0 0.0
  %699 = vmatpush.xpose.msra.mxu0 %v682
  %700 = vmatmul.f32.gmra.mxu0 %v680
  %v701 = vpop.f32.mrf.mxu0
  %v702 = vadd.f32 %v104, %v701
  %703 = vdwg.mxu0
  %704 = vrot.lane.b32.xlu0 %v192, 104
  %v705 = vpop.permute.xlu0 %704
  %706 = vrot.lane.b32.xlu0 %v192, 72
  %v707 = vpop.permute.xlu0 %706
  %v708 = vsel %vm201, %v705, 0
  %v710 = vsel %vm201, %v707, 0
  %712 = vmatpush.xpose.msra.mxu0 0.0
  %713 = vmatpush.xpose.msra.mxu0 0.0
  %714 = vmatpush.xpose.msra.mxu0 0.0
  %715 = vmatpush.xpose.msra.mxu0 0.0
  %716 = vmatpush.xpose.msra.mxu0 0.0
  %717 = vmatpush.xpose.msra.mxu0 0.0
  %718 = vmatpush.xpose.msra.mxu0 0.0
  %719 = vmatpush.xpose.msra.mxu0 0.0
  %720 = vmatpush.xpose.msra.mxu0 0.0
  %721 = vmatpush.xpose.msra.mxu0 0.0
  %722 = vmatpush.xpose.msra.mxu0 0.0
  %723 = vmatpush.xpose.msra.mxu0 0.0
  %724 = vmatpush.xpose.msra.mxu0 0.0
  %725 = vmatpush.xpose.msra.mxu0 0.0
  %726 = vmatpush.xpose.msra.mxu0 0.0
  %727 = vmatpush.xpose.msra.mxu0 %v710
  %728 = vmatmul.f32.gmra.mxu0 %v708
  %v729 = vpop.f32.mrf.mxu0
  %v730 = vadd.f32 %v104, %v729
  %731 = vdwg.mxu0
  %v732 = vsel %vm201, %v702, -inf
  %733 = vmax.xlane.f32.xlu0 %v732
  %v734 = vpop.xlane.xlu0 %733
  %v735 = vsel %vm201, %v730, -inf
  %736 = vmax.xlane.f32.xlu0 %v735
  %v737 = vpop.xlane.xlu0 %736
  %v738 = vsub.f32 %v702, %v734
  %v739 = vsub.f32 %v730, %v737
  %v740 = vmul.f32 %v738, 1.442695
  %v741 = vpow.pop %v740
  %v742 = vmul.f32 %v739, 1.442695
  %v743 = vpow.pop %v742
  %v744 = vsel %vm201, %v741, 0.0
  %745 = vadd.xlane.f32.xlu0 %v744
  %v746 = vpop.xlane.xlu0 %745
  %v747 = vsel %vm201, %v743, 0.0
  %748 = vadd.xlane.f32.xlu0 %v747
  %v749 = vpop.xlane.xlu0 %748
  %v750 = vrcp.pop %v746
  %v751 = vrcp.pop %v749
  %v752 = vmul.f32 %v741, %v750
  %v753 = vmul.f32 %v743, %v751
  %754 = vrot.lane.b32.xlu0 %v189, 40
  %v755 = vpop.permute.xlu0 %754
  %v758 = vsel %vm201, %v752, 0
  %760 = vmatpush.msra.mxu0 0.0
  %761 = vmatpush.msra.mxu0 0.0
  %762 = vmatpush.msra.mxu0 0.0
  %763 = vmatpush.msra.mxu0 0.0
  %764 = vmatpush.msra.mxu0 0.0
  %765 = vmatpush.msra.mxu0 0.0
  %766 = vmatpush.msra.mxu0 0.0
  %767 = vmatpush.msra.mxu0 0.0
  %768 = vmatpush.msra.mxu0 0.0
  %769 = vmatpush.msra.mxu0 0.0
  %770 = vmatpush.msra.mxu0 0.0
  %771 = vmatpush.msra.mxu0 0.0
  %772 = vmatpush.msra.mxu0 0.0
  %773 = vmatpush.msra.mxu0 0.0
  %774 = vmatpush.msra.mxu0 0.0
  %775 = vmatpush.msra.mxu0 %v755
  %776 = vmatmul.f32.gmra.mxu0 %v758
  %v777 = vpop.f32.mrf.mxu0
  %v778 = vadd.f32 0.0, %v777
  %779 = vdwg.mxu0
  %780 = vrot.lane.b32.xlu0 %v192, 40
  %v781 = vpop.permute.xlu0 %780
  %v784 = vsel %vm201, %v753, 0
  %786 = vmatpush.msra.mxu0 0.0
  %787 = vmatpush.msra.mxu0 0.0
  %788 = vmatpush.msra.mxu0 0.0
  %789 = vmatpush.msra.mxu0 0.0
  %790 = vmatpush.msra.mxu0 0.0
  %791 = vmatpush.msra.mxu0 0.0
  %792 = vmatpush.msra.mxu0 0.0
  %793 = vmatpush.msra.mxu0 0.0
  %794 = vmatpush.msra.mxu0 0.0
  %795 = vmatpush.msra.mxu0 0.0
  %796 = vmatpush.msra.mxu0 0.0
  %797 = vmatpush.msra.mxu0 0.0
  %798 = vmatpush.msra.mxu0 0.0
  %799 = vmatpush.msra.mxu0 0.0
  %800 = vmatpush.msra.mxu0 0.0
  %801 = vmatpush.msra.mxu0 %v781
  %802 = vmatmul.f32.gmra.mxu0 %v784
  %v803 = vpop.f32.mrf.mxu0
  %v804 = vadd.f32 0.0, %v803
  %805 = vdwg.mxu0
  %v807 = vsel %vm201, %v778, 0
  %v810 = vsel %vm201, %v804, 0
  %812 = vmatpush.msra.mxu0 0.0
  %813 = vmatpush.msra.mxu0 0.0
  %814 = vmatpush.msra.mxu0 0.0
  %815 = vmatpush.msra.mxu0 0.0
  %816 = vmatpush.msra.mxu0 0.0
  %817 = vmatpush.msra.mxu0 0.0
  %818 = vmatpush.msra.mxu0 0.0
  %819 = vmatpush.msra.mxu0 0.0
  %820 = vmatpush.msra.mxu0 0.0
  %821 = vmatpush.msra.mxu0 0.0
  %822 = vmatpush.msra.mxu0 0.0
  %823 = vmatpush.msra.mxu0 0.0
  %824 = vmatpush.msra.mxu0 0.0
  %825 = vmatpush.msra.mxu0 0.0
  %826 = vmatpush.msra.mxu0 0.0
  %827 = vmatpush.msra.mxu0 %v197
  %828 = vmatmul.f32.gmra.mxu0 %v807
  %v829 = vpop.f32.mrf.mxu0
  %v830 = vadd.f32 0.0, %v829
  %831 = vmatmul.f32.gmra.mxu0 %v810
  %v832 = vpop.f32.mrf.mxu0
  %v833 = vadd.f32 0.0, %v832
  %834 = vdwg.mxu0
  %v835 = vadd.f32 %v674, %v830
  %v836 = vadd.f32 %v675, %v833
  %v837 = vadd.f32 %v96, %v835
  %v838 = vadd.f32 %v99, %v836
  %v839 = vld [vmem:[%s6] sm:$0x1]
  %v841 = vperm.slane %v839, 0
  %v843 = vadd.f32 %v837, %v841
  %v844 = vadd.f32 %v838, %v841
  %v845 = vsel %vm105, %v843, 0.0
  %846 = vadd.xlane.f32.xlu0 %v845
  %v847 = vpop.xlane.xlu0 %846
  %v848 = vsel %vm105, %v844, 0.0
  %849 = vadd.xlane.f32.xlu0 %v848
  %v850 = vpop.xlane.xlu0 %849
  %v851 = vmul.f32 %v847, %v118
  %v852 = vmul.f32 %v850, %v118
  %v853 = vsub.f32 %v843, %v851
  %v854 = vsub.f32 %v844, %v852
  %v855 = vmul.f32 %v853, %v853
  %v856 = vmul.f32 %v854, %v854
  %v857 = vsel %vm105, %v855, 0.0
  %858 = vadd.xlane.f32.xlu0 %v857
  %v859 = vpop.xlane.xlu0 %858
  %v860 = vsel %vm105, %v856, 0.0
  %861 = vadd.xlane.f32.xlu0 %v860
  %v862 = vpop.xlane.xlu0 %861
  %v863 = vmul.f32 %v859, %v118
  %v864 = vmul.f32 %v862, %v118
  %v865 = vadd.f32 %v863, 1e-05
  %v866 = vadd.f32 %v864, 1e-05
  %v867 = vrsqrt.pop %v865
  %v868 = vmul.f32 %v867, %v865
  %v869 = vmul.f32 %v868, %v867
  %v870 = vmul.f32 0.5, %v869
  %v871 = vsub.f32 1.5, %v870
  %v872 = vmul.f32 %v867, %v871
  %vm873 = vweird.f32 %v865
  %vm874 = vweird.f32 %v867
  %vm875 = vmor %vm873, %vm874
  %v876 = vsel %vm875, %v867, %v872
  %v877 = vrsqrt.pop %v866
  %v878 = vmul.f32 %v877, %v866
  %v879 = vmul.f32 %v878, %v877
  %v880 = vmul.f32 0.5, %v879
  %v881 = vsub.f32 1.5, %v880
  %v882 = vmul.f32 %v877, %v881
  %vm883 = vweird.f32 %v866
  %vm884 = vweird.f32 %v877
  %vm885 = vmor %vm883, %vm884
  %v886 = vsel %vm885, %v877, %v882
  %v887 = vmul.f32 %v853, %v876
  %v888 = vmul.f32 %v854, %v886
  %v889 = vld [vmem:[%s7] sm:$0xff]
  %v890 = vld [vmem:[%s7 + $0x8] sm:$0xff]
  %v891 = vld [vmem:[%s7 + $0x10] sm:$0xff]
  %v892 = vld [vmem:[%s7 + $0x18] sm:$0xff]
  %v893 = vld [vmem:[%s8] sm:$0x1]
  %v895 = vperm.slane %v893, 0
  %v898 = vsel %vm105, %v887, 0
  %v901 = vsel %vm105, %v888, 0
  %903 = vmatpush.msra.mxu0 0.0
  %904 = vmatpush.msra.mxu0 0.0
  %905 = vmatpush.msra.mxu0 0.0
  %906 = vmatpush.msra.mxu0 0.0
  %907 = vmatpush.msra.mxu0 0.0
  %908 = vmatpush.msra.mxu0 0.0
  %909 = vmatpush.msra.mxu0 0.0
  %910 = vmatpush.msra.mxu0 0.0
  %911 = vmatpush.msra.mxu0 0.0
  %912 = vmatpush.msra.mxu0 0.0
  %913 = vmatpush.msra.mxu0 0.0
  %914 = vmatpush.msra.mxu0 0.0
  %915 = vmatpush.msra.mxu0 %v892
  %916 = vmatpush.msra.mxu0 %v891
  %917 = vmatpush.msra.mxu0 %v890
  %918 = vmatpush.msra.mxu0 %v889
  %919 = vmatmul.f32.gmra.mxu0 %v898
  %v920 = vpop.f32.mrf.mxu0
  %v921 = vadd.f32 %v895, %v920
  %922 = vmatmul.f32.gmra.mxu0 %v901
  %v923 = vpop.f32.mrf.mxu0
  %v924 = vadd.f32 %v895, %v923
  %925 = vdwg.mxu0
  %v926 = vmax.f32 %v921, 0.0
  %v927 = vmax.f32 %v924, 0.0
  %v928 = vld [vmem:[%s9] sm:$0xff]
  %v929 = vld [vmem:[%s9 + $0x8] sm:$0xff]
  %v930 = vld [vmem:[%s9 + $0x10] sm:$0xff]
  %v931 = vld [vmem:[%s9 + $0x18] sm:$0xff]
  %v932 = vld [vmem:[%s9 + $0x20] sm:$0xff]
  %v933 = vld [vmem:[%s9 + $0x28] sm:$0xff]
  %v934 = vld [vmem:[%s9 + $0x30] sm:$0xff]
  %v935 = vld [vmem:[%s9 + $0x38] sm:$0xff]
  %v936 = vld [vmem:[%s9 + $0x40] sm:$0xff]
  %v937 = vld [vmem:[%s9 + $0x48] sm:$0xff]
  %v938 = vld [vmem:[%s9 + $0x50] sm:$0xff]
  %v939 = vld [vmem:[%s9 + $0x58] sm:$0xff]
  %v940 = vld [vmem:[%s9 + $0x60] sm:$0xff]
  %v941 = vld [vmem:[%s9 + $0x68] sm:$0xff]
  %v942 = vld [vmem:[%s9 + $0x70] sm:$0xff]
  %v943 = vld [vmem:[%s9 + $0x78] sm:$0xff]
  %944 = vmatpush.msra.mxu0 %v943
  %945 = vmatpush.msra.mxu0 %v942
  %946 = vmatpush.msra.mxu0 %v941
  %947 = vmatpush.msra.mxu0 %v940
  %948 = vmatpush.msra.mxu0 %v939
  %949 = vmatpush.msra.mxu0 %v938
  %950 = vmatpush.msra.mxu0 %v937
  %951 = vmatpush.msra.mxu0 %v936
  %952 = vmatpush.msra.mxu0 %v935
  %953 = vmatpush.msra.mxu0 %v934
  %954 = vmatpush.msra.mxu0 %v933
  %955 = vmatpush.msra.mxu0 %v932
  %956 = vmatpush.msra.mxu0 %v931
  %957 = vmatpush.msra.mxu0 %v930
  %958 = vmatpush.msra.mxu0 %v929
  %959 = vmatpush.msra.mxu0 %v928
  %960 = vmatmul.f32.gmra.mxu0 %v926
  %v961 = vpop.f32.mrf.mxu0
  %v962 = vadd.f32 0.0, %v961
  %963 = vmatmul.f32.gmra.mxu0 %v927
  %v964 = vpop.f32.mrf.mxu0
  %v965 = vadd.f32 0.0, %v964
  %966 = vdwg.mxu0
  %v967 = vadd.f32 %v843, %v962
  %v968 = vadd.f32 %v844, %v965
  %v969 = vld [vmem:[%s10] sm:$0x1]
  %v971 = vperm.slane %v969, 0
  %v973 = vadd.f32 %v967, %v971
  %v974 = vadd.f32 %v968, %v971
  %v975 = vsel %vm105, %v973, 0.0
  %976 = vadd.xlane.f32.xlu0 %v975
  %v977 = vpop.xlane.xlu0 %976
  %v978 = vsel %vm105, %v974, 0.0
  %979 = vadd.xlane.f32.xlu0 %v978
  %v980 = vpop.xlane.xlu0 %979
  %v981 = vmul.f32 %v977, %v118
  %v982 = vmul.f32 %v980, %v118
  %v983 = vsub.f32 %v973, %v981
  %v984 = vsub.f32 %v974, %v982
  %v985 = vmul.f32 %v983, %v983
  %v986 = vmul.f32 %v984, %v984
  %v987 = vsel %vm105, %v985, 0.0
  %988 = vadd.xlane.f32.xlu0 %v987
  %v989 = vpop.xlane.xlu0 %988
  %v990 = vsel %vm105, %v986, 0.0
  %991 = vadd.xlane.f32.xlu0 %v990
  %v992 = vpop.xlane.xlu0 %991
  %v993 = vmul.f32 %v989, %v118
  %v994 = vmul.f32 %v992, %v118
  %v995 = vadd.f32 %v993, 1e-05
  %v996 = vadd.f32 %v994, 1e-05
  %v997 = vrsqrt.pop %v995
  %v998 = vmul.f32 %v997, %v995
  %v999 = vmul.f32 %v998, %v997
  %v1000 = vmul.f32 0.5, %v999
  %v1001 = vsub.f32 1.5, %v1000
  %v1002 = vmul.f32 %v997, %v1001
  %vm1003 = vweird.f32 %v995
  %vm1004 = vweird.f32 %v997
  %vm1005 = vmor %vm1003, %vm1004
  %v1006 = vsel %vm1005, %v997, %v1002
  %v1007 = vrsqrt.pop %v996
  %v1008 = vmul.f32 %v1007, %v996
  %v1009 = vmul.f32 %v1008, %v1007
  %v1010 = vmul.f32 0.5, %v1009
  %v1011 = vsub.f32 1.5, %v1010
  %v1012 = vmul.f32 %v1007, %v1011
  %vm1013 = vweird.f32 %v996
  %vm1014 = vweird.f32 %v1007
  %vm1015 = vmor %vm1013, %vm1014
  %v1016 = vsel %vm1015, %v1007, %v1012
  %v1017 = vmul.f32 %v983, %v1006
  %v1018 = vmul.f32 %v984, %v1016
  %s1019 = scalar_lea.vmem %s3, 32
  %v1020 = vld [vmem:[%s1019] sm:$0xff]
  %v1021 = vld [vmem:[%s1019 + $0x8] sm:$0xff]
  %v1022 = vld [vmem:[%s1019 + $0x10] sm:$0xff]
  %v1023 = vld [vmem:[%s1019 + $0x18] sm:$0xff]
  %s1024 = scalar_lea.vmem %s4, 1
  %v1025 = vld [vmem:[%s1024] sm:$0x1]
  %v1027 = vperm.slane %v1025, 0
  %v1030 = vsel %vm105, %v1017, 0
  %v1033 = vsel %vm105, %v1018, 0
  %1035 = vmatpush.msra.mxu0 0.0
  %1036 = vmatpush.msra.mxu0 0.0
  %1037 = vmatpush.msra.mxu0 0.0
  %1038 = vmatpush.msra.mxu0 0.0
  %1039 = vmatpush.msra.mxu0 0.0
  %1040 = vmatpush.msra.mxu0 0.0
  %1041 = vmatpush.msra.mxu0 0.0
  %1042 = vmatpush.msra.mxu0 0.0
  %1043 = vmatpush.msra.mxu0 0.0
  %1044 = vmatpush.msra.mxu0 0.0
  %1045 = vmatpush.msra.mxu0 0.0
  %1046 = vmatpush.msra.mxu0 0.0
  %1047 = vmatpush.msra.mxu0 %v1023
  %1048 = vmatpush.msra.mxu0 %v1022
  %1049 = vmatpush.msra.mxu0 %v1021
  %1050 = vmatpush.msra.mxu0 %v1020
  %1051 = vmatmul.f32.gmra.mxu0 %v1030
  %v1052 = vpop.f32.mrf.mxu0
  %v1053 = vadd.f32 %v1027, %v1052
  %1054 = vmatmul.f32.gmra.mxu0 %v1033
  %v1055 = vpop.f32.mrf.mxu0
  %v1056 = vadd.f32 %v1027, %v1055
  %1057 = vdwg.mxu0
  %s1058 = scalar_lea.vmem %s5, 32
  %v1059 = vld [vmem:[%s1058] sm:$0xff]
  %v1060 = vld [vmem:[%s1058 + $0x8] sm:$0xff]
  %v1061 = vld [vmem:[%s1058 + $0x10] sm:$0xff]
  %v1062 = vld [vmem:[%s1058 + $0x18] sm:$0xff]
  %1064 = vrot.lane.b32.xlu0 %v1053, 96
  %v1065 = vpop.permute.xlu0 %1064
  %v1066 = vsel %vm201, %v1053, 0
  %v1068 = vsel %vm201, %v1065, 0
  %1070 = vmatpush.xpose.msra.mxu0 0.0
  %1071 = vmatpush.xpose.msra.mxu0 0.0
  %1072 = vmatpush.xpose.msra.mxu0 0.0
  %1073 = vmatpush.xpose.msra.mxu0 0.0
  %1074 = vmatpush.xpose.msra.mxu0 0.0
  %1075 = vmatpush.xpose.msra.mxu0 0.0
  %1076 = vmatpush.xpose.msra.mxu0 0.0
  %1077 = vmatpush.xpose.msra.mxu0 0.0
  %1078 = vmatpush.xpose.msra.mxu0 0.0
  %1079 = vmatpush.xpose.msra.mxu0 0.0
  %1080 = vmatpush.xpose.msra.mxu0 0.0
  %1081 = vmatpush.xpose.msra.mxu0 0.0
  %1082 = vmatpush.xpose.msra.mxu0 0.0
  %1083 = vmatpush.xpose.msra.mxu0 0.0
  %1084 = vmatpush.xpose.msra.mxu0 0.0
  %1085 = vmatpush.xpose.msra.mxu0 %v1068
  %1086 = vmatmul.f32.gmra.mxu0 %v1066
  %v1087 = vpop.f32.mrf.mxu0
  %v1088 = vadd.f32 %v104, %v1087
  %1089 = vdwg.mxu0
  %1091 = vrot.lane.b32.xlu0 %v1056, 96
  %v1092 = vpop.permute.xlu0 %1091
  %v1093 = vsel %vm201, %v1056, 0
  %v1095 = vsel %vm201, %v1092, 0
  %1097 = vmatpush.xpose.msra.mxu0 0.0
  %1098 = vmatpush.xpose.msra.mxu0 0.0
  %1099 = vmatpush.xpose.msra.mxu0 0.0
  %1100 = vmatpush.xpose.msra.mxu0 0.0
  %1101 = vmatpush.xpose.msra.mxu0 0.0
  %1102 = vmatpush.xpose.msra.mxu0 0.0
  %1103 = vmatpush.xpose.msra.mxu0 0.0
  %1104 = vmatpush.xpose.msra.mxu0 0.0
  %1105 = vmatpush.xpose.msra.mxu0 0.0
  %1106 = vmatpush.xpose.msra.mxu0 0.0
  %1107 = vmatpush.xpose.msra.mxu0 0.0
  %1108 = vmatpush.xpose.msra.mxu0 0.0
  %1109 = vmatpush.xpose.msra.mxu0 0.0
  %1110 = vmatpush.xpose.msra.mxu0 0.0
  %1111 = vmatpush.xpose.msra.mxu0 0.0
  %1112 = vmatpush.xpose.msra.mxu0 %v1095
  %1113 = vmatmul.f32.gmra.mxu0 %v1093
  %v1114 = vpop.f32.mrf.mxu0
  %v1115 = vadd.f32 %v104, %v1114
  %1116 = vdwg.mxu0
  %v1117 = vsel %vm201, %v1088, -inf
  %1118 = vmax.xlane.f32.xlu0 %v1117
  %v1119 = vpop.xlane.xlu0 %1118
  %v1120 = vsel %vm201, %v1115, -inf
  %1121 = vmax.xlane.f32.xlu0 %v1120
  %v1122 = vpop.xlane.xlu0 %1121
  %v1123 = vsub.f32 %v1088, %v1119
  %v1124 = vsub.f32 %v1115, %v1122
  %v1125 = vmul.f32 %v1123, 1.442695
  %v1126 = vpow.pop %v1125
  %v1127 = vmul.f32 %v1124, 1.442695
  %v1128 = vpow.pop %v1127
  %v1129 = vsel %vm201, %v1126, 0.0
  %1130 = vadd.xlane.f32.xlu0 %v1129
  %v1131 = vpop.xlane.xlu0 %1130
  %v1132 = vsel %vm201, %v1128, 0.0
  %1133 = vadd.xlane.f32.xlu0 %v1132
  %v1134 = vpop.xlane.xlu0 %1133
  %v1135 = vrcp.pop %v1131
  %v1136 = vrcp.pop %v1134
  %v1137 = vmul.f32 %v1126, %v1135
  %v1138 = vmul.f32 %v1128, %v1136
  %1139 = vrot.lane.b32.xlu0 %v1053, 64
  %v1140 = vpop.permute.xlu0 %1139
  %v1143 = vsel %vm201, %v1137, 0
  %1145 = vmatpush.msra.mxu0 0.0
  %1146 = vmatpush.msra.mxu0 0.0
  %1147 = vmatpush.msra.mxu0 0.0
  %1148 = vmatpush.msra.mxu0 0.0
  %1149 = vmatpush.msra.mxu0 0.0
  %1150 = vmatpush.msra.mxu0 0.0
  %1151 = vmatpush.msra.mxu0 0.0
  %1152 = vmatpush.msra.mxu0 0.0
  %1153 = vmatpush.msra.mxu0 0.0
  %1154 = vmatpush.msra.mxu0 0.0
  %1155 = vmatpush.msra.mxu0 0.0
  %1156 = vmatpush.msra.mxu0 0.0
  %1157 = vmatpush.msra.mxu0 0.0
  %1158 = vmatpush.msra.mxu0 0.0
  %1159 = vmatpush.msra.mxu0 0.0
  %1160 = vmatpush.msra.mxu0 %v1140
  %1161 = vmatmul.f32.gmra.mxu0 %v1143
  %v1162 = vpop.f32.mrf.mxu0
  %v1163 = vadd.f32 0.0, %v1162
  %1164 = vdwg.mxu0
  %1165 = vrot.lane.b32.xlu0 %v1056, 64
  %v1166 = vpop.permute.xlu0 %1165
  %v1169 = vsel %vm201, %v1138, 0
  %1171 = vmatpush.msra.mxu0 0.0
  %1172 = vmatpush.msra.mxu0 0.0
  %1173 = vmatpush.msra.mxu0 0.0
  %1174 = vmatpush.msra.mxu0 0.0
  %1175 = vmatpush.msra.mxu0 0.0
  %1176 = vmatpush.msra.mxu0 0.0
  %1177 = vmatpush.msra.mxu0 0.0
  %1178 = vmatpush.msra.mxu0 0.0
  %1179 = vmatpush.msra.mxu0 0.0
  %1180 = vmatpush.msra.mxu0 0.0
  %1181 = vmatpush.msra.mxu0 0.0
  %1182 = vmatpush.msra.mxu0 0.0
  %1183 = vmatpush.msra.mxu0 0.0
  %1184 = vmatpush.msra.mxu0 0.0
  %1185 = vmatpush.msra.mxu0 0.0
  %1186 = vmatpush.msra.mxu0 %v1166
  %1187 = vmatmul.f32.gmra.mxu0 %v1169
  %v1188 = vpop.f32.mrf.mxu0
  %v1189 = vadd.f32 0.0, %v1188
  %1190 = vdwg.mxu0
  %1191 = vrot.lane.b32.xlu0 %v1053, 120
  %v1192 = vpop.permute.xlu0 %1191
  %1193 = vrot.lane.b32.xlu0 %v1053, 88
  %v1194 = vpop.permute.xlu0 %1193
  %v1195 = vsel %vm201, %v1192, 0
  %v1197 = vsel %vm201, %v1194, 0
  %1199 = vmatpush.xpose.msra.mxu0 0.0
  %1200 = vmatpush.xpose.msra.mxu0 0.0
  %1201 = vmatpush.xpose.msra.mxu0 0.0
  %1202 = vmatpush.xpose.msra.mxu0 0.0
  %1203 = vmatpush.xpose.msra.mxu0 0.0
  %1204 = vmatpush.xpose.msra.mxu0 0.0
  %1205 = vmatpush.xpose.msra.mxu0 0.0
  %1206 = vmatpush.xpose.msra.mxu0 0.0
  %1207 = vmatpush.xpose.msra.mxu0 0.0
  %1208 = vmatpush.xpose.msra.mxu0 0.0
  %1209 = vmatpush.xpose.msra.mxu0 0.0
  %1210 = vmatpush.xpose.msra.mxu0 0.0
  %1211 = vmatpush.xpose.msra.mxu0 0.0
  %1212 = vmatpush.xpose.msra.mxu0 0.0
  %1213 = vmatpush.xpose.msra.mxu0 0.0
  %1214 = vmatpush.xpose.msra.mxu0 %v1197
  %1215 = vmatmul.f32.gmra.mxu0 %v1195
  %v1216 = vpop.f32.mrf.mxu0
  %v1217 = vadd.f32 %v104, %v1216
  %1218 = vdwg.mxu0
  %1219 = vrot.lane.b32.xlu0 %v1056, 120
  %v1220 = vpop.permute.xlu0 %1219
  %1221 = vrot.lane.b32.xlu0 %v1056, 88
  %v1222 = vpop.permute.xlu0 %1221
  %v1223 = vsel %vm201, %v1220, 0
  %v1225 = vsel %vm201, %v1222, 0
  %1227 = vmatpush.xpose.msra.mxu0 0.0
  %1228 = vmatpush.xpose.msra.mxu0 0.0
  %1229 = vmatpush.xpose.msra.mxu0 0.0
  %1230 = vmatpush.xpose.msra.mxu0 0.0
  %1231 = vmatpush.xpose.msra.mxu0 0.0
  %1232 = vmatpush.xpose.msra.mxu0 0.0
  %1233 = vmatpush.xpose.msra.mxu0 0.0
  %1234 = vmatpush.xpose.msra.mxu0 0.0
  %1235 = vmatpush.xpose.msra.mxu0 0.0
  %1236 = vmatpush.xpose.msra.mxu0 0.0
  %1237 = vmatpush.xpose.msra.mxu0 0.0
  %1238 = vmatpush.xpose.msra.mxu0 0.0
  %1239 = vmatpush.xpose.msra.mxu0 0.0
  %1240 = vmatpush.xpose.msra.mxu0 0.0
  %1241 = vmatpush.xpose.msra.mxu0 0.0
  %1242 = vmatpush.xpose.msra.mxu0 %v1225
  %1243 = vmatmul.f32.gmra.mxu0 %v1223
  %v1244 = vpop.f32.mrf.mxu0
  %v1245 = vadd.f32 %v104, %v1244
  %1246 = vdwg.mxu0
  %v1247 = vsel %vm201, %v1217, -inf
  %1248 = vmax.xlane.f32.xlu0 %v1247
  %v1249 = vpop.xlane.xlu0 %1248
  %v1250 = vsel %vm201, %v1245, -inf
  %1251 = vmax.xlane.f32.xlu0 %v1250
  %v1252 = vpop.xlane.xlu0 %1251
  %v1253 = vsub.f32 %v1217, %v1249
  %v1254 = vsub.f32 %v1245, %v1252
  %v1255 = vmul.f32 %v1253, 1.442695
  %v1256 = vpow.pop %v1255
  %v1257 = vmul.f32 %v1254, 1.442695
  %v1258 = vpow.pop %v1257
  %v1259 = vsel %vm201, %v1256, 0.0
  %1260 = vadd.xlane.f32.xlu0 %v1259
  %v1261 = vpop.xlane.xlu0 %1260
  %v1262 = vsel %vm201, %v1258, 0.0
  %1263 = vadd.xlane.f32.xlu0 %v1262
  %v1264 = vpop.xlane.xlu0 %1263
  %v1265 = vrcp.pop %v1261
  %v1266 = vrcp.pop %v1264
  %v1267 = vmul.f32 %v1256, %v1265
  %v1268 = vmul.f32 %v1258, %v1266
  %1269 = vrot.lane.b32.xlu0 %v1053, 56
  %v1270 = vpop.permute.xlu0 %1269
  %v1273 = vsel %vm201, %v1267, 0
  %1275 = vmatpush.msra.mxu0 0.0
  %1276 = vmatpush.msra.mxu0 0.0
  %1277 = vmatpush.msra.mxu0 0.0
  %1278 = vmatpush.msra.mxu0 0.0
  %1279 = vmatpush.msra.mxu0 0.0
  %1280 = vmatpush.msra.mxu0 0.0
  %1281 = vmatpush.msra.mxu0 0.0
  %1282 = vmatpush.msra.mxu0 0.0
  %1283 = vmatpush.msra.mxu0 0.0
  %1284 = vmatpush.msra.mxu0 0.0
  %1285 = vmatpush.msra.mxu0 0.0
  %1286 = vmatpush.msra.mxu0 0.0
  %1287 = vmatpush.msra.mxu0 0.0
  %1288 = vmatpush.msra.mxu0 0.0
  %1289 = vmatpush.msra.mxu0 0.0
  %1290 = vmatpush.msra.mxu0 %v1270
  %1291 = vmatmul.f32.gmra.mxu0 %v1273
  %v1292 = vpop.f32.mrf.mxu0
  %v1293 = vadd.f32 0.0, %v1292
  %1294 = vdwg.mxu0
  %1295 = vrot.lane.b32.xlu0 %v1056, 56
  %v1296 = vpop.permute.xlu0 %1295
  %v1299 = vsel %vm201, %v1268, 0
  %1301 = vmatpush.msra.mxu0 0.0
  %1302 = vmatpush.msra.mxu0 0.0
  %1303 = vmatpush.msra.mxu0 0.0
  %1304 = vmatpush.msra.mxu0 0.0
  %1305 = vmatpush.msra.mxu0 0.0
  %1306 = vmatpush.msra.mxu0 0.0
  %1307 = vmatpush.msra.mxu0 0.0
  %1308 = vmatpush.msra.mxu0 0.0
  %1309 = vmatpush.msra.mxu0 0.0
  %1310 = vmatpush.msra.mxu0 0.0
  %1311 = vmatpush.msra.mxu0 0.0
  %1312 = vmatpush.msra.mxu0 0.0
  %1313 = vmatpush.msra.mxu0 0.0
  %1314 = vmatpush.msra.mxu0 0.0
  %1315 = vmatpush.msra.mxu0 0.0
  %1316 = vmatpush.msra.mxu0 %v1296
  %1317 = vmatmul.f32.gmra.mxu0 %v1299
  %v1318 = vpop.f32.mrf.mxu0
  %v1319 = vadd.f32 0.0, %v1318
  %1320 = vdwg.mxu0
  %v1322 = vsel %vm201, %v1293, 0
  %v1325 = vsel %vm201, %v1319, 0
  %1327 = vmatpush.msra.mxu0 0.0
  %1328 = vmatpush.msra.mxu0 0.0
  %1329 = vmatpush.msra.mxu0 0.0
  %1330 = vmatpush.msra.mxu0 0.0
  %1331 = vmatpush.msra.mxu0 0.0
  %1332 = vmatpush.msra.mxu0 0.0
  %1333 = vmatpush.msra.mxu0 0.0
  %1334 = vmatpush.msra.mxu0 0.0
  %1335 = vmatpush.msra.mxu0 0.0
  %1336 = vmatpush.msra.mxu0 0.0
  %1337 = vmatpush.msra.mxu0 0.0
  %1338 = vmatpush.msra.mxu0 0.0
  %1339 = vmatpush.msra.mxu0 0.0
  %1340 = vmatpush.msra.mxu0 0.0
  %1341 = vmatpush.msra.mxu0 0.0
  %1342 = vmatpush.msra.mxu0 %v1060
  %1343 = vmatmul.f32.gmra.mxu0 %v1322
  %v1344 = vpop.f32.mrf.mxu0
  %v1345 = vadd.f32 0.0, %v1344
  %1346 = vmatmul.f32.gmra.mxu0 %v1325
  %v1347 = vpop.f32.mrf.mxu0
  %v1348 = vadd.f32 0.0, %v1347
  %1349 = vdwg.mxu0
  %v1351 = vsel %vm201, %v1163, 0
  %v1354 = vsel %vm201, %v1189, 0
  %1356 = vmatpush.msra.mxu0 0.0
  %1357 = vmatpush.msra.mxu0 0.0
  %1358 = vmatpush.msra.mxu0 0.0
  %1359 = vmatpush.msra.mxu0 0.0
  %1360 = vmatpush.msra.mxu0 0.0
  %1361 = vmatpush.msra.mxu0 0.0
  %1362 = vmatpush.msra.mxu0 0.0
  %1363 = vmatpush.msra.mxu0 0.0
  %1364 = vmatpush.msra.mxu0 0.0
  %1365 = vmatpush.msra.mxu0 0.0
  %1366 = vmatpush.msra.mxu0 0.0
  %1367 = vmatpush.msra.mxu0 0.0
  %1368 = vmatpush.msra.mxu0 0.0
  %1369 = vmatpush.msra.mxu0 0.0
  %1370 = vmatpush.msra.mxu0 0.0
  %1371 = vmatpush.msra.mxu0 %v1059
  %1372 = vmatmul.f32.gmra.mxu0 %v1351
  %v1373 = vpop.f32.mrf.mxu0
  %v1374 = vadd.f32 %v1345, %v1373
  %1375 = vmatmul.f32.gmra.mxu0 %v1354
  %v1376 = vpop.f32.mrf.mxu0
  %v1377 = vadd.f32 %v1348, %v1376
  %1378 = vdwg.mxu0
  %1379 = vrot.lane.b32.xlu0 %v1053, 112
  %v1380 = vpop.permute.xlu0 %1379
  %1381 = vrot.lane.b32.xlu0 %v1053, 80
  %v1382 = vpop.permute.xlu0 %1381
  %v1383 = vsel %vm201, %v1380, 0
  %v1385 = vsel %vm201, %v1382, 0
  %1387 = vmatpush.xpose.msra.mxu0 0.0
  %1388 = vmatpush.xpose.msra.mxu0 0.0
  %1389 = vmatpush.xpose.msra.mxu0 0.0
  %1390 = vmatpush.xpose.msra.mxu0 0.0
  %1391 = vmatpush.xpose.msra.mxu0 0.0
  %1392 = vmatpush.xpose.msra.mxu0 0.0
  %1393 = vmatpush.xpose.msra.mxu0 0.0
  %1394 = vmatpush.xpose.msra.mxu0 0.0
  %1395 = vmatpush.xpose.msra.mxu0 0.0
  %1396 = vmatpush.xpose.msra.mxu0 0.0
  %1397 = vmatpush.xpose.msra.mxu0 0.0
  %1398 = vmatpush.xpose.msra.mxu0 0.0
  %1399 = vmatpush.xpose.msra.mxu0 0.0
  %1400 = vmatpush.xpose.msra.mxu0 0.0
  %1401 = vmatpush.xpose.msra.mxu0 0.0
  %1402 = vmatpush.xpose.msra.mxu0 %v1385
  %1403 = vmatmul.f32.gmra.mxu0 %v1383
  %v1404 = vpop.f32.mrf.mxu0
  %v1405 = vadd.f32 %v104, %v1404
  %1406 = vdwg.mxu0
  %1407 = vrot.lane.b32.xlu0 %v1056, 112
  %v1408 = vpop.permute.xlu0 %1407
  %1409 = vrot.lane.b32.xlu0 %v1056, 80
  %v1410 = vpop.permute.xlu0 %1409
  %v1411 = vsel %vm201, %v1408, 0
  %v1413 = vsel %vm201, %v1410, 0
  %1415 = vmatpush.xpose.msra.mxu0 0.0
  %1416 = vmatpush.xpose.msra.mxu0 0.0
  %1417 = vmatpush.xpose.msra.mxu0 0.0
  %1418 = vmatpush.xpose.msra.mxu0 0.0
  %1419 = vmatpush.xpose.msra.mxu0 0.0
  %1420 = vmatpush.xpose.msra.mxu0 0.0
  %1421 = vmatpush.xpose.msra.mxu0 0.0
  %1422 = vmatpush.xpose.msra.mxu0 0.0
  %1423 = vmatpush.xpose.msra.mxu0 0.0
  %1424 = vmatpush.xpose.msra.mxu0 0.0
  %1425 = vmatpush.xpose.msra.mxu0 0.0
  %1426 = vmatpush.xpose.msra.mxu0 0.0
  %1427 = vmatpush.xpose.msra.mxu0 0.0
  %1428 = vmatpush.xpose.msra.mxu0 0.0
  %1429 = vmatpush.xpose.msra.mxu0 0.0
  %1430 = vmatpush.xpose.msra.mxu0 %v1413
  %1431 = vmatmul.f32.gmra.mxu0 %v1411
  %v1432 = vpop.f32.mrf.mxu0
  %v1433 = vadd.f32 %v104, %v1432
  %1434 = vdwg.mxu0
  %v1435 = vsel %vm201, %v1405, -inf
  %1436 = vmax.xlane.f32.xlu0 %v1435
  %v1437 = vpop.xlane.xlu0 %1436
  %v1438 = vsel %vm201, %v1433, -inf
  %1439 = vmax.xlane.f32.xlu0 %v1438
  %v1440 = vpop.xlane.xlu0 %1439
  %v1441 = vsub.f32 %v1405, %v1437
  %v1442 = vsub.f32 %v1433, %v1440
  %v1443 = vmul.f32 %v1441, 1.442695
  %v1444 = vpow.pop %v1443
  %v1445 = vmul.f32 %v1442, 1.442695
  %v1446 = vpow.pop %v1445
  %v1447 = vsel %vm201, %v1444, 0.0
  %1448 = vadd.xlane.f32.xlu0 %v1447
  %v1449 = vpop.xlane.xlu0 %1448
  %v1450 = vsel %vm201, %v1446, 0.0
  %1451 = vadd.xlane.f32.xlu0 %v1450
  %v1452 = vpop.xlane.xlu0 %1451
  %v1453 = vrcp.pop %v1449
  %v1454 = vrcp.pop %v1452
  %v1455 = vmul.f32 %v1444, %v1453
  %v1456 = vmul.f32 %v1446, %v1454
  %1457 = vrot.lane.b32.xlu0 %v1053, 48
  %v1458 = vpop.permute.xlu0 %1457
  %v1461 = vsel %vm201, %v1455, 0
  %1463 = vmatpush.msra.mxu0 0.0
  %1464 = vmatpush.msra.mxu0 0.0
  %1465 = vmatpush.msra.mxu0 0.0
  %1466 = vmatpush.msra.mxu0 0.0
  %1467 = vmatpush.msra.mxu0 0.0
  %1468 = vmatpush.msra.mxu0 0.0
  %1469 = vmatpush.msra.mxu0 0.0
  %1470 = vmatpush.msra.mxu0 0.0
  %1471 = vmatpush.msra.mxu0 0.0
  %1472 = vmatpush.msra.mxu0 0.0
  %1473 = vmatpush.msra.mxu0 0.0
  %1474 = vmatpush.msra.mxu0 0.0
  %1475 = vmatpush.msra.mxu0 0.0
  %1476 = vmatpush.msra.mxu0 0.0
  %1477 = vmatpush.msra.mxu0 0.0
  %1478 = vmatpush.msra.mxu0 %v1458
  %1479 = vmatmul.f32.gmra.mxu0 %v1461
  %v1480 = vpop.f32.mrf.mxu0
  %v1481 = vadd.f32 0.0, %v1480
  %1482 = vdwg.mxu0
  %1483 = vrot.lane.b32.xlu0 %v1056, 48
  %v1484 = vpop.permute.xlu0 %1483
  %v1487 = vsel %vm201, %v1456, 0
  %1489 = vmatpush.msra.mxu0 0.0
  %1490 = vmatpush.msra.mxu0 0.0
  %1491 = vmatpush.msra.mxu0 0.0
  %1492 = vmatpush.msra.mxu0 0.0
  %1493 = vmatpush.msra.mxu0 0.0
  %1494 = vmatpush.msra.mxu0 0.0
  %1495 = vmatpush.msra.mxu0 0.0
  %1496 = vmatpush.msra.mxu0 0.0
  %1497 = vmatpush.msra.mxu0 0.0
  %1498 = vmatpush.msra.mxu0 0.0
  %1499 = vmatpush.msra.mxu0 0.0
  %1500 = vmatpush.msra.mxu0 0.0
  %1501 = vmatpush.msra.mxu0 0.0
  %1502 = vmatpush.msra.mxu0 0.0
  %1503 = vmatpush.msra.mxu0 0.0
  %1504 = vmatpush.msra.mxu0 %v1484
  %1505 = vmatmul.f32.gmra.mxu0 %v1487
  %v1506 = vpop.f32.mrf.mxu0
  %v1507 = vadd.f32 0.0, %v1506
  %1508 = vdwg.mxu0
  %v1510 = vsel %vm201, %v1481, 0
  %v1513 = vsel %vm201, %v1507, 0
  %1515 = vmatpush.msra.mxu0 0.0
  %1516 = vmatpush.msra.mxu0 0.0
  %1517 = vmatpush.msra.mxu0 0.0
  %1518 = vmatpush.msra.mxu0 0.0
  %1519 = vmatpush.msra.mxu0 0.0
  %1520 = vmatpush.msra.mxu0 0.0
  %1521 = vmatpush.msra.mxu0 0.0
  %1522 = vmatpush.msra.mxu0 0.0
  %1523 = vmatpush.msra.mxu0 0.0
  %1524 = vmatpush.msra.mxu0 0.0
  %1525 = vmatpush.msra.mxu0 0.0
  %1526 = vmatpush.msra.mxu0 0.0
  %1527 = vmatpush.msra.mxu0 0.0
  %1528 = vmatpush.msra.mxu0 0.0
  %1529 = vmatpush.msra.mxu0 0.0
  %1530 = vmatpush.msra.mxu0 %v1061
  %1531 = vmatmul.f32.gmra.mxu0 %v1510
  %v1532 = vpop.f32.mrf.mxu0
  %v1533 = vadd.f32 0.0, %v1532
  %1534 = vmatmul.f32.gmra.mxu0 %v1513
  %v1535 = vpop.f32.mrf.mxu0
  %v1536 = vadd.f32 0.0, %v1535
  %1537 = vdwg.mxu0
  %v1538 = vadd.f32 %v1374, %v1533
  %v1539 = vadd.f32 %v1377, %v1536
  %1540 = vrot.lane.b32.xlu0 %v1053, 104
  %v1541 = vpop.permute.xlu0 %1540
  %1542 = vrot.lane.b32.xlu0 %v1053, 72
  %v1543 = vpop.permute.xlu0 %1542
  %v1544 = vsel %vm201, %v1541, 0
  %v1546 = vsel %vm201, %v1543, 0
  %1548 = vmatpush.xpose.msra.mxu0 0.0
  %1549 = vmatpush.xpose.msra.mxu0 0.0
  %1550 = vmatpush.xpose.msra.mxu0 0.0
  %1551 = vmatpush.xpose.msra.mxu0 0.0
  %1552 = vmatpush.xpose.msra.mxu0 0.0
  %1553 = vmatpush.xpose.msra.mxu0 0.0
  %1554 = vmatpush.xpose.msra.mxu0 0.0
  %1555 = vmatpush.xpose.msra.mxu0 0.0
  %1556 = vmatpush.xpose.msra.mxu0 0.0
  %1557 = vmatpush.xpose.msra.mxu0 0.0
  %1558 = vmatpush.xpose.msra.mxu0 0.0
  %1559 = vmatpush.xpose.msra.mxu0 0.0
  %1560 = vmatpush.xpose.msra.mxu0 0.0
  %1561 = vmatpush.xpose.msra.mxu0 0.0
  %1562 = vmatpush.xpose.msra.mxu0 0.0
  %1563 = vmatpush.xpose.msra.mxu0 %v1546
  %1564 = vmatmul.f32.gmra.mxu0 %v1544
  %v1565 = vpop.f32.mrf.mxu0
  %v1566 = vadd.f32 %v104, %v1565
  %1567 = vdwg.mxu0
  %1568 = vrot.lane.b32.xlu0 %v1056, 104
  %v1569 = vpop.permute.xlu0 %1568
  %1570 = vrot.lane.b32.xlu0 %v1056, 72
  %v1571 = vpop.permute.xlu0 %1570
  %v1572 = vsel %vm201, %v1569, 0
  %v1574 = vsel %vm201, %v1571, 0
  %1576 = vmatpush.xpose.msra.mxu0 0.0
  %1577 = vmatpush.xpose.msra.mxu0 0.0
  %1578 = vmatpush.xpose.msra.mxu0 0.0
  %1579 = vmatpush.xpose.msra.mxu0 0.0
  %1580 = vmatpush.xpose.msra.mxu0 0.0
  %1581 = vmatpush.xpose.msra.mxu0 0.0
  %1582 = vmatpush.xpose.msra.mxu0 0.0
  %1583 = vmatpush.xpose.msra.mxu0 0.0
  %1584 = vmatpush.xpose.msra.mxu0 0.0
  %1585 = vmatpush.xpose.msra.mxu0 0.0
  %1586 = vmatpush.xpose.msra.mxu0 0.0
  %1587 = vmatpush.xpose.msra.mxu0 0.0
  %1588 = vmatpush.xpose.msra.mxu0 0.0
  %1589 = vmatpush.xpose.msra.mxu0 0.0
  %1590 = vmatpush.xpose.msra.mxu0 0.0
  %1591 = vmatpush.xpose.msra.mxu0 %v1574
  %1592 = vmatmul.f32.gmra.mxu0 %v1572
  %v1593 = vpop.f32.mrf.mxu0
  %v1594 = vadd.f32 %v104, %v1593
  %1595 = vdwg.mxu0
  %v1596 = vsel %vm201, %v1566, -inf
  %1597 = vmax.xlane.f32.xlu0 %v1596
  %v1598 = vpop.xlane.xlu0 %1597
  %v1599 = vsel %vm201, %v1594, -inf
  %1600 = vmax.xlane.f32.xlu0 %v1599
  %v1601 = vpop.xlane.xlu0 %1600
  %v1602 = vsub.f32 %v1566, %v1598
  %v1603 = vsub.f32 %v1594, %v1601
  %v1604 = vmul.f32 %v1602, 1.442695
  %v1605 = vpow.pop %v1604
  %v1606 = vmul.f32 %v1603, 1.442695
  %v1607 = vpow.pop %v1606
  %v1608 = vsel %vm201, %v1605, 0.0
  %1609 = vadd.xlane.f32.xlu0 %v1608
  %v1610 = vpop.xlane.xlu0 %1609
  %v1611 = vsel %vm201, %v1607, 0.0
  %1612 = vadd.xlane.f32.xlu0 %v1611
  %v1613 = vpop.xlane.xlu0 %1612
  %v1614 = vrcp.pop %v1610
  %v1615 = vrcp.pop %v1613
  %v1616 = vmul.f32 %v1605, %v1614
  %v1617 = vmul.f32 %v1607, %v1615
  %1618 = vrot.lane.b32.xlu0 %v1053, 40
  %v1619 = vpop.permute.xlu0 %1618
  %v1622 = vsel %vm201, %v1616, 0
  %1624 = vmatpush.msra.mxu0 0.0
  %1625 = vmatpush.msra.mxu0 0.0
  %1626 = vmatpush.msra.mxu0 0.0
  %1627 = vmatpush.msra.mxu0 0.0
  %1628 = vmatpush.msra.mxu0 0.0
  %1629 = vmatpush.msra.mxu0 0.0
  %1630 = vmatpush.msra.mxu0 0.0
  %1631 = vmatpush.msra.mxu0 0.0
  %1632 = vmatpush.msra.mxu0 0.0
  %1633 = vmatpush.msra.mxu0 0.0
  %1634 = vmatpush.msra.mxu0 0.0
  %1635 = vmatpush.msra.mxu0 0.0
  %1636 = vmatpush.msra.mxu0 0.0
  %1637 = vmatpush.msra.mxu0 0.0
  %1638 = vmatpush.msra.mxu0 0.0
  %1639 = vmatpush.msra.mxu0 %v1619
  %1640 = vmatmul.f32.gmra.mxu0 %v1622
  %v1641 = vpop.f32.mrf.mxu0
  %v1642 = vadd.f32 0.0, %v1641
  %1643 = vdwg.mxu0
  %1644 = vrot.lane.b32.xlu0 %v1056, 40
  %v1645 = vpop.permute.xlu0 %1644
  %v1648 = vsel %vm201, %v1617, 0
  %1650 = vmatpush.msra.mxu0 0.0
  %1651 = vmatpush.msra.mxu0 0.0
  %1652 = vmatpush.msra.mxu0 0.0
  %1653 = vmatpush.msra.mxu0 0.0
  %1654 = vmatpush.msra.mxu0 0.0
  %1655 = vmatpush.msra.mxu0 0.0
  %1656 = vmatpush.msra.mxu0 0.0
  %1657 = vmatpush.msra.mxu0 0.0
  %1658 = vmatpush.msra.mxu0 0.0
  %1659 = vmatpush.msra.mxu0 0.0
  %1660 = vmatpush.msra.mxu0 0.0
  %1661 = vmatpush.msra.mxu0 0.0
  %1662 = vmatpush.msra.mxu0 0.0
  %1663 = vmatpush.msra.mxu0 0.0
  %1664 = vmatpush.msra.mxu0 0.0
  %1665 = vmatpush.msra.mxu0 %v1645
  %1666 = vmatmul.f32.gmra.mxu0 %v1648
  %v1667 = vpop.f32.mrf.mxu0
  %v1668 = vadd.f32 0.0, %v1667
  %1669 = vdwg.mxu0
  %v1671 = vsel %vm201, %v1642, 0
  %v1674 = vsel %vm201, %v1668, 0
  %1676 = vmatpush.msra.mxu0 0.0
  %1677 = vmatpush.msra.mxu0 0.0
  %1678 = vmatpush.msra.mxu0 0.0
  %1679 = vmatpush.msra.mxu0 0.0
  %1680 = vmatpush.msra.mxu0 0.0
  %1681 = vmatpush.msra.mxu0 0.0
  %1682 = vmatpush.msra.mxu0 0.0
  %1683 = vmatpush.msra.mxu0 0.0
  %1684 = vmatpush.msra.mxu0 0.0
  %1685 = vmatpush.msra.mxu0 0.0
  %1686 = vmatpush.msra.mxu0 0.0
  %1687 = vmatpush.msra.mxu0 0.0
  %1688 = vmatpush.msra.mxu0 0.0
  %1689 = vmatpush.msra.mxu0 0.0
  %1690 = vmatpush.msra.mxu0 0.0
  %1691 = vmatpush.msra.mxu0 %v1062
  %1692 = vmatmul.f32.gmra.mxu0 %v1671
  %v1693 = vpop.f32.mrf.mxu0
  %v1694 = vadd.f32 0.0, %v1693
  %1695 = vmatmul.f32.gmra.mxu0 %v1674
  %v1696 = vpop.f32.mrf.mxu0
  %v1697 = vadd.f32 0.0, %v1696
  %1698 = vdwg.mxu0
  %v1699 = vadd.f32 %v1538, %v1694
  %v1700 = vadd.f32 %v1539, %v1697
  %v1701 = vadd.f32 %v973, %v1699
  %v1702 = vadd.f32 %v974, %v1700
  %s1703 = scalar_lea.vmem %s6, 1
  %v1704 = vld [vmem:[%s1703] sm:$0x1]
  %v1706 = vperm.slane %v1704, 0
  %v1708 = vadd.f32 %v1701, %v1706
  %v1709 = vadd.f32 %v1702, %v1706
  %v1710 = vsel %vm105, %v1708, 0.0
  %1711 = vadd.xlane.f32.xlu0 %v1710
  %v1712 = vpop.xlane.xlu0 %1711
  %v1713 = vsel %vm105, %v1709, 0.0
  %1714 = vadd.xlane.f32.xlu0 %v1713
  %v1715 = vpop.xlane.xlu0 %1714
  %v1716 = vmul.f32 %v1712, %v118
  %v1717 = vmul.f32 %v1715, %v118
  %v1718 = vsub.f32 %v1708, %v1716
  %v1719 = vsub.f32 %v1709, %v1717
  %v1720 = vmul.f32 %v1718, %v1718
  %v1721 = vmul.f32 %v1719, %v1719
  %v1722 = vsel %vm105, %v1720, 0.0
  %1723 = vadd.xlane.f32.xlu0 %v1722
  %v1724 = vpop.xlane.xlu0 %1723
  %v1725 = vsel %vm105, %v1721, 0.0
  %1726 = vadd.xlane.f32.xlu0 %v1725
  %v1727 = vpop.xlane.xlu0 %1726
  %v1728 = vmul.f32 %v1724, %v118
  %v1729 = vmul.f32 %v1727, %v118
  %v1730 = vadd.f32 %v1728, 1e-05
  %v1731 = vadd.f32 %v1729, 1e-05
  %v1732 = vrsqrt.pop %v1730
  %v1733 = vmul.f32 %v1732, %v1730
  %v1734 = vmul.f32 %v1733, %v1732
  %v1735 = vmul.f32 0.5, %v1734
  %v1736 = vsub.f32 1.5, %v1735
  %v1737 = vmul.f32 %v1732, %v1736
  %vm1738 = vweird.f32 %v1730
  %vm1739 = vweird.f32 %v1732
  %vm1740 = vmor %vm1738, %vm1739
  %v1741 = vsel %vm1740, %v1732, %v1737
  %v1742 = vrsqrt.pop %v1731
  %v1743 = vmul.f32 %v1742, %v1731
  %v1744 = vmul.f32 %v1743, %v1742
  %v1745 = vmul.f32 0.5, %v1744
  %v1746 = vsub.f32 1.5, %v1745
  %v1747 = vmul.f32 %v1742, %v1746
  %vm1748 = vweird.f32 %v1731
  %vm1749 = vweird.f32 %v1742
  %vm1750 = vmor %vm1748, %vm1749
  %v1751 = vsel %vm1750, %v1742, %v1747
  %v1752 = vmul.f32 %v1718, %v1741
  %v1753 = vmul.f32 %v1719, %v1751
  %s1754 = scalar_lea.vmem %s7, 32
  %v1755 = vld [vmem:[%s1754] sm:$0xff]
  %v1756 = vld [vmem:[%s1754 + $0x8] sm:$0xff]
  %v1757 = vld [vmem:[%s1754 + $0x10] sm:$0xff]
  %v1758 = vld [vmem:[%s1754 + $0x18] sm:$0xff]
  %s1759 = scalar_lea.vmem %s8, 1
  %v1760 = vld [vmem:[%s1759] sm:$0x1]
  %v1762 = vperm.slane %v1760, 0
  %v1765 = vsel %vm105, %v1752, 0
  %v1768 = vsel %vm105, %v1753, 0
  %1770 = vmatpush.msra.mxu0 0.0
  %1771 = vmatpush.msra.mxu0 0.0
  %1772 = vmatpush.msra.mxu0 0.0
  %1773 = vmatpush.msra.mxu0 0.0
  %1774 = vmatpush.msra.mxu0 0.0
  %1775 = vmatpush.msra.mxu0 0.0
  %1776 = vmatpush.msra.mxu0 0.0
  %1777 = vmatpush.msra.mxu0 0.0
  %1778 = vmatpush.msra.mxu0 0.0
  %1779 = vmatpush.msra.mxu0 0.0
  %1780 = vmatpush.msra.mxu0 0.0
  %1781 = vmatpush.msra.mxu0 0.0
  %1782 = vmatpush.msra.mxu0 %v1758
  %1783 = vmatpush.msra.mxu0 %v1757
  %1784 = vmatpush.msra.mxu0 %v1756
  %1785 = vmatpush.msra.mxu0 %v1755
  %1786 = vmatmul.f32.gmra.mxu0 %v1765
  %v1787 = vpop.f32.mrf.mxu0
  %v1788 = vadd.f32 %v1762, %v1787
  %1789 = vmatmul.f32.gmra.mxu0 %v1768
  %v1790 = vpop.f32.mrf.mxu0
  %v1791 = vadd.f32 %v1762, %v1790
  %1792 = vdwg.mxu0
  %v1793 = vmax.f32 %v1788, 0.0
  %v1794 = vmax.f32 %v1791, 0.0
  %s1795 = scalar_lea.vmem %s9, 128
  %v1796 = vld [vmem:[%s1795] sm:$0xff]
  %v1797 = vld [vmem:[%s1795 + $0x8] sm:$0xff]
  %v1798 = vld [vmem:[%s1795 + $0x10] sm:$0xff]
  %v1799 = vld [vmem:[%s1795 + $0x18] sm:$0xff]
  %v1800 = vld [vmem:[%s1795 + $0x20] sm:$0xff]
  %v1801 = vld [vmem:[%s1795 + $0x28] sm:$0xff]
  %v1802 = vld [vmem:[%s1795 + $0x30] sm:$0xff]
  %v1803 = vld [vmem:[%s1795 + $0x38] sm:$0xff]
  %v1804 = vld [vmem:[%s1795 + $0x40] sm:$0xff]
  %v1805 = vld [vmem:[%s1795 + $0x48] sm:$0xff]
  %v1806 = vld [vmem:[%s1795 + $0x50] sm:$0xff]
  %v1807 = vld [vmem:[%s1795 + $0x58] sm:$0xff]
  %v1808 = vld [vmem:[%s1795 + $0x60] sm:$0xff]
  %v1809 = vld [vmem:[%s1795 + $0x68] sm:$0xff]
  %v1810 = vld [vmem:[%s1795 + $0x70] sm:$0xff]
  %v1811 = vld [vmem:[%s1795 + $0x78] sm:$0xff]
  %1812 = vmatpush.msra.mxu0 %v1811
  %1813 = vmatpush.msra.mxu0 %v1810
  %1814 = vmatpush.msra.mxu0 %v1809
  %1815 = vmatpush.msra.mxu0 %v1808
  %1816 = vmatpush.msra.mxu0 %v1807
  %1817 = vmatpush.msra.mxu0 %v1806
  %1818 = vmatpush.msra.mxu0 %v1805
  %1819 = vmatpush.msra.mxu0 %v1804
  %1820 = vmatpush.msra.mxu0 %v1803
  %1821 = vmatpush.msra.mxu0 %v1802
  %1822 = vmatpush.msra.mxu0 %v1801
  %1823 = vmatpush.msra.mxu0 %v1800
  %1824 = vmatpush.msra.mxu0 %v1799
  %1825 = vmatpush.msra.mxu0 %v1798
  %1826 = vmatpush.msra.mxu0 %v1797
  %1827 = vmatpush.msra.mxu0 %v1796
  %1828 = vmatmul.f32.gmra.mxu0 %v1793
  %v1829 = vpop.f32.mrf.mxu0
  %v1830 = vadd.f32 0.0, %v1829
  %1831 = vmatmul.f32.gmra.mxu0 %v1794
  %v1832 = vpop.f32.mrf.mxu0
  %v1833 = vadd.f32 0.0, %v1832
  %1834 = vdwg.mxu0
  %v1835 = vadd.f32 %v1708, %v1830
  %v1836 = vadd.f32 %v1709, %v1833
  %s1837 = scalar_lea.vmem %s10, 1
  %v1838 = vld [vmem:[%s1837] sm:$0x1]
  %v1840 = vperm.slane %v1838, 0
  %v1842 = vadd.f32 %v1835, %v1840
  %v1843 = vadd.f32 %v1836, %v1840
  %v1844 = vsel %vm105, %v1842, 0.0
  %1845 = vadd.xlane.f32.xlu0 %v1844
  %v1846 = vpop.xlane.xlu0 %1845
  %v1847 = vsel %vm105, %v1843, 0.0
  %1848 = vadd.xlane.f32.xlu0 %v1847
  %v1849 = vpop.xlane.xlu0 %1848
  %v1850 = vmul.f32 %v1846, %v118
  %v1851 = vmul.f32 %v1849, %v118
  %v1852 = vsub.f32 %v1842, %v1850
  %v1853 = vsub.f32 %v1843, %v1851
  %v1854 = vmul.f32 %v1852, %v1852
  %v1855 = vmul.f32 %v1853, %v1853
  %v1856 = vsel %vm105, %v1854, 0.0
  %1857 = vadd.xlane.f32.xlu0 %v1856
  %v1858 = vpop.xlane.xlu0 %1857
  %v1859 = vsel %vm105, %v1855, 0.0
  %1860 = vadd.xlane.f32.xlu0 %v1859
  %v1861 = vpop.xlane.xlu0 %1860
  %v1862 = vmul.f32 %v1858, %v118
  %v1863 = vmul.f32 %v1861, %v118
  %v1864 = vadd.f32 %v1862, 1e-05
  %v1865 = vadd.f32 %v1863, 1e-05
  %v1866 = vrsqrt.pop %v1864
  %v1867 = vmul.f32 %v1866, %v1864
  %v1868 = vmul.f32 %v1867, %v1866
  %v1869 = vmul.f32 0.5, %v1868
  %v1870 = vsub.f32 1.5, %v1869
  %v1871 = vmul.f32 %v1866, %v1870
  %vm1872 = vweird.f32 %v1864
  %vm1873 = vweird.f32 %v1866
  %vm1874 = vmor %vm1872, %vm1873
  %v1875 = vsel %vm1874, %v1866, %v1871
  %v1876 = vrsqrt.pop %v1865
  %v1877 = vmul.f32 %v1876, %v1865
  %v1878 = vmul.f32 %v1877, %v1876
  %v1879 = vmul.f32 0.5, %v1878
  %v1880 = vsub.f32 1.5, %v1879
  %v1881 = vmul.f32 %v1876, %v1880
  %vm1882 = vweird.f32 %v1865
  %vm1883 = vweird.f32 %v1876
  %vm1884 = vmor %vm1882, %vm1883
  %v1885 = vsel %vm1884, %v1876, %v1881
  %v1886 = vmul.f32 %v1852, %v1875
  %v1887 = vmul.f32 %v1853, %v1885
  %s1888 = scalar_lea.vmem %s3, 64
  %v1889 = vld [vmem:[%s1888] sm:$0xff]
  %v1890 = vld [vmem:[%s1888 + $0x8] sm:$0xff]
  %v1891 = vld [vmem:[%s1888 + $0x10] sm:$0xff]
  %v1892 = vld [vmem:[%s1888 + $0x18] sm:$0xff]
  %s1893 = scalar_lea.vmem %s4, 2
  %v1894 = vld [vmem:[%s1893] sm:$0x1]
  %v1896 = vperm.slane %v1894, 0
  %v1899 = vsel %vm105, %v1886, 0
  %v1902 = vsel %vm105, %v1887, 0
  %1904 = vmatpush.msra.mxu0 0.0
  %1905 = vmatpush.msra.mxu0 0.0
  %1906 = vmatpush.msra.mxu0 0.0
  %1907 = vmatpush.msra.mxu0 0.0
  %1908 = vmatpush.msra.mxu0 0.0
  %1909 = vmatpush.msra.mxu0 0.0
  %1910 = vmatpush.msra.mxu0 0.0
  %1911 = vmatpush.msra.mxu0 0.0
  %1912 = vmatpush.msra.mxu0 0.0
  %1913 = vmatpush.msra.mxu0 0.0
  %1914 = vmatpush.msra.mxu0 0.0
  %1915 = vmatpush.msra.mxu0 0.0
  %1916 = vmatpush.msra.mxu0 %v1892
  %1917 = vmatpush.msra.mxu0 %v1891
  %1918 = vmatpush.msra.mxu0 %v1890
  %1919 = vmatpush.msra.mxu0 %v1889
  %1920 = vmatmul.f32.gmra.mxu0 %v1899
  %v1921 = vpop.f32.mrf.mxu0
  %v1922 = vadd.f32 %v1896, %v1921
  %1923 = vmatmul.f32.gmra.mxu0 %v1902
  %v1924 = vpop.f32.mrf.mxu0
  %v1925 = vadd.f32 %v1896, %v1924
  %1926 = vdwg.mxu0
  %s1927 = scalar_lea.vmem %s5, 64
  %v1928 = vld [vmem:[%s1927] sm:$0xff]
  %v1929 = vld [vmem:[%s1927 + $0x8] sm:$0xff]
  %v1930 = vld [vmem:[%s1927 + $0x10] sm:$0xff]
  %v1931 = vld [vmem:[%s1927 + $0x18] sm:$0xff]
  %1933 = vrot.lane.b32.xlu0 %v1922, 96
  %v1934 = vpop.permute.xlu0 %1933
  %v1935 = vsel %vm201, %v1922, 0
  %v1937 = vsel %vm201, %v1934, 0
  %1939 = vmatpush.xpose.msra.mxu0 0.0
  %1940 = vmatpush.xpose.msra.mxu0 0.0
  %1941 = vmatpush.xpose.msra.mxu0 0.0
  %1942 = vmatpush.xpose.msra.mxu0 0.0
  %1943 = vmatpush.xpose.msra.mxu0 0.0
  %1944 = vmatpush.xpose.msra.mxu0 0.0
  %1945 = vmatpush.xpose.msra.mxu0 0.0
  %1946 = vmatpush.xpose.msra.mxu0 0.0
  %1947 = vmatpush.xpose.msra.mxu0 0.0
  %1948 = vmatpush.xpose.msra.mxu0 0.0
  %1949 = vmatpush.xpose.msra.mxu0 0.0
  %1950 = vmatpush.xpose.msra.mxu0 0.0
  %1951 = vmatpush.xpose.msra.mxu0 0.0
  %1952 = vmatpush.xpose.msra.mxu0 0.0
  %1953 = vmatpush.xpose.msra.mxu0 0.0
  %1954 = vmatpush.xpose.msra.mxu0 %v1937
  %1955 = vmatmul.f32.gmra.mxu0 %v1935
  %v1956 = vpop.f32.mrf.mxu0
  %v1957 = vadd.f32 %v104, %v1956
  %1958 = vdwg.mxu0
  %1960 = vrot.lane.b32.xlu0 %v1925, 96
  %v1961 = vpop.permute.xlu0 %1960
  %v1962 = vsel %vm201, %v1925, 0
  %v1964 = vsel %vm201, %v1961, 0
  %1966 = vmatpush.xpose.msra.mxu0 0.0
  %1967 = vmatpush.xpose.msra.mxu0 0.0
  %1968 = vmatpush.xpose.msra.mxu0 0.0
  %1969 = vmatpush.xpose.msra.mxu0 0.0
  %1970 = vmatpush.xpose.msra.mxu0 0.0
  %1971 = vmatpush.xpose.msra.mxu0 0.0
  %1972 = vmatpush.xpose.msra.mxu0 0.0
  %1973 = vmatpush.xpose.msra.mxu0 0.0
  %1974 = vmatpush.xpose.msra.mxu0 0.0
  %1975 = vmatpush.xpose.msra.mxu0 0.0
  %1976 = vmatpush.xpose.msra.mxu0 0.0
  %1977 = vmatpush.xpose.msra.mxu0 0.0
  %1978 = vmatpush.xpose.msra.mxu0 0.0
  %1979 = vmatpush.xpose.msra.mxu0 0.0
  %1980 = vmatpush.xpose.msra.mxu0 0.0
  %1981 = vmatpush.xpose.msra.mxu0 %v1964
  %1982 = vmatmul.f32.gmra.mxu0 %v1962
  %v1983 = vpop.f32.mrf.mxu0
  %v1984 = vadd.f32 %v104, %v1983
  %1985 = vdwg.mxu0
  %v1986 = vsel %vm201, %v1957, -inf
  %1987 = vmax.xlane.f32.xlu0 %v1986
  %v1988 = vpop.xlane.xlu0 %1987
  %v1989 = vsel %vm201, %v1984, -inf
  %1990 = vmax.xlane.f32.xlu0 %v1989
  %v1991 = vpop.xlane.xlu0 %1990
  %v1992 = vsub.f32 %v1957, %v1988
  %v1993 = vsub.f32 %v1984, %v1991
  %v1994 = vmul.f32 %v1992, 1.442695
  %v1995 = vpow.pop %v1994
  %v1996 = vmul.f32 %v1993, 1.442695
  %v1997 = vpow.pop %v1996
  %v1998 = vsel %vm201, %v1995, 0.0
  %1999 = vadd.xlane.f32.xlu0 %v1998
  %v2000 = vpop.xlane.xlu0 %1999
  %v2001 = vsel %vm201, %v1997, 0.0
  %2002 = vadd.xlane.f32.xlu0 %v2001
  %v2003 = vpop.xlane.xlu0 %2002
  %v2004 = vrcp.pop %v2000
  %v2005 = vrcp.pop %v2003
  %v2006 = vmul.f32 %v1995, %v2004
  %v2007 = vmul.f32 %v1997, %v2005
  %2008 = vrot.lane.b32.xlu0 %v1922, 64
  %v2009 = vpop.permute.xlu0 %2008
  %v2012 = vsel %vm201, %v2006, 0
  %2014 = vmatpush.msra.mxu0 0.0
  %2015 = vmatpush.msra.mxu0 0.0
  %2016 = vmatpush.msra.mxu0 0.0
  %2017 = vmatpush.msra.mxu0 0.0
  %2018 = vmatpush.msra.mxu0 0.0
  %2019 = vmatpush.msra.mxu0 0.0
  %2020 = vmatpush.msra.mxu0 0.0
  %2021 = vmatpush.msra.mxu0 0.0
  %2022 = vmatpush.msra.mxu0 0.0
  %2023 = vmatpush.msra.mxu0 0.0
  %2024 = vmatpush.msra.mxu0 0.0
  %2025 = vmatpush.msra.mxu0 0.0
  %2026 = vmatpush.msra.mxu0 0.0
  %2027 = vmatpush.msra.mxu0 0.0
  %2028 = vmatpush.msra.mxu0 0.0
  %2029 = vmatpush.msra.mxu0 %v2009
  %2030 = vmatmul.f32.gmra.mxu0 %v2012
  %v2031 = vpop.f32.mrf.mxu0
  %v2032 = vadd.f32 0.0, %v2031
  %2033 = vdwg.mxu0
  %2034 = vrot.lane.b32.xlu0 %v1925, 64
  %v2035 = vpop.permute.xlu0 %2034
  %v2038 = vsel %vm201, %v2007, 0
  %2040 = vmatpush.msra.mxu0 0.0
  %2041 = vmatpush.msra.mxu0 0.0
  %2042 = vmatpush.msra.mxu0 0.0
  %2043 = vmatpush.msra.mxu0 0.0
  %2044 = vmatpush.msra.mxu0 0.0
  %2045 = vmatpush.msra.mxu0 0.0
  %2046 = vmatpush.msra.mxu0 0.0
  %2047 = vmatpush.msra.mxu0 0.0
  %2048 = vmatpush.msra.mxu0 0.0
  %2049 = vmatpush.msra.mxu0 0.0
  %2050 = vmatpush.msra.mxu0 0.0
  %2051 = vmatpush.msra.mxu0 0.0
  %2052 = vmatpush.msra.mxu0 0.0
  %2053 = vmatpush.msra.mxu0 0.0
  %2054 = vmatpush.msra.mxu0 0.0
  %2055 = vmatpush.msra.mxu0 %v2035
  %2056 = vmatmul.f32.gmra.mxu0 %v2038
  %v2057 = vpop.f32.mrf.mxu0
  %v2058 = vadd.f32 0.0, %v2057
  %2059 = vdwg.mxu0
  %2060 = vrot.lane.b32.xlu0 %v1922, 120
  %v2061 = vpop.permute.xlu0 %2060
  %2062 = vrot.lane.b32.xlu0 %v1922, 88
  %v2063 = vpop.permute.xlu0 %2062
  %v2064 = vsel %vm201, %v2061, 0
  %v2066 = vsel %vm201, %v2063, 0
  %2068 = vmatpush.xpose.msra.mxu0 0.0
  %2069 = vmatpush.xpose.msra.mxu0 0.0
  %2070 = vmatpush.xpose.msra.mxu0 0.0
  %2071 = vmatpush.xpose.msra.mxu0 0.0
  %2072 = vmatpush.xpose.msra.mxu0 0.0
  %2073 = vmatpush.xpose.msra.mxu0 0.0
  %2074 = vmatpush.xpose.msra.mxu0 0.0
  %2075 = vmatpush.xpose.msra.mxu0 0.0
  %2076 = vmatpush.xpose.msra.mxu0 0.0
  %2077 = vmatpush.xpose.msra.mxu0 0.0
  %2078 = vmatpush.xpose.msra.mxu0 0.0
  %2079 = vmatpush.xpose.msra.mxu0 0.0
  %2080 = vmatpush.xpose.msra.mxu0 0.0
  %2081 = vmatpush.xpose.msra.mxu0 0.0
  %2082 = vmatpush.xpose.msra.mxu0 0.0
  %2083 = vmatpush.xpose.msra.mxu0 %v2066
  %2084 = vmatmul.f32.gmra.mxu0 %v2064
  %v2085 = vpop.f32.mrf.mxu0
  %v2086 = vadd.f32 %v104, %v2085
  %2087 = vdwg.mxu0
  %2088 = vrot.lane.b32.xlu0 %v1925, 120
  %v2089 = vpop.permute.xlu0 %2088
  %2090 = vrot.lane.b32.xlu0 %v1925, 88
  %v2091 = vpop.permute.xlu0 %2090
  %v2092 = vsel %vm201, %v2089, 0
  %v2094 = vsel %vm201, %v2091, 0
  %2096 = vmatpush.xpose.msra.mxu0 0.0
  %2097 = vmatpush.xpose.msra.mxu0 0.0
  %2098 = vmatpush.xpose.msra.mxu0 0.0
  %2099 = vmatpush.xpose.msra.mxu0 0.0
  %2100 = vmatpush.xpose.msra.mxu0 0.0
  %2101 = vmatpush.xpose.msra.mxu0 0.0
  %2102 = vmatpush.xpose.msra.mxu0 0.0
  %2103 = vmatpush.xpose.msra.mxu0 0.0
  %2104 = vmatpush.xpose.msra.mxu0 0.0
  %2105 = vmatpush.xpose.msra.mxu0 0.0
  %2106 = vmatpush.xpose.msra.mxu0 0.0
  %2107 = vmatpush.xpose.msra.mxu0 0.0
  %2108 = vmatpush.xpose.msra.mxu0 0.0
  %2109 = vmatpush.xpose.msra.mxu0 0.0
  %2110 = vmatpush.xpose.msra.mxu0 0.0
  %2111 = vmatpush.xpose.msra.mxu0 %v2094
  %2112 = vmatmul.f32.gmra.mxu0 %v2092
  %v2113 = vpop.f32.mrf.mxu0
  %v2114 = vadd.f32 %v104, %v2113
  %2115 = vdwg.mxu0
  %v2116 = vsel %vm201, %v2086, -inf
  %2117 = vmax.xlane.f32.xlu0 %v2116
  %v2118 = vpop.xlane.xlu0 %2117
  %v2119 = vsel %vm201, %v2114, -inf
  %2120 = vmax.xlane.f32.xlu0 %v2119
  %v2121 = vpop.xlane.xlu0 %2120
  %v2122 = vsub.f32 %v2086, %v2118
  %v2123 = vsub.f32 %v2114, %v2121
  %v2124 = vmul.f32 %v2122, 1.442695
  %v2125 = vpow.pop %v2124
  %v2126 = vmul.f32 %v2123, 1.442695
  %v2127 = vpow.pop %v2126
  %v2128 = vsel %vm201, %v2125, 0.0
  %2129 = vadd.xlane.f32.xlu0 %v2128
  %v2130 = vpop.xlane.xlu0 %2129
  %v2131 = vsel %vm201, %v2127, 0.0
  %2132 = vadd.xlane.f32.xlu0 %v2131
  %v2133 = vpop.xlane.xlu0 %2132
  %v2134 = vrcp.pop %v2130
  %v2135 = vrcp.pop %v2133
  %v2136 = vmul.f32 %v2125, %v2134
  %v2137 = vmul.f32 %v2127, %v2135
  %2138 = vrot.lane.b32.xlu0 %v1922, 56
  %v2139 = vpop.permute.xlu0 %2138
  %v2142 = vsel %vm201, %v2136, 0
  %2144 = vmatpush.msra.mxu0 0.0
  %2145 = vmatpush.msra.mxu0 0.0
  %2146 = vmatpush.msra.mxu0 0.0
  %2147 = vmatpush.msra.mxu0 0.0
  %2148 = vmatpush.msra.mxu0 0.0
  %2149 = vmatpush.msra.mxu0 0.0
  %2150 = vmatpush.msra.mxu0 0.0
  %2151 = vmatpush.msra.mxu0 0.0
  %2152 = vmatpush.msra.mxu0 0.0
  %2153 = vmatpush.msra.mxu0 0.0
  %2154 = vmatpush.msra.mxu0 0.0
  %2155 = vmatpush.msra.mxu0 0.0
  %2156 = vmatpush.msra.mxu0 0.0
  %2157 = vmatpush.msra.mxu0 0.0
  %2158 = vmatpush.msra.mxu0 0.0
  %2159 = vmatpush.msra.mxu0 %v2139
  %2160 = vmatmul.f32.gmra.mxu0 %v2142
  %v2161 = vpop.f32.mrf.mxu0
  %v2162 = vadd.f32 0.0, %v2161
  %2163 = vdwg.mxu0
  %2164 = vrot.lane.b32.xlu0 %v1925, 56
  %v2165 = vpop.permute.xlu0 %2164
  %v2168 = vsel %vm201, %v2137, 0
  %2170 = vmatpush.msra.mxu0 0.0
  %2171 = vmatpush.msra.mxu0 0.0
  %2172 = vmatpush.msra.mxu0 0.0
  %2173 = vmatpush.msra.mxu0 0.0
  %2174 = vmatpush.msra.mxu0 0.0
  %2175 = vmatpush.msra.mxu0 0.0
  %2176 = vmatpush.msra.mxu0 0.0
  %2177 = vmatpush.msra.mxu0 0.0
  %2178 = vmatpush.msra.mxu0 0.0
  %2179 = vmatpush.msra.mxu0 0.0
  %2180 = vmatpush.msra.mxu0 0.0
  %2181 = vmatpush.msra.mxu0 0.0
  %2182 = vmatpush.msra.mxu0 0.0
  %2183 = vmatpush.msra.mxu0 0.0
  %2184 = vmatpush.msra.mxu0 0.0
  %2185 = vmatpush.msra.mxu0 %v2165
  %2186 = vmatmul.f32.gmra.mxu0 %v2168
  %v2187 = vpop.f32.mrf.mxu0
  %v2188 = vadd.f32 0.0, %v2187
  %2189 = vdwg.mxu0
  %v2191 = vsel %vm201, %v2162, 0
  %v2194 = vsel %vm201, %v2188, 0
  %2196 = vmatpush.msra.mxu0 0.0
  %2197 = vmatpush.msra.mxu0 0.0
  %2198 = vmatpush.msra.mxu0 0.0
  %2199 = vmatpush.msra.mxu0 0.0
  %2200 = vmatpush.msra.mxu0 0.0
  %2201 = vmatpush.msra.mxu0 0.0
  %2202 = vmatpush.msra.mxu0 0.0
  %2203 = vmatpush.msra.mxu0 0.0
  %2204 = vmatpush.msra.mxu0 0.0
  %2205 = vmatpush.msra.mxu0 0.0
  %2206 = vmatpush.msra.mxu0 0.0
  %2207 = vmatpush.msra.mxu0 0.0
  %2208 = vmatpush.msra.mxu0 0.0
  %2209 = vmatpush.msra.mxu0 0.0
  %2210 = vmatpush.msra.mxu0 0.0
  %2211 = vmatpush.msra.mxu0 %v1929
  %2212 = vmatmul.f32.gmra.mxu0 %v2191
  %v2213 = vpop.f32.mrf.mxu0
  %v2214 = vadd.f32 0.0, %v2213
  %2215 = vmatmul.f32.gmra.mxu0 %v2194
  %v2216 = vpop.f32.mrf.mxu0
  %v2217 = vadd.f32 0.0, %v2216
  %2218 = vdwg.mxu0
  %v2220 = vsel %vm201, %v2032, 0
  %v2223 = vsel %vm201, %v2058, 0
  %2225 = vmatpush.msra.mxu0 0.0
  %2226 = vmatpush.msra.mxu0 0.0
  %2227 = vmatpush.msra.mxu0 0.0
  %2228 = vmatpush.msra.mxu0 0.0
  %2229 = vmatpush.msra.mxu0 0.0
  %2230 = vmatpush.msra.mxu0 0.0
  %2231 = vmatpush.msra.mxu0 0.0
  %2232 = vmatpush.msra.mxu0 0.0
  %2233 = vmatpush.msra.mxu0 0.0
  %2234 = vmatpush.msra.mxu0 0.0
  %2235 = vmatpush.msra.mxu0 0.0
  %2236 = vmatpush.msra.mxu0 0.0
  %2237 = vmatpush.msra.mxu0 0.0
  %2238 = vmatpush.msra.mxu0 0.0
  %2239 = vmatpush.msra.mxu0 0.0
  %2240 = vmatpush.msra.mxu0 %v1928
  %2241 = vmatmul.f32.gmra.mxu0 %v2220
  %v2242 = vpop.f32.mrf.mxu0
  %v2243 = vadd.f32 %v2214, %v2242
  %2244 = vmatmul.f32.gmra.mxu0 %v2223
  %v2245 = vpop.f32.mrf.mxu0
  %v2246 = vadd.f32 %v2217, %v2245
  %2247 = vdwg.mxu0
  %2248 = vrot.lane.b32.xlu0 %v1922, 112
  %v2249 = vpop.permute.xlu0 %2248
  %2250 = vrot.lane.b32.xlu0 %v1922, 80
  %v2251 = vpop.permute.xlu0 %2250
  %v2252 = vsel %vm201, %v2249, 0
  %v2254 = vsel %vm201, %v2251, 0
  %2256 = vmatpush.xpose.msra.mxu0 0.0
  %2257 = vmatpush.xpose.msra.mxu0 0.0
  %2258 = vmatpush.xpose.msra.mxu0 0.0
  %2259 = vmatpush.xpose.msra.mxu0 0.0
  %2260 = vmatpush.xpose.msra.mxu0 0.0
  %2261 = vmatpush.xpose.msra.mxu0 0.0
  %2262 = vmatpush.xpose.msra.mxu0 0.0
  %2263 = vmatpush.xpose.msra.mxu0 0.0
  %2264 = vmatpush.xpose.msra.mxu0 0.0
  %2265 = vmatpush.xpose.msra.mxu0 0.0
  %2266 = vmatpush.xpose.msra.mxu0 0.0
  %2267 = vmatpush.xpose.msra.mxu0 0.0
  %2268 = vmatpush.xpose.msra.mxu0 0.0
  %2269 = vmatpush.xpose.msra.mxu0 0.0
  %2270 = vmatpush.xpose.msra.mxu0 0.0
  %2271 = vmatpush.xpose.msra.mxu0 %v2254
  %2272 = vmatmul.f32.gmra.mxu0 %v2252
  %v2273 = vpop.f32.mrf.mxu0
  %v2274 = vadd.f32 %v104, %v2273
  %2275 = vdwg.mxu0
  %2276 = vrot.lane.b32.xlu0 %v1925, 112
  %v2277 = vpop.permute.xlu0 %2276
  %2278 = vrot.lane.b32.xlu0 %v1925, 80
  %v2279 = vpop.permute.xlu0 %2278
  %v2280 = vsel %vm201, %v2277, 0
  %v2282 = vsel %vm201, %v2279, 0
  %2284 = vmatpush.xpose.msra.mxu0 0.0
  %2285 = vmatpush.xpose.msra.mxu0 0.0
  %2286 = vmatpush.xpose.msra.mxu0 0.0
  %2287 = vmatpush.xpose.msra.mxu0 0.0
  %2288 = vmatpush.xpose.msra.mxu0 0.0
  %2289 = vmatpush.xpose.msra.mxu0 0.0
  %2290 = vmatpush.xpose.msra.mxu0 0.0
  %2291 = vmatpush.xpose.msra.mxu0 0.0
  %2292 = vmatpush.xpose.msra.mxu0 0.0
  %2293 = vmatpush.xpose.msra.mxu0 0.0
  %2294 = vmatpush.xpose.msra.mxu0 0.0
  %2295 = vmatpush.xpose.msra.mxu0 0.0
  %2296 = vmatpush.xpose.msra.mxu0 0.0
  %2297 = vmatpush.xpose.msra.mxu0 0.0
  %2298 = vmatpush.xpose.msra.mxu0 0.0
  %2299 = vmatpush.xpose.msra.mxu0 %v2282
  %2300 = vmatmul.f32.gmra.mxu0 %v2280
  %v2301 = vpop.f32.mrf.mxu0
  %v2302 = vadd.f32 %v104, %v2301
  %2303 = vdwg.mxu0
  %v2304 = vsel %vm201, %v2274, -inf
  %2305 = vmax.xlane.f32.xlu0 %v2304
  %v2306 = vpop.xlane.xlu0 %2305
  %v2307 = vsel %vm201, %v2302, -inf
  %2308 = vmax.xlane.f32.xlu0 %v2307
  %v2309 = vpop.xlane.xlu0 %2308
  %v2310 = vsub.f32 %v2274, %v2306
  %v2311 = vsub.f32 %v2302, %v2309
  %v2312 = vmul.f32 %v2310, 1.442695
  %v2313 = vpow.pop %v2312
  %v2314 = vmul.f32 %v2311, 1.442695
  %v2315 = vpow.pop %v2314
  %v2316 = vsel %vm201, %v2313, 0.0
  %2317 = vadd.xlane.f32.xlu0 %v2316
  %v2318 = vpop.xlane.xlu0 %2317
  %v2319 = vsel %vm201, %v2315, 0.0
  %2320 = vadd.xlane.f32.xlu0 %v2319
  %v2321 = vpop.xlane.xlu0 %2320
  %v2322 = vrcp.pop %v2318
  %v2323 = vrcp.pop %v2321
  %v2324 = vmul.f32 %v2313, %v2322
  %v2325 = vmul.f32 %v2315, %v2323
  %2326 = vrot.lane.b32.xlu0 %v1922, 48
  %v2327 = vpop.permute.xlu0 %2326
  %v2330 = vsel %vm201, %v2324, 0
  %2332 = vmatpush.msra.mxu0 0.0
  %2333 = vmatpush.msra.mxu0 0.0
  %2334 = vmatpush.msra.mxu0 0.0
  %2335 = vmatpush.msra.mxu0 0.0
  %2336 = vmatpush.msra.mxu0 0.0
  %2337 = vmatpush.msra.mxu0 0.0
  %2338 = vmatpush.msra.mxu0 0.0
  %2339 = vmatpush.msra.mxu0 0.0
  %2340 = vmatpush.msra.mxu0 0.0
  %2341 = vmatpush.msra.mxu0 0.0
  %2342 = vmatpush.msra.mxu0 0.0
  %2343 = vmatpush.msra.mxu0 0.0
  %2344 = vmatpush.msra.mxu0 0.0
  %2345 = vmatpush.msra.mxu0 0.0
  %2346 = vmatpush.msra.mxu0 0.0
  %2347 = vmatpush.msra.mxu0 %v2327
  %2348 = vmatmul.f32.gmra.mxu0 %v2330
  %v2349 = vpop.f32.mrf.mxu0
  %v2350 = vadd.f32 0.0, %v2349
  %2351 = vdwg.mxu0
  %2352 = vrot.lane.b32.xlu0 %v1925, 48
  %v2353 = vpop.permute.xlu0 %2352
  %v2356 = vsel %vm201, %v2325, 0
  %2358 = vmatpush.msra.mxu0 0.0
  %2359 = vmatpush.msra.mxu0 0.0
  %2360 = vmatpush.msra.mxu0 0.0
  %2361 = vmatpush.msra.mxu0 0.0
  %2362 = vmatpush.msra.mxu0 0.0
  %2363 = vmatpush.msra.mxu0 0.0
  %2364 = vmatpush.msra.mxu0 0.0
  %2365 = vmatpush.msra.mxu0 0.0
  %2366 = vmatpush.msra.mxu0 0.0
  %2367 = vmatpush.msra.mxu0 0.0
  %2368 = vmatpush.msra.mxu0 0.0
  %2369 = vmatpush.msra.mxu0 0.0
  %2370 = vmatpush.msra.mxu0 0.0
  %2371 = vmatpush.msra.mxu0 0.0
  %2372 = vmatpush.msra.mxu0 0.0
  %2373 = vmatpush.msra.mxu0 %v2353
  %2374 = vmatmul.f32.gmra.mxu0 %v2356
  %v2375 = vpop.f32.mrf.mxu0
  %v2376 = vadd.f32 0.0, %v2375
  %2377 = vdwg.mxu0
  %v2379 = vsel %vm201, %v2350, 0
  %v2382 = vsel %vm201, %v2376, 0
  %2384 = vmatpush.msra.mxu0 0.0
  %2385 = vmatpush.msra.mxu0 0.0
  %2386 = vmatpush.msra.mxu0 0.0
  %2387 = vmatpush.msra.mxu0 0.0
  %2388 = vmatpush.msra.mxu0 0.0
  %2389 = vmatpush.msra.mxu0 0.0
  %2390 = vmatpush.msra.mxu0 0.0
  %2391 = vmatpush.msra.mxu0 0.0
  %2392 = vmatpush.msra.mxu0 0.0
  %2393 = vmatpush.msra.mxu0 0.0
  %2394 = vmatpush.msra.mxu0 0.0
  %2395 = vmatpush.msra.mxu0 0.0
  %2396 = vmatpush.msra.mxu0 0.0
  %2397 = vmatpush.msra.mxu0 0.0
  %2398 = vmatpush.msra.mxu0 0.0
  %2399 = vmatpush.msra.mxu0 %v1930
  %2400 = vmatmul.f32.gmra.mxu0 %v2379
  %v2401 = vpop.f32.mrf.mxu0
  %v2402 = vadd.f32 0.0, %v2401
  %2403 = vmatmul.f32.gmra.mxu0 %v2382
  %v2404 = vpop.f32.mrf.mxu0
  %v2405 = vadd.f32 0.0, %v2404
  %2406 = vdwg.mxu0
  %v2407 = vadd.f32 %v2243, %v2402
  %v2408 = vadd.f32 %v2246, %v2405
  %2409 = vrot.lane.b32.xlu0 %v1922, 104
  %v2410 = vpop.permute.xlu0 %2409
  %2411 = vrot.lane.b32.xlu0 %v1922, 72
  %v2412 = vpop.permute.xlu0 %2411
  %v2413 = vsel %vm201, %v2410, 0
  %v2415 = vsel %vm201, %v2412, 0
  %2417 = vmatpush.xpose.msra.mxu0 0.0
  %2418 = vmatpush.xpose.msra.mxu0 0.0
  %2419 = vmatpush.xpose.msra.mxu0 0.0
  %2420 = vmatpush.xpose.msra.mxu0 0.0
  %2421 = vmatpush.xpose.msra.mxu0 0.0
  %2422 = vmatpush.xpose.msra.mxu0 0.0
  %2423 = vmatpush.xpose.msra.mxu0 0.0
  %2424 = vmatpush.xpose.msra.mxu0 0.0
  %2425 = vmatpush.xpose.msra.mxu0 0.0
  %2426 = vmatpush.xpose.msra.mxu0 0.0
  %2427 = vmatpush.xpose.msra.mxu0 0.0
  %2428 = vmatpush.xpose.msra.mxu0 0.0
  %2429 = vmatpush.xpose.msra.mxu0 0.0
  %2430 = vmatpush.xpose.msra.mxu0 0.0
  %2431 = vmatpush.xpose.msra.mxu0 0.0
  %2432 = vmatpush.xpose.msra.mxu0 %v2415
  %2433 = vmatmul.f32.gmra.mxu0 %v2413
  %v2434 = vpop.f32.mrf.mxu0
  %v2435 = vadd.f32 %v104, %v2434
  %2436 = vdwg.mxu0
  %2437 = vrot.lane.b32.xlu0 %v1925, 104
  %v2438 = vpop.permute.xlu0 %2437
  %2439 = vrot.lane.b32.xlu0 %v1925, 72
  %v2440 = vpop.permute.xlu0 %2439
  %v2441 = vsel %vm201, %v2438, 0
  %v2443 = vsel %vm201, %v2440, 0
  %2445 = vmatpush.xpose.msra.mxu0 0.0
  %2446 = vmatpush.xpose.msra.mxu0 0.0
  %2447 = vmatpush.xpose.msra.mxu0 0.0
  %2448 = vmatpush.xpose.msra.mxu0 0.0
  %2449 = vmatpush.xpose.msra.mxu0 0.0
  %2450 = vmatpush.xpose.msra.mxu0 0.0
  %2451 = vmatpush.xpose.msra.mxu0 0.0
  %2452 = vmatpush.xpose.msra.mxu0 0.0
  %2453 = vmatpush.xpose.msra.mxu0 0.0
  %2454 = vmatpush.xpose.msra.mxu0 0.0
  %2455 = vmatpush.xpose.msra.mxu0 0.0
  %2456 = vmatpush.xpose.msra.mxu0 0.0
  %2457 = vmatpush.xpose.msra.mxu0 0.0
  %2458 = vmatpush.xpose.msra.mxu0 0.0
  %2459 = vmatpush.xpose.msra.mxu0 0.0
  %2460 = vmatpush.xpose.msra.mxu0 %v2443
  %2461 = vmatmul.f32.gmra.mxu0 %v2441
  %v2462 = vpop.f32.mrf.mxu0
  %v2463 = vadd.f32 %v104, %v2462
  %2464 = vdwg.mxu0
  %v2465 = vsel %vm201, %v2435, -inf
  %2466 = vmax.xlane.f32.xlu0 %v2465
  %v2467 = vpop.xlane.xlu0 %2466
  %v2468 = vsel %vm201, %v2463, -inf
  %2469 = vmax.xlane.f32.xlu0 %v2468
  %v2470 = vpop.xlane.xlu0 %2469
  %v2471 = vsub.f32 %v2435, %v2467
  %v2472 = vsub.f32 %v2463, %v2470
  %v2473 = vmul.f32 %v2471, 1.442695
  %v2474 = vpow.pop %v2473
  %v2475 = vmul.f32 %v2472, 1.442695
  %v2476 = vpow.pop %v2475
  %v2477 = vsel %vm201, %v2474, 0.0
  %2478 = vadd.xlane.f32.xlu0 %v2477
  %v2479 = vpop.xlane.xlu0 %2478
  %v2480 = vsel %vm201, %v2476, 0.0
  %2481 = vadd.xlane.f32.xlu0 %v2480
  %v2482 = vpop.xlane.xlu0 %2481
  %v2483 = vrcp.pop %v2479
  %v2484 = vrcp.pop %v2482
  %v2485 = vmul.f32 %v2474, %v2483
  %v2486 = vmul.f32 %v2476, %v2484
  %2487 = vrot.lane.b32.xlu0 %v1922, 40
  %v2488 = vpop.permute.xlu0 %2487
  %v2491 = vsel %vm201, %v2485, 0
  %2493 = vmatpush.msra.mxu0 0.0
  %2494 = vmatpush.msra.mxu0 0.0
  %2495 = vmatpush.msra.mxu0 0.0
  %2496 = vmatpush.msra.mxu0 0.0
  %2497 = vmatpush.msra.mxu0 0.0
  %2498 = vmatpush.msra.mxu0 0.0
  %2499 = vmatpush.msra.mxu0 0.0
  %2500 = vmatpush.msra.mxu0 0.0
  %2501 = vmatpush.msra.mxu0 0.0
  %2502 = vmatpush.msra.mxu0 0.0
  %2503 = vmatpush.msra.mxu0 0.0
  %2504 = vmatpush.msra.mxu0 0.0
  %2505 = vmatpush.msra.mxu0 0.0
  %2506 = vmatpush.msra.mxu0 0.0
  %2507 = vmatpush.msra.mxu0 0.0
  %2508 = vmatpush.msra.mxu0 %v2488
  %2509 = vmatmul.f32.gmra.mxu0 %v2491
  %v2510 = vpop.f32.mrf.mxu0
  %v2511 = vadd.f32 0.0, %v2510
  %2512 = vdwg.mxu0
  %2513 = vrot.lane.b32.xlu0 %v1925, 40
  %v2514 = vpop.permute.xlu0 %2513
  %v2517 = vsel %vm201, %v2486, 0
  %2519 = vmatpush.msra.mxu0 0.0
  %2520 = vmatpush.msra.mxu0 0.0
  %2521 = vmatpush.msra.mxu0 0.0
  %2522 = vmatpush.msra.mxu0 0.0
  %2523 = vmatpush.msra.mxu0 0.0
  %2524 = vmatpush.msra.mxu0 0.0
  %2525 = vmatpush.msra.mxu0 0.0
  %2526 = vmatpush.msra.mxu0 0.0
  %2527 = vmatpush.msra.mxu0 0.0
  %2528 = vmatpush.msra.mxu0 0.0
  %2529 = vmatpush.msra.mxu0 0.0
  %2530 = vmatpush.msra.mxu0 0.0
  %2531 = vmatpush.msra.mxu0 0.0
  %2532 = vmatpush.msra.mxu0 0.0
  %2533 = vmatpush.msra.mxu0 0.0
  %2534 = vmatpush.msra.mxu0 %v2514
  %2535 = vmatmul.f32.gmra.mxu0 %v2517
  %v2536 = vpop.f32.mrf.mxu0
  %v2537 = vadd.f32 0.0, %v2536
  %2538 = vdwg.mxu0
  %v2540 = vsel %vm201, %v2511, 0
  %v2543 = vsel %vm201, %v2537, 0
  %2545 = vmatpush.msra.mxu0 0.0
  %2546 = vmatpush.msra.mxu0 0.0
  %2547 = vmatpush.msra.mxu0 0.0
  %2548 = vmatpush.msra.mxu0 0.0
  %2549 = vmatpush.msra.mxu0 0.0
  %2550 = vmatpush.msra.mxu0 0.0
  %2551 = vmatpush.msra.mxu0 0.0
  %2552 = vmatpush.msra.mxu0 0.0
  %2553 = vmatpush.msra.mxu0 0.0
  %2554 = vmatpush.msra.mxu0 0.0
  %2555 = vmatpush.msra.mxu0 0.0
  %2556 = vmatpush.msra.mxu0 0.0
  %2557 = vmatpush.msra.mxu0 0.0
  %2558 = vmatpush.msra.mxu0 0.0
  %2559 = vmatpush.msra.mxu0 0.0
  %2560 = vmatpush.msra.mxu0 %v1931
  %2561 = vmatmul.f32.gmra.mxu0 %v2540
  %v2562 = vpop.f32.mrf.mxu0
  %v2563 = vadd.f32 0.0, %v2562
  %2564 = vmatmul.f32.gmra.mxu0 %v2543
  %v2565 = vpop.f32.mrf.mxu0
  %v2566 = vadd.f32 0.0, %v2565
  %2567 = vdwg.mxu0
  %v2568 = vadd.f32 %v2407, %v2563
  %v2569 = vadd.f32 %v2408, %v2566
  %v2570 = vadd.f32 %v1842, %v2568
  %v2571 = vadd.f32 %v1843, %v2569
  %s2572 = scalar_lea.vmem %s6, 2
  %v2573 = vld [vmem:[%s2572] sm:$0x1]
  %v2575 = vperm.slane %v2573, 0
  %v2577 = vadd.f32 %v2570, %v2575
  %v2578 = vadd.f32 %v2571, %v2575
  %v2579 = vsel %vm105, %v2577, 0.0
  %2580 = vadd.xlane.f32.xlu0 %v2579
  %v2581 = vpop.xlane.xlu0 %2580
  %v2582 = vsel %vm105, %v2578, 0.0
  %2583 = vadd.xlane.f32.xlu0 %v2582
  %v2584 = vpop.xlane.xlu0 %2583
  %v2585 = vmul.f32 %v2581, %v118
  %v2586 = vmul.f32 %v2584, %v118
  %v2587 = vsub.f32 %v2577, %v2585
  %v2588 = vsub.f32 %v2578, %v2586
  %v2589 = vmul.f32 %v2587, %v2587
  %v2590 = vmul.f32 %v2588, %v2588
  %v2591 = vsel %vm105, %v2589, 0.0
  %2592 = vadd.xlane.f32.xlu0 %v2591
  %v2593 = vpop.xlane.xlu0 %2592
  %v2594 = vsel %vm105, %v2590, 0.0
  %2595 = vadd.xlane.f32.xlu0 %v2594
  %v2596 = vpop.xlane.xlu0 %2595
  %v2597 = vmul.f32 %v2593, %v118
  %v2598 = vmul.f32 %v2596, %v118
  %v2599 = vadd.f32 %v2597, 1e-05
  %v2600 = vadd.f32 %v2598, 1e-05
  %v2601 = vrsqrt.pop %v2599
  %v2602 = vmul.f32 %v2601, %v2599
  %v2603 = vmul.f32 %v2602, %v2601
  %v2604 = vmul.f32 0.5, %v2603
  %v2605 = vsub.f32 1.5, %v2604
  %v2606 = vmul.f32 %v2601, %v2605
  %vm2607 = vweird.f32 %v2599
  %vm2608 = vweird.f32 %v2601
  %vm2609 = vmor %vm2607, %vm2608
  %v2610 = vsel %vm2609, %v2601, %v2606
  %v2611 = vrsqrt.pop %v2600
  %v2612 = vmul.f32 %v2611, %v2600
  %v2613 = vmul.f32 %v2612, %v2611
  %v2614 = vmul.f32 0.5, %v2613
  %v2615 = vsub.f32 1.5, %v2614
  %v2616 = vmul.f32 %v2611, %v2615
  %vm2617 = vweird.f32 %v2600
  %vm2618 = vweird.f32 %v2611
  %vm2619 = vmor %vm2617, %vm2618
  %v2620 = vsel %vm2619, %v2611, %v2616
  %v2621 = vmul.f32 %v2587, %v2610
  %v2622 = vmul.f32 %v2588, %v2620
  %s2623 = scalar_lea.vmem %s7, 64
  %v2624 = vld [vmem:[%s2623] sm:$0xff]
  %v2625 = vld [vmem:[%s2623 + $0x8] sm:$0xff]
  %v2626 = vld [vmem:[%s2623 + $0x10] sm:$0xff]
  %v2627 = vld [vmem:[%s2623 + $0x18] sm:$0xff]
  %s2628 = scalar_lea.vmem %s8, 2
  %v2629 = vld [vmem:[%s2628] sm:$0x1]
  %v2631 = vperm.slane %v2629, 0
  %v2634 = vsel %vm105, %v2621, 0
  %v2637 = vsel %vm105, %v2622, 0
  %2639 = vmatpush.msra.mxu0 0.0
  %2640 = vmatpush.msra.mxu0 0.0
  %2641 = vmatpush.msra.mxu0 0.0
  %2642 = vmatpush.msra.mxu0 0.0
  %2643 = vmatpush.msra.mxu0 0.0
  %2644 = vmatpush.msra.mxu0 0.0
  %2645 = vmatpush.msra.mxu0 0.0
  %2646 = vmatpush.msra.mxu0 0.0
  %2647 = vmatpush.msra.mxu0 0.0
  %2648 = vmatpush.msra.mxu0 0.0
  %2649 = vmatpush.msra.mxu0 0.0
  %2650 = vmatpush.msra.mxu0 0.0
  %2651 = vmatpush.msra.mxu0 %v2627
  %2652 = vmatpush.msra.mxu0 %v2626
  %2653 = vmatpush.msra.mxu0 %v2625
  %2654 = vmatpush.msra.mxu0 %v2624
  %2655 = vmatmul.f32.gmra.mxu0 %v2634
  %v2656 = vpop.f32.mrf.mxu0
  %v2657 = vadd.f32 %v2631, %v2656
  %2658 = vmatmul.f32.gmra.mxu0 %v2637
  %v2659 = vpop.f32.mrf.mxu0
  %v2660 = vadd.f32 %v2631, %v2659
  %2661 = vdwg.mxu0
  %v2662 = vmax.f32 %v2657, 0.0
  %v2663 = vmax.f32 %v2660, 0.0
  %s2664 = scalar_lea.vmem %s9, 256
  %v2665 = vld [vmem:[%s2664] sm:$0xff]
  %v2666 = vld [vmem:[%s2664 + $0x8] sm:$0xff]
  %v2667 = vld [vmem:[%s2664 + $0x10] sm:$0xff]
  %v2668 = vld [vmem:[%s2664 + $0x18] sm:$0xff]
  %v2669 = vld [vmem:[%s2664 + $0x20] sm:$0xff]
  %v2670 = vld [vmem:[%s2664 + $0x28] sm:$0xff]
  %v2671 = vld [vmem:[%s2664 + $0x30] sm:$0xff]
  %v2672 = vld [vmem:[%s2664 + $0x38] sm:$0xff]
  %v2673 = vld [vmem:[%s2664 + $0x40] sm:$0xff]
  %v2674 = vld [vmem:[%s2664 + $0x48] sm:$0xff]
  %v2675 = vld [vmem:[%s2664 + $0x50] sm:$0xff]
  %v2676 = vld [vmem:[%s2664 + $0x58] sm:$0xff]
  %v2677 = vld [vmem:[%s2664 + $0x60] sm:$0xff]
  %v2678 = vld [vmem:[%s2664 + $0x68] sm:$0xff]
  %v2679 = vld [vmem:[%s2664 + $0x70] sm:$0xff]
  %v2680 = vld [vmem:[%s2664 + $0x78] sm:$0xff]
  %2681 = vmatpush.msra.mxu0 %v2680
  %2682 = vmatpush.msra.mxu0 %v2679
  %2683 = vmatpush.msra.mxu0 %v2678
  %2684 = vmatpush.msra.mxu0 %v2677
  %2685 = vmatpush.msra.mxu0 %v2676
  %2686 = vmatpush.msra.mxu0 %v2675
  %2687 = vmatpush.msra.mxu0 %v2674
  %2688 = vmatpush.msra.mxu0 %v2673
  %2689 = vmatpush.msra.mxu0 %v2672
  %2690 = vmatpush.msra.mxu0 %v2671
  %2691 = vmatpush.msra.mxu0 %v2670
  %2692 = vmatpush.msra.mxu0 %v2669
  %2693 = vmatpush.msra.mxu0 %v2668
  %2694 = vmatpush.msra.mxu0 %v2667
  %2695 = vmatpush.msra.mxu0 %v2666
  %2696 = vmatpush.msra.mxu0 %v2665
  %2697 = vmatmul.f32.gmra.mxu0 %v2662
  %v2698 = vpop.f32.mrf.mxu0
  %v2699 = vadd.f32 0.0, %v2698
  %2700 = vmatmul.f32.gmra.mxu0 %v2663
  %v2701 = vpop.f32.mrf.mxu0
  %v2702 = vadd.f32 0.0, %v2701
  %2703 = vdwg.mxu0
  %v2704 = vadd.f32 %v2577, %v2699
  %v2705 = vadd.f32 %v2578, %v2702
  %s2706 = scalar_lea.vmem %s10, 2
  %v2707 = vld [vmem:[%s2706] sm:$0x1]
  %v2709 = vperm.slane %v2707, 0
  %v2711 = vadd.f32 %v2704, %v2709
  %v2712 = vadd.f32 %v2705, %v2709
  %v2713 = vsel %vm105, %v2711, 0.0
  %2714 = vadd.xlane.f32.xlu0 %v2713
  %v2715 = vpop.xlane.xlu0 %2714
  %v2716 = vsel %vm105, %v2712, 0.0
  %2717 = vadd.xlane.f32.xlu0 %v2716
  %v2718 = vpop.xlane.xlu0 %2717
  %v2719 = vmul.f32 %v2715, %v118
  %v2720 = vmul.f32 %v2718, %v118
  %v2721 = vsub.f32 %v2711, %v2719
  %v2722 = vsub.f32 %v2712, %v2720
  %v2723 = vmul.f32 %v2721, %v2721
  %v2724 = vmul.f32 %v2722, %v2722
  %v2725 = vsel %vm105, %v2723, 0.0
  %2726 = vadd.xlane.f32.xlu0 %v2725
  %v2727 = vpop.xlane.xlu0 %2726
  %v2728 = vsel %vm105, %v2724, 0.0
  %2729 = vadd.xlane.f32.xlu0 %v2728
  %v2730 = vpop.xlane.xlu0 %2729
  %v2731 = vmul.f32 %v2727, %v118
  %v2732 = vmul.f32 %v2730, %v118
  %v2733 = vadd.f32 %v2731, 1e-05
  %v2734 = vadd.f32 %v2732, 1e-05
  %v2735 = vrsqrt.pop %v2733
  %v2736 = vmul.f32 %v2735, %v2733
  %v2737 = vmul.f32 %v2736, %v2735
  %v2738 = vmul.f32 0.5, %v2737
  %v2739 = vsub.f32 1.5, %v2738
  %v2740 = vmul.f32 %v2735, %v2739
  %vm2741 = vweird.f32 %v2733
  %vm2742 = vweird.f32 %v2735
  %vm2743 = vmor %vm2741, %vm2742
  %v2744 = vsel %vm2743, %v2735, %v2740
  %v2745 = vrsqrt.pop %v2734
  %v2746 = vmul.f32 %v2745, %v2734
  %v2747 = vmul.f32 %v2746, %v2745
  %v2748 = vmul.f32 0.5, %v2747
  %v2749 = vsub.f32 1.5, %v2748
  %v2750 = vmul.f32 %v2745, %v2749
  %vm2751 = vweird.f32 %v2734
  %vm2752 = vweird.f32 %v2745
  %vm2753 = vmor %vm2751, %vm2752
  %v2754 = vsel %vm2753, %v2745, %v2750
  %v2755 = vmul.f32 %v2721, %v2744
  %v2756 = vmul.f32 %v2722, %v2754
  %v2757 = vld [vmem:[%s11] sm:$0xff]
  %v2758 = vld [vmem:[%s11 + $0x8] sm:$0xff]
  %v2759 = vld [vmem:[%s11 + $0x10] sm:$0xff]
  %v2760 = vld [vmem:[%s11 + $0x18] sm:$0xff]
  %v2761 = vld [vmem:[%s12] sm:$0x1]
  %v2763 = vperm.slane %v2761, 0
  %v2766 = vsel %vm105, %v2755, 0
  %v2769 = vsel %vm105, %v2756, 0
  %2771 = vmatpush.msra.mxu0 0.0
  %2772 = vmatpush.msra.mxu0 0.0
  %2773 = vmatpush.msra.mxu0 0.0
  %2774 = vmatpush.msra.mxu0 0.0
  %2775 = vmatpush.msra.mxu0 0.0
  %2776 = vmatpush.msra.mxu0 0.0
  %2777 = vmatpush.msra.mxu0 0.0
  %2778 = vmatpush.msra.mxu0 0.0
  %2779 = vmatpush.msra.mxu0 0.0
  %2780 = vmatpush.msra.mxu0 0.0
  %2781 = vmatpush.msra.mxu0 0.0
  %2782 = vmatpush.msra.mxu0 0.0
  %2783 = vmatpush.msra.mxu0 %v2760
  %2784 = vmatpush.msra.mxu0 %v2759
  %2785 = vmatpush.msra.mxu0 %v2758
  %2786 = vmatpush.msra.mxu0 %v2757
  %2787 = vmatmul.f32.gmra.mxu0 %v2766
  %v2788 = vpop.f32.mrf.mxu0
  %v2789 = vadd.f32 %v2763, %v2788
  %2790 = vmatmul.f32.gmra.mxu0 %v2769
  %v2791 = vpop.f32.mrf.mxu0
  %v2792 = vadd.f32 %v2763, %v2791
  %2793 = vdwg.mxu0
  %2794 = vst [vmem:[%s13] sm:$0xff] %v2789
  %2795 = vst [vmem:[%s13 + $0x8] sm:$0xff] %v2792
  // Predicated region
  $region54: #{_ngram_forward.1} parent=0 // pred_check
    _
  $region55: #{_ngram_forward.1} parent=0 // pred_check_branch
    %2797 = sbr.rel (0) target = $region57
  $region56: #{_ngram_forward.1} parent=0 // pred_region
    _
  $region57: #{_ngram_forward.1} parent=0 // pred_fallthru
    _
  // Predicated region
  $region58: #{_ngram_forward.1} parent=0 // pred_check
    _
  $region59: #{_ngram_forward.1} parent=0 // pred_check_branch
    %2799 = sbr.rel (0) target = $region61
  $region60: #{_ngram_forward.1} parent=0 // pred_region
    _
  $region61: #{_ngram_forward.1} parent=0 // pred_fallthru
    _

</llo_original>
